<compile_context>
chip_gen: v7x
topology: tpu7x:2x2x1
jax: 0.10.0
libtpu: 0.0.40
codegen_flags: <defaults>
</compile_context>

<pallas_src>
import functools

import jax
import jax.numpy as jnp
from jax.experimental import pallas as pl
from jax.experimental.pallas import tpu as pltpu


def _act_kernel(x_ref, o_ref):
    # 2*sigmoid(x) == 1 + tanh(x/2): one EUP push per element.
    x = x_ref[...]
    if x.dtype == jnp.float32:
        o_ref[...] = 1.0 + jnp.tanh(0.5 * x)
    else:
        # Sub-f32 dtypes: compute in f32 (free while HBM-bound; required on
        # v5e whose VPU/EUP lack bf16), cast back on store.
        xf = x.astype(jnp.float32)
        o_ref[...] = (1.0 + jnp.tanh(0.5 * xf)).astype(o_ref.dtype)


_LANE_CANDIDATES = (1024, 512, 256, 128)   # lane-dense column counts (widest first)
_SMALL_BYTES = 1 << 20                     # below this: plain-jnp fast path


@functools.lru_cache(maxsize=None)
def _tpu_block_params():
    """(target block bytes per operand, vmem_limit_bytes) for the local chip."""
    vmem_cap = None
    try:
        vmem_cap = pltpu.get_tpu_info().vmem_capacity_bytes
    except Exception:
        pass
    if vmem_cap is not None and vmem_cap <= (96 << 20):
        # v7x-class: 64 MiB per-TC VMEM, 3.2 TB/s HBM.  6 MiB blocks
        # (2 in + 2 out buffers = 24 MiB) under a 48 MiB scoped limit.
        return 6 << 20, 48 << 20
    # v5e / v6e class (128 MiB physical VMEM): 4 MiB blocks (16 MiB of
    # buffers), 64 MiB scoped limit leaves plenty of headroom.
    return 4 << 20, 64 << 20


def _pick_lane(total):
    """Widest lane count dividing `total`, preferring full (8,128) tiles."""
    divisors = [c for c in _LANE_CANDIDATES if total % c == 0]
    if not divisors:
        return None
    for cand in divisors:               # full sublane occupancy: rows % 8 == 0
        if (total // cand) % 8 == 0:
            return cand
    for cand in divisors:               # at least one full vreg of rows
        if total // cand >= 8:
            return cand
    return divisors[0]


def _act_reference(x):
    return (2.0 * jax.nn.sigmoid(x)).astype(x.dtype)


def _act_2d(x2d):
    """Run the Pallas kernel on a lane-dense (rows, lane) slab."""
    rows, lane = x2d.shape
    itemsize = jnp.dtype(x2d.dtype).itemsize
    block_bytes, vmem_limit = _tpu_block_params()

    tr = max(8, block_bytes // (lane * itemsize))
    tr = (tr // 8) * 8                  # sublane multiple
    if rows <= tr:
        tr = rows                       # full extent (always legal)

    grid = (pl.cdiv(rows, tr),)         # ragged last block handled by Pallas

    return pl.pallas_call(
        _act_kernel,
        out_shape=jax.ShapeDtypeStruct((rows, lane), x2d.dtype),
        grid_spec=pltpu.PrefetchScalarGridSpec(
            num_scalar_prefetch=0,
            grid=grid,
            in_specs=[pl.BlockSpec((tr, lane), lambda i: (i, 0))],
            out_specs=pl.BlockSpec((tr, lane), lambda i: (i, 0)),
        ),
        compiler_params=pltpu.CompilerParams(
            dimension_semantics=("parallel",),
            vmem_limit_bytes=vmem_limit,
        ),
    )(x2d)


def act_op(x):
    """2 * sigmoid(x), elementwise, any shape / float dtype."""
    orig_shape = x.shape
    total = x.size

    # Tiny-tensor fast path: launch + plumbing would dominate; XLA fuses this.
    if total == 0 or total * jnp.dtype(x.dtype).itemsize < _SMALL_BYTES:
        return _act_reference(x)

    flat = x.reshape(-1)
    lane = _pick_lane(total)

    if lane is not None:
        out2d = _act_2d(flat.reshape(total // lane, lane))
        return out2d.reshape(orig_shape)

    # Rare fallback: element count not a multiple of 128.  Kernel handles the
    # 128-aligned prefix; the (<128-elem) tail is plain jnp.  Avoids the
    # full-array pad + slice round trip (two extra HBM passes).
    lane = 128
    main = (total // lane) * lane
    head_out = _act_2d(flat[:main].reshape(main // lane, lane)).reshape(-1)
    tail_out = _act_reference(flat[main:])
    return jnp.concatenate([head_out, tail_out]).reshape(orig_shape)


if __name__ == "__main__":
    key = jax.random.PRNGKey(0)
    k1, k2, k3 = jax.random.split(key, 3)

    # Small NCHW-style input consistent with the module (tiny-tensor fast path).
    x_small = jax.random.normal(k1, (2, 4, 16, 16), dtype=jnp.float32)
    y_small = act_op(x_small)

    # Medium input that exercises the Pallas kernel with a multi-step grid.
    x_med = jax.random.normal(k2, (8, 16, 128, 128), dtype=jnp.float32)
    y_med = act_op(x_med)

    # Odd-sized input that exercises the 128-aligned-prefix + jnp-tail path.
    x_odd = jax.random.normal(k3, (1048573,), dtype=jnp.float32)
    y_odd = act_op(x_odd)

    jax.block_until_ready((y_small, y_med, y_odd))

    for xin, yout in ((x_small, y_small), (x_med, y_med), (x_odd, y_odd)):
        y_ref = 2.0 * jax.nn.sigmoid(xin)
        assert yout.shape == xin.shape and yout.dtype == xin.dtype
        assert jnp.allclose(yout, y_ref, atol=1e-5, rtol=1e-5), float(
            jnp.max(jnp.abs(yout - y_ref))
        )

    print("KERNEL_OK")
</pallas_src>

<mosaic_0001>
module attributes {stable_mosaic.version = 11 : i64} {
  func.func @_act_kernel(%arg0: i32, %arg1: memref<1024x1024xf32, #tpu.memory_space<vmem>>, %arg2: memref<1024x1024xf32, #tpu.memory_space<vmem>>) attributes {dimension_semantics = [#tpu.dimension_semantics<parallel>], iteration_bounds = array<i64: 2>, scalar_prefetch = 0 : i64, scratch_operands = 0 : i64, tpu.core_type = #tpu.core_type<tc>, window_params = [{transform_indices = @transform_0, window_bounds = array<i64: 1024, 1024>}, {transform_indices = @transform_1, window_bounds = array<i64: 1024, 1024>}]} {
    %c0 = arith.constant 0 : index
    %c0_0 = arith.constant 0 : index
    %0 = vector.load %arg1[%c0, %c0_0] : memref<1024x1024xf32, #tpu.memory_space<vmem>>, vector<1024x1024xf32>
    %cst = arith.constant 5.000000e-01 : f32
    %1 = vector.broadcast %cst : f32 to vector<1024x1024xf32>
    %2 = arith.mulf %1, %0 : vector<1024x1024xf32>
    %3 = math.tanh %2 : vector<1024x1024xf32>
    %cst_1 = arith.constant 1.000000e+00 : f32
    %4 = vector.broadcast %cst_1 : f32 to vector<1024x1024xf32>
    %5 = arith.addf %4, %3 : vector<1024x1024xf32>
    %c0_2 = arith.constant 0 : index
    %c0_3 = arith.constant 0 : index
    %6 = vector.load %arg2[%c0_2, %c0_3] : memref<1024x1024xf32, #tpu.memory_space<vmem>>, vector<1024x1024xf32>
    tpu.vector_store %arg2[%c0_2, %c0_3], %5 {strides = array<i32>} : memref<1024x1024xf32, #tpu.memory_space<vmem>>, vector<1024x1024xf32>,
    return
  }
  func.func @transform_0(%arg0: i32) -> (i32, i32) {
    %c0_i32 = arith.constant 0 : i32
    %c0_i32_0 = arith.constant 0 : i32
    return %arg0, %c0_i32 : i32, i32
  }
  func.func @transform_1(%arg0: i32) -> (i32, i32) {
    %c0_i32 = arith.constant 0 : i32
    %c0_i32_0 = arith.constant 0 : i32
    return %arg0, %c0_i32 : i32, i32
  }
}

</mosaic_0001>

<llo_original>
// kernel: tpu_custom_call.1
$region0: #{tpu_custom_call.1}
  #allocation0 [shape = 'u32[]', space=smem, size = 0x4, offset = 0x4, fixed_abs, tag = 'smem constant byte address 0x4 - core index']
  #allocation1 [shape = 'u32[144,128]{1,0:T(1,128)}', space=vmem, size = 0x12000, scoped, tag = 'internal scratch']
  %s0 = inlined_call_operand.hbm [shape: f32[2048,1024], index: 0, kind: input, shape index: {}]
  %s1 = inlined_call_operand.hbm [shape: f32[2048,1024], index: 1, kind: output, shape index: {}]
  %s2 = sld [smem:[#allocation0]]
  $region41: #{tpu_custom_call.1} parent=0
    _
  %s4 = ssub.s32 1, %s2
  %s5 = scalar_select 0, %s4, %s2
  $region1: #{tpu_custom_call.1} parent=0
    #allocation2 [shape = 'u8[8388608]{0}', space=vmem, size = 0x800000, scoped, tag = 'input window, operand 0']
    #allocation3 [shape = 's32[2]{0}', space=sflag, size = 0x8, scoped, tag = 'scoped memory for tpu_custom_call.1']
    #allocation4 [shape = 's32[2]{0}', space=sflag, size = 0x8, scoped, tag = 'scoped memory for tpu_custom_call.1']
    #allocation5 [shape = 'u8[8388608]{0}', space=vmem, size = 0x800000, scoped, tag = 'output window, operand 0']
    %6 = vsyncpa [#allocation3], 0
    %s7 = scalar_lea.sflag [#allocation3], 1
    %8 = vsyncpa %s7, 0
    %9 = vsyncpa [#allocation4], 0
    %s10 = scalar_lea.sflag [#allocation4], 1
    %11 = vsyncpa %s10, 0
    loop: start=0, step=1, limit=4
    $region2: #{tpu_custom_call.1} parent=1 // loop_pre_header
      _
    $region3: #{tpu_custom_call.1} parent=1 // loop_header
      %s13 = sphi 0, %s17
      %p14 = scmp.ge.s32.totalorder %s13, 4
      %s23 = sphi 0, %s25
      %s26 = sphi 0, %s23
      %s27 = sphi 0, %s26
      %s43 = sphi 0, %s27
      %s49 = sphi 0, %s51
      %s52 = sphi 0, %s49
      %s53 = sphi 0, %s52
      %s69 = sphi 0, %s53
    $region4: #{tpu_custom_call.1} parent=1 // loop_header_branch
      %16 = sbr.rel (%p14) target = $region8
    $region5: #{tpu_custom_call.1} parent=1 // loop_body
      %s18 = ssub.s32 %s13, 1
      %s19 = ssub.s32 %s13, 2
      %s20 = sadd.s32 %s13, 1
      %s21 = ssub.s32 %s13, %s20
      %p22 = scmp.eq.s32.totalorder %s21, 0
      %s24 = sadd.s32 %s23, 1
      %s25 = scalar_select %p22, %s23, %s24
      %p28 = pneg %p22
      %p29 = scmp.eq.s32.totalorder %s13, 1
      %p30 = por %p28, %p29
      %p31 = scmp.ne.s32.totalorder %s23, %s26
      %p32 = scmp.eq.s32.totalorder %s13, 0
      %p33 = por %p31, %p32
      %p34 = scmp.ne.s32.totalorder %s23, %s26
      %p35 = scmp.eq.s32.totalorder %s18, 1
      %p36 = por %p34, %p35
      %p37 = scmp.ne.s32.totalorder %s26, %s27
      %p38 = scmp.eq.s32.totalorder %s18, 0
      %p39 = por %p37, %p38
      %p40 = scmp.ne.s32.totalorder %s26, %s27
      %p41 = scmp.eq.s32.totalorder %s19, 1
      %p42 = por %p40, %p41
      %p44 = scmp.ne.s32.totalorder %s27, %s43
      %p45 = scmp.eq.s32.totalorder %s19, 0
      %p46 = por %p44, %p45
      %s47 = ssub.s32 %s13, %s20
      %p48 = scmp.eq.s32.totalorder %s47, 0
      %s50 = sadd.s32 %s49, 1
      %s51 = scalar_select %p48, %s49, %s50
      %p54 = pneg %p48
      %p55 = scmp.eq.s32.totalorder %s13, 1
      %p56 = por %p54, %p55
      %p57 = scmp.ne.s32.totalorder %s49, %s52
      %p58 = scmp.eq.s32.totalorder %s13, 0
      %p59 = por %p57, %p58
      %p60 = scmp.ne.s32.totalorder %s49, %s52
      %p61 = scmp.eq.s32.totalorder %s18, 1
      %p62 = por %p60, %p61
      %p63 = scmp.ne.s32.totalorder %s52, %s53
      %p64 = scmp.eq.s32.totalorder %s18, 0
      %p65 = por %p63, %p64
      %p66 = scmp.ne.s32.totalorder %s52, %s53
      %p67 = scmp.eq.s32.totalorder %s19, 1
      %p68 = por %p66, %p67
      %p70 = scmp.ne.s32.totalorder %s53, %s69
      %p71 = scmp.eq.s32.totalorder %s19, 0
      %p72 = por %p70, %p71
      %p73 = scmp.le.s32.totalorder 1, %s13
      %p74 = scmp.lt.s32.totalorder %s13, 3
      %p75 = pnand %p73, %p74
      %p76 = pneg %p75
      // Predicated region
      $region9: #{tpu_custom_call.1} parent=5 // pred_check
        _
      $region10: #{tpu_custom_call.1} parent=5 // pred_check_branch
        %78 = sbr.rel (%p75) target = $region12
      $region11: #{tpu_custom_call.1} parent=5 // pred_region
        %s79 = ssub.s32 %s13, 1
      $region12: #{tpu_custom_call.1} parent=5 // pred_fallthru
        _
      %p80 = scmp.lt.s32.totalorder %s13, 2
      // Predicated region
      $region13: #{tpu_custom_call.1} parent=5 // pred_check
        %p81 = pneg %p80
      $region14: #{tpu_custom_call.1} parent=5 // pred_check_branch
        %83 = sbr.rel (%p81) target = $region16
      $region15: #{tpu_custom_call.1} parent=5 // pred_region
        // Predicated region
        $region17: #{tpu_custom_call.1} parent=15 // pred_check
          %p84 = pneg %p33
        $region18: #{tpu_custom_call.1} parent=15 // pred_check_branch
          %86 = sbr.rel (%p84) target = $region20
        $region19: #{tpu_custom_call.1} parent=15 // pred_region
          %s87 = sand.u32 %s23, 1
          %s88 = scalar_lea.sflag [#allocation3], %s87
          %s89 = sand.u32 %s23, 1
          %s90 = smul.addr %s89, 8192
          %s91 = scalar_lea.vmem [#allocation2], %s90
          %s92 = smul.u32 128, %s13
          %s94 = ssub.s32 131072, 131072
          %95 = vsyncadd %s88, %s94
          %s96 = smul.addr %s92, 8
          %s97 = smul.addr %s96, 128
          %s98 = scalar_lea.hbm %s0, %s97
          %s99 = sshll.u32 %s91, 4
          %s100 = int_to_ptr.vmem [resolvable:$true] %s99
          %105 = dma.hbm_to_vmem [thread:$0]  %s98, 131072, %s100, %s88, 1024, 1024, 64
        $region20: #{tpu_custom_call.1} parent=15 // pred_fallthru
          _
      $region16: #{tpu_custom_call.1} parent=5 // pred_fallthru
        _
      %p106 = scmp.le.s32.totalorder 1, %s13
      %p107 = scmp.lt.s32.totalorder %s13, 3
      %p108 = pnand %p106, %p107
      %p109 = pneg %p108
      // Predicated region
      $region21: #{tpu_custom_call.1} parent=5 // pred_check
        _
      $region22: #{tpu_custom_call.1} parent=5 // pred_check_branch
        %111 = sbr.rel (%p108) target = $region24
      $region23: #{tpu_custom_call.1} parent=5 // pred_region
        %s112 = ssub.s32 %s13, 1
        %s113 = sand.u32 %s26, 1
        %s114 = scalar_lea.sflag [#allocation3], %s113
        %s115 = sand.u32 %s26, 1
        %s116 = smul.addr %s115, 8192
        %s117 = scalar_lea.vmem [#allocation2], %s116
        // Predicated region
        $region25: #{tpu_custom_call.1} parent=23 // pred_check
          %p118 = pneg %p39
        $region26: #{tpu_custom_call.1} parent=23 // pred_check_branch
          %120 = sbr.rel (%p118) target = $region28
        $region27: #{tpu_custom_call.1} parent=23 // pred_region
          %121 = dma.done %s114, 131072
        $region28: #{tpu_custom_call.1} parent=23 // pred_fallthru
          _
        %s122 = sand.u32 %s26, 1
        %s123 = scalar_lea.sflag [#allocation3], %s122
        %s124 = sand.u32 %s26, 1
        %s125 = smul.addr %s124, 8192
        %s126 = scalar_lea.vmem [#allocation2], %s125
        %p127 = pneg %p39
        %p128 = pneg %p36
        %p129 = pneg %p65
        %p130 = pneg %p62
        %s131 = sand.u32 %s52, 1
        %s132 = scalar_lea.sflag [#allocation4], %s131
        %s133 = sand.u32 %s52, 1
        %s134 = smul.addr %s133, 8192
        %s135 = scalar_lea.vmem [#allocation5], %s134
        %s136 = smul.u32 128, %s18
        %s137 = smul.u32 128, %s18
        %v138 = vld [vmem:[%s117] sm:$0xff]
        %v139 = vld [vmem:[%s117 + $0x8] sm:$0xff]
        %v140 = vld [vmem:[%s117 + $0x10] sm:$0xff]
        %v141 = vld [vmem:[%s117 + $0x18] sm:$0xff]
        %v142 = vld [vmem:[%s117 + $0x20] sm:$0xff]
        %v143 = vld [vmem:[%s117 + $0x28] sm:$0xff]
        %v144 = vld [vmem:[%s117 + $0x30] sm:$0xff]
        %v145 = vld [vmem:[%s117 + $0x38] sm:$0xff]
        %v146 = vld [vmem:[%s117 + $0x40] sm:$0xff]
        %v147 = vld [vmem:[%s117 + $0x48] sm:$0xff]
        %v148 = vld [vmem:[%s117 + $0x50] sm:$0xff]
        %v149 = vld [vmem:[%s117 + $0x58] sm:$0xff]
        %v150 = vld [vmem:[%s117 + $0x60] sm:$0xff]
        %v151 = vld [vmem:[%s117 + $0x68] sm:$0xff]
        %v152 = vld [vmem:[%s117 + $0x70] sm:$0xff]
        %v153 = vld [vmem:[%s117 + $0x78] sm:$0xff]
        %v154 = vld [vmem:[%s117 + $0x80] sm:$0xff]
        %v155 = vld [vmem:[%s117 + $0x88] sm:$0xff]
        %v156 = vld [vmem:[%s117 + $0x90] sm:$0xff]
        %v157 = vld [vmem:[%s117 + $0x98] sm:$0xff]
        %v158 = vld [vmem:[%s117 + $0xa0] sm:$0xff]
        %v159 = vld [vmem:[%s117 + $0xa8] sm:$0xff]
        %v160 = vld [vmem:[%s117 + $0xb0] sm:$0xff]
        %v161 = vld [vmem:[%s117 + $0xb8] sm:$0xff]
        %v162 = vld [vmem:[%s117 + $0xc0] sm:$0xff]
        %v163 = vld [vmem:[%s117 + $0xc8] sm:$0xff]
        %v164 = vld [vmem:[%s117 + $0xd0] sm:$0xff]
        %v165 = vld [vmem:[%s117 + $0xd8] sm:$0xff]
        %v166 = vld [vmem:[%s117 + $0xe0] sm:$0xff]
        %v167 = vld [vmem:[%s117 + $0xe8] sm:$0xff]
        %v168 = vld [vmem:[%s117 + $0xf0] sm:$0xff]
        %v169 = vld [vmem:[%s117 + $0xf8] sm:$0xff]
        %v170 = vld [vmem:[%s117 + $0x100] sm:$0xff]
        %v171 = vld [vmem:[%s117 + $0x108] sm:$0xff]
        %v172 = vld [vmem:[%s117 + $0x110] sm:$0xff]
        %v173 = vld [vmem:[%s117 + $0x118] sm:$0xff]
        %v174 = vld [vmem:[%s117 + $0x120] sm:$0xff]
        %v175 = vld [vmem:[%s117 + $0x128] sm:$0xff]
        %v176 = vld [vmem:[%s117 + $0x130] sm:$0xff]
        %v177 = vld [vmem:[%s117 + $0x138] sm:$0xff]
        %v178 = vld [vmem:[%s117 + $0x140] sm:$0xff]
        %v179 = vld [vmem:[%s117 + $0x148] sm:$0xff]
        %v180 = vld [vmem:[%s117 + $0x150] sm:$0xff]
        %v181 = vld [vmem:[%s117 + $0x158] sm:$0xff]
        %v182 = vld [vmem:[%s117 + $0x160] sm:$0xff]
        %v183 = vld [vmem:[%s117 + $0x168] sm:$0xff]
        %v184 = vld [vmem:[%s117 + $0x170] sm:$0xff]
        %v185 = vld [vmem:[%s117 + $0x178] sm:$0xff]
        %v186 = vld [vmem:[%s117 + $0x180] sm:$0xff]
        %v187 = vld [vmem:[%s117 + $0x188] sm:$0xff]
        %v188 = vld [vmem:[%s117 + $0x190] sm:$0xff]
        %v189 = vld [vmem:[%s117 + $0x198] sm:$0xff]
        %v190 = vld [vmem:[%s117 + $0x1a0] sm:$0xff]
        %v191 = vld [vmem:[%s117 + $0x1a8] sm:$0xff]
        %v192 = vld [vmem:[%s117 + $0x1b0] sm:$0xff]
        %v193 = vld [vmem:[%s117 + $0x1b8] sm:$0xff]
        %v194 = vld [vmem:[%s117 + $0x1c0] sm:$0xff]
        %v195 = vld [vmem:[%s117 + $0x1c8] sm:$0xff]
        %v196 = vld [vmem:[%s117 + $0x1d0] sm:$0xff]
        %v197 = vld [vmem:[%s117 + $0x1d8] sm:$0xff]
        %v198 = vld [vmem:[%s117 + $0x1e0] sm:$0xff]
        %v199 = vld [vmem:[%s117 + $0x1e8] sm:$0xff]
        %v200 = vld [vmem:[%s117 + $0x1f0] sm:$0xff]
        %v201 = vld [vmem:[%s117 + $0x1f8] sm:$0xff]
        %v202 = vld [vmem:[%s117 + $0x200] sm:$0xff]
        %v203 = vld [vmem:[%s117 + $0x208] sm:$0xff]
        %v204 = vld [vmem:[%s117 + $0x210] sm:$0xff]
        %v205 = vld [vmem:[%s117 + $0x218] sm:$0xff]
        %v206 = vld [vmem:[%s117 + $0x220] sm:$0xff]
        %v207 = vld [vmem:[%s117 + $0x228] sm:$0xff]
        %v208 = vld [vmem:[%s117 + $0x230] sm:$0xff]
        %v209 = vld [vmem:[%s117 + $0x238] sm:$0xff]
        %v210 = vld [vmem:[%s117 + $0x240] sm:$0xff]
        %v211 = vld [vmem:[%s117 + $0x248] sm:$0xff]
        %v212 = vld [vmem:[%s117 + $0x250] sm:$0xff]
        %v213 = vld [vmem:[%s117 + $0x258] sm:$0xff]
        %v214 = vld [vmem:[%s117 + $0x260] sm:$0xff]
        %v215 = vld [vmem:[%s117 + $0x268] sm:$0xff]
        %v216 = vld [vmem:[%s117 + $0x270] sm:$0xff]
        %v217 = vld [vmem:[%s117 + $0x278] sm:$0xff]
        %v218 = vld [vmem:[%s117 + $0x280] sm:$0xff]
        %v219 = vld [vmem:[%s117 + $0x288] sm:$0xff]
        %v220 = vld [vmem:[%s117 + $0x290] sm:$0xff]
        %v221 = vld [vmem:[%s117 + $0x298] sm:$0xff]
        %v222 = vld [vmem:[%s117 + $0x2a0] sm:$0xff]
        %v223 = vld [vmem:[%s117 + $0x2a8] sm:$0xff]
        %v224 = vld [vmem:[%s117 + $0x2b0] sm:$0xff]
        %v225 = vld [vmem:[%s117 + $0x2b8] sm:$0xff]
        %v226 = vld [vmem:[%s117 + $0x2c0] sm:$0xff]
        %v227 = vld [vmem:[%s117 + $0x2c8] sm:$0xff]
        %v228 = vld [vmem:[%s117 + $0x2d0] sm:$0xff]
        %v229 = vld [vmem:[%s117 + $0x2d8] sm:$0xff]
        %v230 = vld [vmem:[%s117 + $0x2e0] sm:$0xff]
        %v231 = vld [vmem:[%s117 + $0x2e8] sm:$0xff]
        %v232 = vld [vmem:[%s117 + $0x2f0] sm:$0xff]
        %v233 = vld [vmem:[%s117 + $0x2f8] sm:$0xff]
        %v234 = vld [vmem:[%s117 + $0x300] sm:$0xff]
        %v235 = vld [vmem:[%s117 + $0x308] sm:$0xff]
        %v236 = vld [vmem:[%s117 + $0x310] sm:$0xff]
        %v237 = vld [vmem:[%s117 + $0x318] sm:$0xff]
        %v238 = vld [vmem:[%s117 + $0x320] sm:$0xff]
        %v239 = vld [vmem:[%s117 + $0x328] sm:$0xff]
        %v240 = vld [vmem:[%s117 + $0x330] sm:$0xff]
        %v241 = vld [vmem:[%s117 + $0x338] sm:$0xff]
        %v242 = vld [vmem:[%s117 + $0x340] sm:$0xff]
        %v243 = vld [vmem:[%s117 + $0x348] sm:$0xff]
        %v244 = vld [vmem:[%s117 + $0x350] sm:$0xff]
        %v245 = vld [vmem:[%s117 + $0x358] sm:$0xff]
        %v246 = vld [vmem:[%s117 + $0x360] sm:$0xff]
        %v247 = vld [vmem:[%s117 + $0x368] sm:$0xff]
        %v248 = vld [vmem:[%s117 + $0x370] sm:$0xff]
        %v249 = vld [vmem:[%s117 + $0x378] sm:$0xff]
        %v250 = vld [vmem:[%s117 + $0x380] sm:$0xff]
        %v251 = vld [vmem:[%s117 + $0x388] sm:$0xff]
        %v252 = vld [vmem:[%s117 + $0x390] sm:$0xff]
        %v253 = vld [vmem:[%s117 + $0x398] sm:$0xff]
        %v254 = vld [vmem:[%s117 + $0x3a0] sm:$0xff]
        %v255 = vld [vmem:[%s117 + $0x3a8] sm:$0xff]
        %v256 = vld [vmem:[%s117 + $0x3b0] sm:$0xff]
        %v257 = vld [vmem:[%s117 + $0x3b8] sm:$0xff]
        %v258 = vld [vmem:[%s117 + $0x3c0] sm:$0xff]
        %v259 = vld [vmem:[%s117 + $0x3c8] sm:$0xff]
        %v260 = vld [vmem:[%s117 + $0x3d0] sm:$0xff]
        %v261 = vld [vmem:[%s117 + $0x3d8] sm:$0xff]
        %v262 = vld [vmem:[%s117 + $0x3e0] sm:$0xff]
        %v263 = vld [vmem:[%s117 + $0x3e8] sm:$0xff]
        %v264 = vld [vmem:[%s117 + $0x3f0] sm:$0xff]
        %v265 = vld [vmem:[%s117 + $0x3f8] sm:$0xff]
        %v266 = vld [vmem:[%s117 + $0x400] sm:$0xff]
        %v267 = vld [vmem:[%s117 + $0x408] sm:$0xff]
        %v268 = vld [vmem:[%s117 + $0x410] sm:$0xff]
        %v269 = vld [vmem:[%s117 + $0x418] sm:$0xff]
        %v270 = vld [vmem:[%s117 + $0x420] sm:$0xff]
        %v271 = vld [vmem:[%s117 + $0x428] sm:$0xff]
        %v272 = vld [vmem:[%s117 + $0x430] sm:$0xff]
        %v273 = vld [vmem:[%s117 + $0x438] sm:$0xff]
        %v274 = vld [vmem:[%s117 + $0x440] sm:$0xff]
        %v275 = vld [vmem:[%s117 + $0x448] sm:$0xff]
        %v276 = vld [vmem:[%s117 + $0x450] sm:$0xff]
        %v277 = vld [vmem:[%s117 + $0x458] sm:$0xff]
        %v278 = vld [vmem:[%s117 + $0x460] sm:$0xff]
        %v279 = vld [vmem:[%s117 + $0x468] sm:$0xff]
        %v280 = vld [vmem:[%s117 + $0x470] sm:$0xff]
        %v281 = vld [vmem:[%s117 + $0x478] sm:$0xff]
        %v282 = vld [vmem:[%s117 + $0x480] sm:$0xff]
        %v283 = vld [vmem:[%s117 + $0x488] sm:$0xff]
        %v284 = vld [vmem:[%s117 + $0x490] sm:$0xff]
        %v285 = vld [vmem:[%s117 + $0x498] sm:$0xff]
        %v286 = vld [vmem:[%s117 + $0x4a0] sm:$0xff]
        %v287 = vld [vmem:[%s117 + $0x4a8] sm:$0xff]
        %v288 = vld [vmem:[%s117 + $0x4b0] sm:$0xff]
        %v289 = vld [vmem:[%s117 + $0x4b8] sm:$0xff]
        %v290 = vld [vmem:[%s117 + $0x4c0] sm:$0xff]
        %v291 = vld [vmem:[%s117 + $0x4c8] sm:$0xff]
        %v292 = vld [vmem:[%s117 + $0x4d0] sm:$0xff]
        %v293 = vld [vmem:[%s117 + $0x4d8] sm:$0xff]
        %v294 = vld [vmem:[%s117 + $0x4e0] sm:$0xff]
        %v295 = vld [vmem:[%s117 + $0x4e8] sm:$0xff]
        %v296 = vld [vmem:[%s117 + $0x4f0] sm:$0xff]
        %v297 = vld [vmem:[%s117 + $0x4f8] sm:$0xff]
        %v298 = vld [vmem:[%s117 + $0x500] sm:$0xff]
        %v299 = vld [vmem:[%s117 + $0x508] sm:$0xff]
        %v300 = vld [vmem:[%s117 + $0x510] sm:$0xff]
        %v301 = vld [vmem:[%s117 + $0x518] sm:$0xff]
        %v302 = vld [vmem:[%s117 + $0x520] sm:$0xff]
        %v303 = vld [vmem:[%s117 + $0x528] sm:$0xff]
        %v304 = vld [vmem:[%s117 + $0x530] sm:$0xff]
        %v305 = vld [vmem:[%s117 + $0x538] sm:$0xff]
        %v306 = vld [vmem:[%s117 + $0x540] sm:$0xff]
        %v307 = vld [vmem:[%s117 + $0x548] sm:$0xff]
        %v308 = vld [vmem:[%s117 + $0x550] sm:$0xff]
        %v309 = vld [vmem:[%s117 + $0x558] sm:$0xff]
        %v310 = vld [vmem:[%s117 + $0x560] sm:$0xff]
        %v311 = vld [vmem:[%s117 + $0x568] sm:$0xff]
        %v312 = vld [vmem:[%s117 + $0x570] sm:$0xff]
        %v313 = vld [vmem:[%s117 + $0x578] sm:$0xff]
        %v314 = vld [vmem:[%s117 + $0x580] sm:$0xff]
        %v315 = vld [vmem:[%s117 + $0x588] sm:$0xff]
        %v316 = vld [vmem:[%s117 + $0x590] sm:$0xff]
        %v317 = vld [vmem:[%s117 + $0x598] sm:$0xff]
        %v318 = vld [vmem:[%s117 + $0x5a0] sm:$0xff]
        %v319 = vld [vmem:[%s117 + $0x5a8] sm:$0xff]
        %v320 = vld [vmem:[%s117 + $0x5b0] sm:$0xff]
        %v321 = vld [vmem:[%s117 + $0x5b8] sm:$0xff]
        %v322 = vld [vmem:[%s117 + $0x5c0] sm:$0xff]
        %v323 = vld [vmem:[%s117 + $0x5c8] sm:$0xff]
        %v324 = vld [vmem:[%s117 + $0x5d0] sm:$0xff]
        %v325 = vld [vmem:[%s117 + $0x5d8] sm:$0xff]
        %v326 = vld [vmem:[%s117 + $0x5e0] sm:$0xff]
        %v327 = vld [vmem:[%s117 + $0x5e8] sm:$0xff]
        %v328 = vld [vmem:[%s117 + $0x5f0] sm:$0xff]
        %v329 = vld [vmem:[%s117 + $0x5f8] sm:$0xff]
        %v330 = vld [vmem:[%s117 + $0x600] sm:$0xff]
        %v331 = vld [vmem:[%s117 + $0x608] sm:$0xff]
        %v332 = vld [vmem:[%s117 + $0x610] sm:$0xff]
        %v333 = vld [vmem:[%s117 + $0x618] sm:$0xff]
        %v334 = vld [vmem:[%s117 + $0x620] sm:$0xff]
        %v335 = vld [vmem:[%s117 + $0x628] sm:$0xff]
        %v336 = vld [vmem:[%s117 + $0x630] sm:$0xff]
        %v337 = vld [vmem:[%s117 + $0x638] sm:$0xff]
        %v338 = vld [vmem:[%s117 + $0x640] sm:$0xff]
        %v339 = vld [vmem:[%s117 + $0x648] sm:$0xff]
        %v340 = vld [vmem:[%s117 + $0x650] sm:$0xff]
        %v341 = vld [vmem:[%s117 + $0x658] sm:$0xff]
        %v342 = vld [vmem:[%s117 + $0x660] sm:$0xff]
        %v343 = vld [vmem:[%s117 + $0x668] sm:$0xff]
        %v344 = vld [vmem:[%s117 + $0x670] sm:$0xff]
        %v345 = vld [vmem:[%s117 + $0x678] sm:$0xff]
        %v346 = vld [vmem:[%s117 + $0x680] sm:$0xff]
        %v347 = vld [vmem:[%s117 + $0x688] sm:$0xff]
        %v348 = vld [vmem:[%s117 + $0x690] sm:$0xff]
        %v349 = vld [vmem:[%s117 + $0x698] sm:$0xff]
        %v350 = vld [vmem:[%s117 + $0x6a0] sm:$0xff]
        %v351 = vld [vmem:[%s117 + $0x6a8] sm:$0xff]
        %v352 = vld [vmem:[%s117 + $0x6b0] sm:$0xff]
        %v353 = vld [vmem:[%s117 + $0x6b8] sm:$0xff]
        %v354 = vld [vmem:[%s117 + $0x6c0] sm:$0xff]
        %v355 = vld [vmem:[%s117 + $0x6c8] sm:$0xff]
        %v356 = vld [vmem:[%s117 + $0x6d0] sm:$0xff]
        %v357 = vld [vmem:[%s117 + $0x6d8] sm:$0xff]
        %v358 = vld [vmem:[%s117 + $0x6e0] sm:$0xff]
        %v359 = vld [vmem:[%s117 + $0x6e8] sm:$0xff]
        %v360 = vld [vmem:[%s117 + $0x6f0] sm:$0xff]
        %v361 = vld [vmem:[%s117 + $0x6f8] sm:$0xff]
        %v362 = vld [vmem:[%s117 + $0x700] sm:$0xff]
        %v363 = vld [vmem:[%s117 + $0x708] sm:$0xff]
        %v364 = vld [vmem:[%s117 + $0x710] sm:$0xff]
        %v365 = vld [vmem:[%s117 + $0x718] sm:$0xff]
        %v366 = vld [vmem:[%s117 + $0x720] sm:$0xff]
        %v367 = vld [vmem:[%s117 + $0x728] sm:$0xff]
        %v368 = vld [vmem:[%s117 + $0x730] sm:$0xff]
        %v369 = vld [vmem:[%s117 + $0x738] sm:$0xff]
        %v370 = vld [vmem:[%s117 + $0x740] sm:$0xff]
        %v371 = vld [vmem:[%s117 + $0x748] sm:$0xff]
        %v372 = vld [vmem:[%s117 + $0x750] sm:$0xff]
        %v373 = vld [vmem:[%s117 + $0x758] sm:$0xff]
        %v374 = vld [vmem:[%s117 + $0x760] sm:$0xff]
        %v375 = vld [vmem:[%s117 + $0x768] sm:$0xff]
        %v376 = vld [vmem:[%s117 + $0x770] sm:$0xff]
        %v377 = vld [vmem:[%s117 + $0x778] sm:$0xff]
        %v378 = vld [vmem:[%s117 + $0x780] sm:$0xff]
        %v379 = vld [vmem:[%s117 + $0x788] sm:$0xff]
        %v380 = vld [vmem:[%s117 + $0x790] sm:$0xff]
        %v381 = vld [vmem:[%s117 + $0x798] sm:$0xff]
        %v382 = vld [vmem:[%s117 + $0x7a0] sm:$0xff]
        %v383 = vld [vmem:[%s117 + $0x7a8] sm:$0xff]
        %v384 = vld [vmem:[%s117 + $0x7b0] sm:$0xff]
        %v385 = vld [vmem:[%s117 + $0x7b8] sm:$0xff]
        %v386 = vld [vmem:[%s117 + $0x7c0] sm:$0xff]
        %v387 = vld [vmem:[%s117 + $0x7c8] sm:$0xff]
        %v388 = vld [vmem:[%s117 + $0x7d0] sm:$0xff]
        %v389 = vld [vmem:[%s117 + $0x7d8] sm:$0xff]
        %v390 = vld [vmem:[%s117 + $0x7e0] sm:$0xff]
        %v391 = vld [vmem:[%s117 + $0x7e8] sm:$0xff]
        %v392 = vld [vmem:[%s117 + $0x7f0] sm:$0xff]
        %v393 = vld [vmem:[%s117 + $0x7f8] sm:$0xff]
        %v394 = vld [vmem:[%s117 + $0x800] sm:$0xff]
        %v395 = vld [vmem:[%s117 + $0x808] sm:$0xff]
        %v396 = vld [vmem:[%s117 + $0x810] sm:$0xff]
        %v397 = vld [vmem:[%s117 + $0x818] sm:$0xff]
        %v398 = vld [vmem:[%s117 + $0x820] sm:$0xff]
        %v399 = vld [vmem:[%s117 + $0x828] sm:$0xff]
        %v400 = vld [vmem:[%s117 + $0x830] sm:$0xff]
        %v401 = vld [vmem:[%s117 + $0x838] sm:$0xff]
        %v402 = vld [vmem:[%s117 + $0x840] sm:$0xff]
        %v403 = vld [vmem:[%s117 + $0x848] sm:$0xff]
        %v404 = vld [vmem:[%s117 + $0x850] sm:$0xff]
        %v405 = vld [vmem:[%s117 + $0x858] sm:$0xff]
        %v406 = vld [vmem:[%s117 + $0x860] sm:$0xff]
        %v407 = vld [vmem:[%s117 + $0x868] sm:$0xff]
        %v408 = vld [vmem:[%s117 + $0x870] sm:$0xff]
        %v409 = vld [vmem:[%s117 + $0x878] sm:$0xff]
        %v410 = vld [vmem:[%s117 + $0x880] sm:$0xff]
        %v411 = vld [vmem:[%s117 + $0x888] sm:$0xff]
        %v412 = vld [vmem:[%s117 + $0x890] sm:$0xff]
        %v413 = vld [vmem:[%s117 + $0x898] sm:$0xff]
        %v414 = vld [vmem:[%s117 + $0x8a0] sm:$0xff]
        %v415 = vld [vmem:[%s117 + $0x8a8] sm:$0xff]
        %v416 = vld [vmem:[%s117 + $0x8b0] sm:$0xff]
        %v417 = vld [vmem:[%s117 + $0x8b8] sm:$0xff]
        %v418 = vld [vmem:[%s117 + $0x8c0] sm:$0xff]
        %v419 = vld [vmem:[%s117 + $0x8c8] sm:$0xff]
        %v420 = vld [vmem:[%s117 + $0x8d0] sm:$0xff]
        %v421 = vld [vmem:[%s117 + $0x8d8] sm:$0xff]
        %v422 = vld [vmem:[%s117 + $0x8e0] sm:$0xff]
        %v423 = vld [vmem:[%s117 + $0x8e8] sm:$0xff]
        %v424 = vld [vmem:[%s117 + $0x8f0] sm:$0xff]
        %v425 = vld [vmem:[%s117 + $0x8f8] sm:$0xff]
        %v426 = vld [vmem:[%s117 + $0x900] sm:$0xff]
        %v427 = vld [vmem:[%s117 + $0x908] sm:$0xff]
        %v428 = vld [vmem:[%s117 + $0x910] sm:$0xff]
        %v429 = vld [vmem:[%s117 + $0x918] sm:$0xff]
        %v430 = vld [vmem:[%s117 + $0x920] sm:$0xff]
        %v431 = vld [vmem:[%s117 + $0x928] sm:$0xff]
        %v432 = vld [vmem:[%s117 + $0x930] sm:$0xff]
        %v433 = vld [vmem:[%s117 + $0x938] sm:$0xff]
        %v434 = vld [vmem:[%s117 + $0x940] sm:$0xff]
        %v435 = vld [vmem:[%s117 + $0x948] sm:$0xff]
        %v436 = vld [vmem:[%s117 + $0x950] sm:$0xff]
        %v437 = vld [vmem:[%s117 + $0x958] sm:$0xff]
        %v438 = vld [vmem:[%s117 + $0x960] sm:$0xff]
        %v439 = vld [vmem:[%s117 + $0x968] sm:$0xff]
        %v440 = vld [vmem:[%s117 + $0x970] sm:$0xff]
        %v441 = vld [vmem:[%s117 + $0x978] sm:$0xff]
        %v442 = vld [vmem:[%s117 + $0x980] sm:$0xff]
        %v443 = vld [vmem:[%s117 + $0x988] sm:$0xff]
        %v444 = vld [vmem:[%s117 + $0x990] sm:$0xff]
        %v445 = vld [vmem:[%s117 + $0x998] sm:$0xff]
        %v446 = vld [vmem:[%s117 + $0x9a0] sm:$0xff]
        %v447 = vld [vmem:[%s117 + $0x9a8] sm:$0xff]
        %v448 = vld [vmem:[%s117 + $0x9b0] sm:$0xff]
        %v449 = vld [vmem:[%s117 + $0x9b8] sm:$0xff]
        %v450 = vld [vmem:[%s117 + $0x9c0] sm:$0xff]
        %v451 = vld [vmem:[%s117 + $0x9c8] sm:$0xff]
        %v452 = vld [vmem:[%s117 + $0x9d0] sm:$0xff]
        %v453 = vld [vmem:[%s117 + $0x9d8] sm:$0xff]
        %v454 = vld [vmem:[%s117 + $0x9e0] sm:$0xff]
        %v455 = vld [vmem:[%s117 + $0x9e8] sm:$0xff]
        %v456 = vld [vmem:[%s117 + $0x9f0] sm:$0xff]
        %v457 = vld [vmem:[%s117 + $0x9f8] sm:$0xff]
        %v458 = vld [vmem:[%s117 + $0xa00] sm:$0xff]
        %v459 = vld [vmem:[%s117 + $0xa08] sm:$0xff]
        %v460 = vld [vmem:[%s117 + $0xa10] sm:$0xff]
        %v461 = vld [vmem:[%s117 + $0xa18] sm:$0xff]
        %v462 = vld [vmem:[%s117 + $0xa20] sm:$0xff]
        %v463 = vld [vmem:[%s117 + $0xa28] sm:$0xff]
        %v464 = vld [vmem:[%s117 + $0xa30] sm:$0xff]
        %v465 = vld [vmem:[%s117 + $0xa38] sm:$0xff]
        %v466 = vld [vmem:[%s117 + $0xa40] sm:$0xff]
        %v467 = vld [vmem:[%s117 + $0xa48] sm:$0xff]
        %v468 = vld [vmem:[%s117 + $0xa50] sm:$0xff]
        %v469 = vld [vmem:[%s117 + $0xa58] sm:$0xff]
        %v470 = vld [vmem:[%s117 + $0xa60] sm:$0xff]
        %v471 = vld [vmem:[%s117 + $0xa68] sm:$0xff]
        %v472 = vld [vmem:[%s117 + $0xa70] sm:$0xff]
        %v473 = vld [vmem:[%s117 + $0xa78] sm:$0xff]
        %v474 = vld [vmem:[%s117 + $0xa80] sm:$0xff]
        %v475 = vld [vmem:[%s117 + $0xa88] sm:$0xff]
        %v476 = vld [vmem:[%s117 + $0xa90] sm:$0xff]
        %v477 = vld [vmem:[%s117 + $0xa98] sm:$0xff]
        %v478 = vld [vmem:[%s117 + $0xaa0] sm:$0xff]
        %v479 = vld [vmem:[%s117 + $0xaa8] sm:$0xff]
        %v480 = vld [vmem:[%s117 + $0xab0] sm:$0xff]
        %v481 = vld [vmem:[%s117 + $0xab8] sm:$0xff]
        %v482 = vld [vmem:[%s117 + $0xac0] sm:$0xff]
        %v483 = vld [vmem:[%s117 + $0xac8] sm:$0xff]
        %v484 = vld [vmem:[%s117 + $0xad0] sm:$0xff]
        %v485 = vld [vmem:[%s117 + $0xad8] sm:$0xff]
        %v486 = vld [vmem:[%s117 + $0xae0] sm:$0xff]
        %v487 = vld [vmem:[%s117 + $0xae8] sm:$0xff]
        %v488 = vld [vmem:[%s117 + $0xaf0] sm:$0xff]
        %v489 = vld [vmem:[%s117 + $0xaf8] sm:$0xff]
        %v490 = vld [vmem:[%s117 + $0xb00] sm:$0xff]
        %v491 = vld [vmem:[%s117 + $0xb08] sm:$0xff]
        %v492 = vld [vmem:[%s117 + $0xb10] sm:$0xff]
        %v493 = vld [vmem:[%s117 + $0xb18] sm:$0xff]
        %v494 = vld [vmem:[%s117 + $0xb20] sm:$0xff]
        %v495 = vld [vmem:[%s117 + $0xb28] sm:$0xff]
        %v496 = vld [vmem:[%s117 + $0xb30] sm:$0xff]
        %v497 = vld [vmem:[%s117 + $0xb38] sm:$0xff]
        %v498 = vld [vmem:[%s117 + $0xb40] sm:$0xff]
        %v499 = vld [vmem:[%s117 + $0xb48] sm:$0xff]
        %v500 = vld [vmem:[%s117 + $0xb50] sm:$0xff]
        %v501 = vld [vmem:[%s117 + $0xb58] sm:$0xff]
        %v502 = vld [vmem:[%s117 + $0xb60] sm:$0xff]
        %v503 = vld [vmem:[%s117 + $0xb68] sm:$0xff]
        %v504 = vld [vmem:[%s117 + $0xb70] sm:$0xff]
        %v505 = vld [vmem:[%s117 + $0xb78] sm:$0xff]
        %v506 = vld [vmem:[%s117 + $0xb80] sm:$0xff]
        %v507 = vld [vmem:[%s117 + $0xb88] sm:$0xff]
        %v508 = vld [vmem:[%s117 + $0xb90] sm:$0xff]
        %v509 = vld [vmem:[%s117 + $0xb98] sm:$0xff]
        %v510 = vld [vmem:[%s117 + $0xba0] sm:$0xff]
        %v511 = vld [vmem:[%s117 + $0xba8] sm:$0xff]
        %v512 = vld [vmem:[%s117 + $0xbb0] sm:$0xff]
        %v513 = vld [vmem:[%s117 + $0xbb8] sm:$0xff]
        %v514 = vld [vmem:[%s117 + $0xbc0] sm:$0xff]
        %v515 = vld [vmem:[%s117 + $0xbc8] sm:$0xff]
        %v516 = vld [vmem:[%s117 + $0xbd0] sm:$0xff]
        %v517 = vld [vmem:[%s117 + $0xbd8] sm:$0xff]
        %v518 = vld [vmem:[%s117 + $0xbe0] sm:$0xff]
        %v519 = vld [vmem:[%s117 + $0xbe8] sm:$0xff]
        %v520 = vld [vmem:[%s117 + $0xbf0] sm:$0xff]
        %v521 = vld [vmem:[%s117 + $0xbf8] sm:$0xff]
        %v522 = vld [vmem:[%s117 + $0xc00] sm:$0xff]
        %v523 = vld [vmem:[%s117 + $0xc08] sm:$0xff]
        %v524 = vld [vmem:[%s117 + $0xc10] sm:$0xff]
        %v525 = vld [vmem:[%s117 + $0xc18] sm:$0xff]
        %v526 = vld [vmem:[%s117 + $0xc20] sm:$0xff]
        %v527 = vld [vmem:[%s117 + $0xc28] sm:$0xff]
        %v528 = vld [vmem:[%s117 + $0xc30] sm:$0xff]
        %v529 = vld [vmem:[%s117 + $0xc38] sm:$0xff]
        %v530 = vld [vmem:[%s117 + $0xc40] sm:$0xff]
        %v531 = vld [vmem:[%s117 + $0xc48] sm:$0xff]
        %v532 = vld [vmem:[%s117 + $0xc50] sm:$0xff]
        %v533 = vld [vmem:[%s117 + $0xc58] sm:$0xff]
        %v534 = vld [vmem:[%s117 + $0xc60] sm:$0xff]
        %v535 = vld [vmem:[%s117 + $0xc68] sm:$0xff]
        %v536 = vld [vmem:[%s117 + $0xc70] sm:$0xff]
        %v537 = vld [vmem:[%s117 + $0xc78] sm:$0xff]
        %v538 = vld [vmem:[%s117 + $0xc80] sm:$0xff]
        %v539 = vld [vmem:[%s117 + $0xc88] sm:$0xff]
        %v540 = vld [vmem:[%s117 + $0xc90] sm:$0xff]
        %v541 = vld [vmem:[%s117 + $0xc98] sm:$0xff]
        %v542 = vld [vmem:[%s117 + $0xca0] sm:$0xff]
        %v543 = vld [vmem:[%s117 + $0xca8] sm:$0xff]
        %v544 = vld [vmem:[%s117 + $0xcb0] sm:$0xff]
        %v545 = vld [vmem:[%s117 + $0xcb8] sm:$0xff]
        %v546 = vld [vmem:[%s117 + $0xcc0] sm:$0xff]
        %v547 = vld [vmem:[%s117 + $0xcc8] sm:$0xff]
        %v548 = vld [vmem:[%s117 + $0xcd0] sm:$0xff]
        %v549 = vld [vmem:[%s117 + $0xcd8] sm:$0xff]
        %v550 = vld [vmem:[%s117 + $0xce0] sm:$0xff]
        %v551 = vld [vmem:[%s117 + $0xce8] sm:$0xff]
        %v552 = vld [vmem:[%s117 + $0xcf0] sm:$0xff]
        %v553 = vld [vmem:[%s117 + $0xcf8] sm:$0xff]
        %v554 = vld [vmem:[%s117 + $0xd00] sm:$0xff]
        %v555 = vld [vmem:[%s117 + $0xd08] sm:$0xff]
        %v556 = vld [vmem:[%s117 + $0xd10] sm:$0xff]
        %v557 = vld [vmem:[%s117 + $0xd18] sm:$0xff]
        %v558 = vld [vmem:[%s117 + $0xd20] sm:$0xff]
        %v559 = vld [vmem:[%s117 + $0xd28] sm:$0xff]
        %v560 = vld [vmem:[%s117 + $0xd30] sm:$0xff]
        %v561 = vld [vmem:[%s117 + $0xd38] sm:$0xff]
        %v562 = vld [vmem:[%s117 + $0xd40] sm:$0xff]
        %v563 = vld [vmem:[%s117 + $0xd48] sm:$0xff]
        %v564 = vld [vmem:[%s117 + $0xd50] sm:$0xff]
        %v565 = vld [vmem:[%s117 + $0xd58] sm:$0xff]
        %v566 = vld [vmem:[%s117 + $0xd60] sm:$0xff]
        %v567 = vld [vmem:[%s117 + $0xd68] sm:$0xff]
        %v568 = vld [vmem:[%s117 + $0xd70] sm:$0xff]
        %v569 = vld [vmem:[%s117 + $0xd78] sm:$0xff]
        %v570 = vld [vmem:[%s117 + $0xd80] sm:$0xff]
        %v571 = vld [vmem:[%s117 + $0xd88] sm:$0xff]
        %v572 = vld [vmem:[%s117 + $0xd90] sm:$0xff]
        %v573 = vld [vmem:[%s117 + $0xd98] sm:$0xff]
        %v574 = vld [vmem:[%s117 + $0xda0] sm:$0xff]
        %v575 = vld [vmem:[%s117 + $0xda8] sm:$0xff]
        %v576 = vld [vmem:[%s117 + $0xdb0] sm:$0xff]
        %v577 = vld [vmem:[%s117 + $0xdb8] sm:$0xff]
        %v578 = vld [vmem:[%s117 + $0xdc0] sm:$0xff]
        %v579 = vld [vmem:[%s117 + $0xdc8] sm:$0xff]
        %v580 = vld [vmem:[%s117 + $0xdd0] sm:$0xff]
        %v581 = vld [vmem:[%s117 + $0xdd8] sm:$0xff]
        %v582 = vld [vmem:[%s117 + $0xde0] sm:$0xff]
        %v583 = vld [vmem:[%s117 + $0xde8] sm:$0xff]
        %v584 = vld [vmem:[%s117 + $0xdf0] sm:$0xff]
        %v585 = vld [vmem:[%s117 + $0xdf8] sm:$0xff]
        %v586 = vld [vmem:[%s117 + $0xe00] sm:$0xff]
        %v587 = vld [vmem:[%s117 + $0xe08] sm:$0xff]
        %v588 = vld [vmem:[%s117 + $0xe10] sm:$0xff]
        %v589 = vld [vmem:[%s117 + $0xe18] sm:$0xff]
        %v590 = vld [vmem:[%s117 + $0xe20] sm:$0xff]
        %v591 = vld [vmem:[%s117 + $0xe28] sm:$0xff]
        %v592 = vld [vmem:[%s117 + $0xe30] sm:$0xff]
        %v593 = vld [vmem:[%s117 + $0xe38] sm:$0xff]
        %v594 = vld [vmem:[%s117 + $0xe40] sm:$0xff]
        %v595 = vld [vmem:[%s117 + $0xe48] sm:$0xff]
        %v596 = vld [vmem:[%s117 + $0xe50] sm:$0xff]
        %v597 = vld [vmem:[%s117 + $0xe58] sm:$0xff]
        %v598 = vld [vmem:[%s117 + $0xe60] sm:$0xff]
        %v599 = vld [vmem:[%s117 + $0xe68] sm:$0xff]
        %v600 = vld [vmem:[%s117 + $0xe70] sm:$0xff]
        %v601 = vld [vmem:[%s117 + $0xe78] sm:$0xff]
        %v602 = vld [vmem:[%s117 + $0xe80] sm:$0xff]
        %v603 = vld [vmem:[%s117 + $0xe88] sm:$0xff]
        %v604 = vld [vmem:[%s117 + $0xe90] sm:$0xff]
        %v605 = vld [vmem:[%s117 + $0xe98] sm:$0xff]
        %v606 = vld [vmem:[%s117 + $0xea0] sm:$0xff]
        %v607 = vld [vmem:[%s117 + $0xea8] sm:$0xff]
        %v608 = vld [vmem:[%s117 + $0xeb0] sm:$0xff]
        %v609 = vld [vmem:[%s117 + $0xeb8] sm:$0xff]
        %v610 = vld [vmem:[%s117 + $0xec0] sm:$0xff]
        %v611 = vld [vmem:[%s117 + $0xec8] sm:$0xff]
        %v612 = vld [vmem:[%s117 + $0xed0] sm:$0xff]
        %v613 = vld [vmem:[%s117 + $0xed8] sm:$0xff]
        %v614 = vld [vmem:[%s117 + $0xee0] sm:$0xff]
        %v615 = vld [vmem:[%s117 + $0xee8] sm:$0xff]
        %v616 = vld [vmem:[%s117 + $0xef0] sm:$0xff]
        %v617 = vld [vmem:[%s117 + $0xef8] sm:$0xff]
        %v618 = vld [vmem:[%s117 + $0xf00] sm:$0xff]
        %v619 = vld [vmem:[%s117 + $0xf08] sm:$0xff]
        %v620 = vld [vmem:[%s117 + $0xf10] sm:$0xff]
        %v621 = vld [vmem:[%s117 + $0xf18] sm:$0xff]
        %v622 = vld [vmem:[%s117 + $0xf20] sm:$0xff]
        %v623 = vld [vmem:[%s117 + $0xf28] sm:$0xff]
        %v624 = vld [vmem:[%s117 + $0xf30] sm:$0xff]
        %v625 = vld [vmem:[%s117 + $0xf38] sm:$0xff]
        %v626 = vld [vmem:[%s117 + $0xf40] sm:$0xff]
        %v627 = vld [vmem:[%s117 + $0xf48] sm:$0xff]
        %v628 = vld [vmem:[%s117 + $0xf50] sm:$0xff]
        %v629 = vld [vmem:[%s117 + $0xf58] sm:$0xff]
        %v630 = vld [vmem:[%s117 + $0xf60] sm:$0xff]
        %v631 = vld [vmem:[%s117 + $0xf68] sm:$0xff]
        %v632 = vld [vmem:[%s117 + $0xf70] sm:$0xff]
        %v633 = vld [vmem:[%s117 + $0xf78] sm:$0xff]
        %v634 = vld [vmem:[%s117 + $0xf80] sm:$0xff]
        %v635 = vld [vmem:[%s117 + $0xf88] sm:$0xff]
        %v636 = vld [vmem:[%s117 + $0xf90] sm:$0xff]
        %v637 = vld [vmem:[%s117 + $0xf98] sm:$0xff]
        %v638 = vld [vmem:[%s117 + $0xfa0] sm:$0xff]
        %v639 = vld [vmem:[%s117 + $0xfa8] sm:$0xff]
        %v640 = vld [vmem:[%s117 + $0xfb0] sm:$0xff]
        %v641 = vld [vmem:[%s117 + $0xfb8] sm:$0xff]
        %v642 = vld [vmem:[%s117 + $0xfc0] sm:$0xff]
        %v643 = vld [vmem:[%s117 + $0xfc8] sm:$0xff]
        %v644 = vld [vmem:[%s117 + $0xfd0] sm:$0xff]
        %v645 = vld [vmem:[%s117 + $0xfd8] sm:$0xff]
        %v646 = vld [vmem:[%s117 + $0xfe0] sm:$0xff]
        %v647 = vld [vmem:[%s117 + $0xfe8] sm:$0xff]
        %v648 = vld [vmem:[%s117 + $0xff0] sm:$0xff]
        %v649 = vld [vmem:[%s117 + $0xff8] sm:$0xff]
        %v650 = vld [vmem:[%s117 + $0x1000] sm:$0xff]
        %v651 = vld [vmem:[%s117 + $0x1008] sm:$0xff]
        %v652 = vld [vmem:[%s117 + $0x1010] sm:$0xff]
        %v653 = vld [vmem:[%s117 + $0x1018] sm:$0xff]
        %v654 = vld [vmem:[%s117 + $0x1020] sm:$0xff]
        %v655 = vld [vmem:[%s117 + $0x1028] sm:$0xff]
        %v656 = vld [vmem:[%s117 + $0x1030] sm:$0xff]
        %v657 = vld [vmem:[%s117 + $0x1038] sm:$0xff]
        %v658 = vld [vmem:[%s117 + $0x1040] sm:$0xff]
        %v659 = vld [vmem:[%s117 + $0x1048] sm:$0xff]
        %v660 = vld [vmem:[%s117 + $0x1050] sm:$0xff]
        %v661 = vld [vmem:[%s117 + $0x1058] sm:$0xff]
        %v662 = vld [vmem:[%s117 + $0x1060] sm:$0xff]
        %v663 = vld [vmem:[%s117 + $0x1068] sm:$0xff]
        %v664 = vld [vmem:[%s117 + $0x1070] sm:$0xff]
        %v665 = vld [vmem:[%s117 + $0x1078] sm:$0xff]
        %v666 = vld [vmem:[%s117 + $0x1080] sm:$0xff]
        %v667 = vld [vmem:[%s117 + $0x1088] sm:$0xff]
        %v668 = vld [vmem:[%s117 + $0x1090] sm:$0xff]
        %v669 = vld [vmem:[%s117 + $0x1098] sm:$0xff]
        %v670 = vld [vmem:[%s117 + $0x10a0] sm:$0xff]
        %v671 = vld [vmem:[%s117 + $0x10a8] sm:$0xff]
        %v672 = vld [vmem:[%s117 + $0x10b0] sm:$0xff]
        %v673 = vld [vmem:[%s117 + $0x10b8] sm:$0xff]
        %v674 = vld [vmem:[%s117 + $0x10c0] sm:$0xff]
        %v675 = vld [vmem:[%s117 + $0x10c8] sm:$0xff]
        %v676 = vld [vmem:[%s117 + $0x10d0] sm:$0xff]
        %v677 = vld [vmem:[%s117 + $0x10d8] sm:$0xff]
        %v678 = vld [vmem:[%s117 + $0x10e0] sm:$0xff]
        %v679 = vld [vmem:[%s117 + $0x10e8] sm:$0xff]
        %v680 = vld [vmem:[%s117 + $0x10f0] sm:$0xff]
        %v681 = vld [vmem:[%s117 + $0x10f8] sm:$0xff]
        %v682 = vld [vmem:[%s117 + $0x1100] sm:$0xff]
        %v683 = vld [vmem:[%s117 + $0x1108] sm:$0xff]
        %v684 = vld [vmem:[%s117 + $0x1110] sm:$0xff]
        %v685 = vld [vmem:[%s117 + $0x1118] sm:$0xff]
        %v686 = vld [vmem:[%s117 + $0x1120] sm:$0xff]
        %v687 = vld [vmem:[%s117 + $0x1128] sm:$0xff]
        %v688 = vld [vmem:[%s117 + $0x1130] sm:$0xff]
        %v689 = vld [vmem:[%s117 + $0x1138] sm:$0xff]
        %v690 = vld [vmem:[%s117 + $0x1140] sm:$0xff]
        %v691 = vld [vmem:[%s117 + $0x1148] sm:$0xff]
        %v692 = vld [vmem:[%s117 + $0x1150] sm:$0xff]
        %v693 = vld [vmem:[%s117 + $0x1158] sm:$0xff]
        %v694 = vld [vmem:[%s117 + $0x1160] sm:$0xff]
        %v695 = vld [vmem:[%s117 + $0x1168] sm:$0xff]
        %v696 = vld [vmem:[%s117 + $0x1170] sm:$0xff]
        %v697 = vld [vmem:[%s117 + $0x1178] sm:$0xff]
        %v698 = vld [vmem:[%s117 + $0x1180] sm:$0xff]
        %v699 = vld [vmem:[%s117 + $0x1188] sm:$0xff]
        %v700 = vld [vmem:[%s117 + $0x1190] sm:$0xff]
        %v701 = vld [vmem:[%s117 + $0x1198] sm:$0xff]
        %v702 = vld [vmem:[%s117 + $0x11a0] sm:$0xff]
        %v703 = vld [vmem:[%s117 + $0x11a8] sm:$0xff]
        %v704 = vld [vmem:[%s117 + $0x11b0] sm:$0xff]
        %v705 = vld [vmem:[%s117 + $0x11b8] sm:$0xff]
        %v706 = vld [vmem:[%s117 + $0x11c0] sm:$0xff]
        %v707 = vld [vmem:[%s117 + $0x11c8] sm:$0xff]
        %v708 = vld [vmem:[%s117 + $0x11d0] sm:$0xff]
        %v709 = vld [vmem:[%s117 + $0x11d8] sm:$0xff]
        %v710 = vld [vmem:[%s117 + $0x11e0] sm:$0xff]
        %v711 = vld [vmem:[%s117 + $0x11e8] sm:$0xff]
        %v712 = vld [vmem:[%s117 + $0x11f0] sm:$0xff]
        %v713 = vld [vmem:[%s117 + $0x11f8] sm:$0xff]
        %v714 = vld [vmem:[%s117 + $0x1200] sm:$0xff]
        %v715 = vld [vmem:[%s117 + $0x1208] sm:$0xff]
        %v716 = vld [vmem:[%s117 + $0x1210] sm:$0xff]
        %v717 = vld [vmem:[%s117 + $0x1218] sm:$0xff]
        %v718 = vld [vmem:[%s117 + $0x1220] sm:$0xff]
        %v719 = vld [vmem:[%s117 + $0x1228] sm:$0xff]
        %v720 = vld [vmem:[%s117 + $0x1230] sm:$0xff]
        %v721 = vld [vmem:[%s117 + $0x1238] sm:$0xff]
        %v722 = vld [vmem:[%s117 + $0x1240] sm:$0xff]
        %v723 = vld [vmem:[%s117 + $0x1248] sm:$0xff]
        %v724 = vld [vmem:[%s117 + $0x1250] sm:$0xff]
        %v725 = vld [vmem:[%s117 + $0x1258] sm:$0xff]
        %v726 = vld [vmem:[%s117 + $0x1260] sm:$0xff]
        %v727 = vld [vmem:[%s117 + $0x1268] sm:$0xff]
        %v728 = vld [vmem:[%s117 + $0x1270] sm:$0xff]
        %v729 = vld [vmem:[%s117 + $0x1278] sm:$0xff]
        %v730 = vld [vmem:[%s117 + $0x1280] sm:$0xff]
        %v731 = vld [vmem:[%s117 + $0x1288] sm:$0xff]
        %v732 = vld [vmem:[%s117 + $0x1290] sm:$0xff]
        %v733 = vld [vmem:[%s117 + $0x1298] sm:$0xff]
        %v734 = vld [vmem:[%s117 + $0x12a0] sm:$0xff]
        %v735 = vld [vmem:[%s117 + $0x12a8] sm:$0xff]
        %v736 = vld [vmem:[%s117 + $0x12b0] sm:$0xff]
        %v737 = vld [vmem:[%s117 + $0x12b8] sm:$0xff]
        %v738 = vld [vmem:[%s117 + $0x12c0] sm:$0xff]
        %v739 = vld [vmem:[%s117 + $0x12c8] sm:$0xff]
        %v740 = vld [vmem:[%s117 + $0x12d0] sm:$0xff]
        %v741 = vld [vmem:[%s117 + $0x12d8] sm:$0xff]
        %v742 = vld [vmem:[%s117 + $0x12e0] sm:$0xff]
        %v743 = vld [vmem:[%s117 + $0x12e8] sm:$0xff]
        %v744 = vld [vmem:[%s117 + $0x12f0] sm:$0xff]
        %v745 = vld [vmem:[%s117 + $0x12f8] sm:$0xff]
        %v746 = vld [vmem:[%s117 + $0x1300] sm:$0xff]
        %v747 = vld [vmem:[%s117 + $0x1308] sm:$0xff]
        %v748 = vld [vmem:[%s117 + $0x1310] sm:$0xff]
        %v749 = vld [vmem:[%s117 + $0x1318] sm:$0xff]
        %v750 = vld [vmem:[%s117 + $0x1320] sm:$0xff]
        %v751 = vld [vmem:[%s117 + $0x1328] sm:$0xff]
        %v752 = vld [vmem:[%s117 + $0x1330] sm:$0xff]
        %v753 = vld [vmem:[%s117 + $0x1338] sm:$0xff]
        %v754 = vld [vmem:[%s117 + $0x1340] sm:$0xff]
        %v755 = vld [vmem:[%s117 + $0x1348] sm:$0xff]
        %v756 = vld [vmem:[%s117 + $0x1350] sm:$0xff]
        %v757 = vld [vmem:[%s117 + $0x1358] sm:$0xff]
        %v758 = vld [vmem:[%s117 + $0x1360] sm:$0xff]
        %v759 = vld [vmem:[%s117 + $0x1368] sm:$0xff]
        %v760 = vld [vmem:[%s117 + $0x1370] sm:$0xff]
        %v761 = vld [vmem:[%s117 + $0x1378] sm:$0xff]
        %v762 = vld [vmem:[%s117 + $0x1380] sm:$0xff]
        %v763 = vld [vmem:[%s117 + $0x1388] sm:$0xff]
        %v764 = vld [vmem:[%s117 + $0x1390] sm:$0xff]
        %v765 = vld [vmem:[%s117 + $0x1398] sm:$0xff]
        %v766 = vld [vmem:[%s117 + $0x13a0] sm:$0xff]
        %v767 = vld [vmem:[%s117 + $0x13a8] sm:$0xff]
        %v768 = vld [vmem:[%s117 + $0x13b0] sm:$0xff]
        %v769 = vld [vmem:[%s117 + $0x13b8] sm:$0xff]
        %v770 = vld [vmem:[%s117 + $0x13c0] sm:$0xff]
        %v771 = vld [vmem:[%s117 + $0x13c8] sm:$0xff]
        %v772 = vld [vmem:[%s117 + $0x13d0] sm:$0xff]
        %v773 = vld [vmem:[%s117 + $0x13d8] sm:$0xff]
        %v774 = vld [vmem:[%s117 + $0x13e0] sm:$0xff]
        %v775 = vld [vmem:[%s117 + $0x13e8] sm:$0xff]
        %v776 = vld [vmem:[%s117 + $0x13f0] sm:$0xff]
        %v777 = vld [vmem:[%s117 + $0x13f8] sm:$0xff]
        %v778 = vld [vmem:[%s117 + $0x1400] sm:$0xff]
        %v779 = vld [vmem:[%s117 + $0x1408] sm:$0xff]
        %v780 = vld [vmem:[%s117 + $0x1410] sm:$0xff]
        %v781 = vld [vmem:[%s117 + $0x1418] sm:$0xff]
        %v782 = vld [vmem:[%s117 + $0x1420] sm:$0xff]
        %v783 = vld [vmem:[%s117 + $0x1428] sm:$0xff]
        %v784 = vld [vmem:[%s117 + $0x1430] sm:$0xff]
        %v785 = vld [vmem:[%s117 + $0x1438] sm:$0xff]
        %v786 = vld [vmem:[%s117 + $0x1440] sm:$0xff]
        %v787 = vld [vmem:[%s117 + $0x1448] sm:$0xff]
        %v788 = vld [vmem:[%s117 + $0x1450] sm:$0xff]
        %v789 = vld [vmem:[%s117 + $0x1458] sm:$0xff]
        %v790 = vld [vmem:[%s117 + $0x1460] sm:$0xff]
        %v791 = vld [vmem:[%s117 + $0x1468] sm:$0xff]
        %v792 = vld [vmem:[%s117 + $0x1470] sm:$0xff]
        %v793 = vld [vmem:[%s117 + $0x1478] sm:$0xff]
        %v794 = vld [vmem:[%s117 + $0x1480] sm:$0xff]
        %v795 = vld [vmem:[%s117 + $0x1488] sm:$0xff]
        %v796 = vld [vmem:[%s117 + $0x1490] sm:$0xff]
        %v797 = vld [vmem:[%s117 + $0x1498] sm:$0xff]
        %v798 = vld [vmem:[%s117 + $0x14a0] sm:$0xff]
        %v799 = vld [vmem:[%s117 + $0x14a8] sm:$0xff]
        %v800 = vld [vmem:[%s117 + $0x14b0] sm:$0xff]
        %v801 = vld [vmem:[%s117 + $0x14b8] sm:$0xff]
        %v802 = vld [vmem:[%s117 + $0x14c0] sm:$0xff]
        %v803 = vld [vmem:[%s117 + $0x14c8] sm:$0xff]
        %v804 = vld [vmem:[%s117 + $0x14d0] sm:$0xff]
        %v805 = vld [vmem:[%s117 + $0x14d8] sm:$0xff]
        %v806 = vld [vmem:[%s117 + $0x14e0] sm:$0xff]
        %v807 = vld [vmem:[%s117 + $0x14e8] sm:$0xff]
        %v808 = vld [vmem:[%s117 + $0x14f0] sm:$0xff]
        %v809 = vld [vmem:[%s117 + $0x14f8] sm:$0xff]
        %v810 = vld [vmem:[%s117 + $0x1500] sm:$0xff]
        %v811 = vld [vmem:[%s117 + $0x1508] sm:$0xff]
        %v812 = vld [vmem:[%s117 + $0x1510] sm:$0xff]
        %v813 = vld [vmem:[%s117 + $0x1518] sm:$0xff]
        %v814 = vld [vmem:[%s117 + $0x1520] sm:$0xff]
        %v815 = vld [vmem:[%s117 + $0x1528] sm:$0xff]
        %v816 = vld [vmem:[%s117 + $0x1530] sm:$0xff]
        %v817 = vld [vmem:[%s117 + $0x1538] sm:$0xff]
        %v818 = vld [vmem:[%s117 + $0x1540] sm:$0xff]
        %v819 = vld [vmem:[%s117 + $0x1548] sm:$0xff]
        %v820 = vld [vmem:[%s117 + $0x1550] sm:$0xff]
        %v821 = vld [vmem:[%s117 + $0x1558] sm:$0xff]
        %v822 = vld [vmem:[%s117 + $0x1560] sm:$0xff]
        %v823 = vld [vmem:[%s117 + $0x1568] sm:$0xff]
        %v824 = vld [vmem:[%s117 + $0x1570] sm:$0xff]
        %v825 = vld [vmem:[%s117 + $0x1578] sm:$0xff]
        %v826 = vld [vmem:[%s117 + $0x1580] sm:$0xff]
        %v827 = vld [vmem:[%s117 + $0x1588] sm:$0xff]
        %v828 = vld [vmem:[%s117 + $0x1590] sm:$0xff]
        %v829 = vld [vmem:[%s117 + $0x1598] sm:$0xff]
        %v830 = vld [vmem:[%s117 + $0x15a0] sm:$0xff]
        %v831 = vld [vmem:[%s117 + $0x15a8] sm:$0xff]
        %v832 = vld [vmem:[%s117 + $0x15b0] sm:$0xff]
        %v833 = vld [vmem:[%s117 + $0x15b8] sm:$0xff]
        %v834 = vld [vmem:[%s117 + $0x15c0] sm:$0xff]
        %v835 = vld [vmem:[%s117 + $0x15c8] sm:$0xff]
        %v836 = vld [vmem:[%s117 + $0x15d0] sm:$0xff]
        %v837 = vld [vmem:[%s117 + $0x15d8] sm:$0xff]
        %v838 = vld [vmem:[%s117 + $0x15e0] sm:$0xff]
        %v839 = vld [vmem:[%s117 + $0x15e8] sm:$0xff]
        %v840 = vld [vmem:[%s117 + $0x15f0] sm:$0xff]
        %v841 = vld [vmem:[%s117 + $0x15f8] sm:$0xff]
        %v842 = vld [vmem:[%s117 + $0x1600] sm:$0xff]
        %v843 = vld [vmem:[%s117 + $0x1608] sm:$0xff]
        %v844 = vld [vmem:[%s117 + $0x1610] sm:$0xff]
        %v845 = vld [vmem:[%s117 + $0x1618] sm:$0xff]
        %v846 = vld [vmem:[%s117 + $0x1620] sm:$0xff]
        %v847 = vld [vmem:[%s117 + $0x1628] sm:$0xff]
        %v848 = vld [vmem:[%s117 + $0x1630] sm:$0xff]
        %v849 = vld [vmem:[%s117 + $0x1638] sm:$0xff]
        %v850 = vld [vmem:[%s117 + $0x1640] sm:$0xff]
        %v851 = vld [vmem:[%s117 + $0x1648] sm:$0xff]
        %v852 = vld [vmem:[%s117 + $0x1650] sm:$0xff]
        %v853 = vld [vmem:[%s117 + $0x1658] sm:$0xff]
        %v854 = vld [vmem:[%s117 + $0x1660] sm:$0xff]
        %v855 = vld [vmem:[%s117 + $0x1668] sm:$0xff]
        %v856 = vld [vmem:[%s117 + $0x1670] sm:$0xff]
        %v857 = vld [vmem:[%s117 + $0x1678] sm:$0xff]
        %v858 = vld [vmem:[%s117 + $0x1680] sm:$0xff]
        %v859 = vld [vmem:[%s117 + $0x1688] sm:$0xff]
        %v860 = vld [vmem:[%s117 + $0x1690] sm:$0xff]
        %v861 = vld [vmem:[%s117 + $0x1698] sm:$0xff]
        %v862 = vld [vmem:[%s117 + $0x16a0] sm:$0xff]
        %v863 = vld [vmem:[%s117 + $0x16a8] sm:$0xff]
        %v864 = vld [vmem:[%s117 + $0x16b0] sm:$0xff]
        %v865 = vld [vmem:[%s117 + $0x16b8] sm:$0xff]
        %v866 = vld [vmem:[%s117 + $0x16c0] sm:$0xff]
        %v867 = vld [vmem:[%s117 + $0x16c8] sm:$0xff]
        %v868 = vld [vmem:[%s117 + $0x16d0] sm:$0xff]
        %v869 = vld [vmem:[%s117 + $0x16d8] sm:$0xff]
        %v870 = vld [vmem:[%s117 + $0x16e0] sm:$0xff]
        %v871 = vld [vmem:[%s117 + $0x16e8] sm:$0xff]
        %v872 = vld [vmem:[%s117 + $0x16f0] sm:$0xff]
        %v873 = vld [vmem:[%s117 + $0x16f8] sm:$0xff]
        %v874 = vld [vmem:[%s117 + $0x1700] sm:$0xff]
        %v875 = vld [vmem:[%s117 + $0x1708] sm:$0xff]
        %v876 = vld [vmem:[%s117 + $0x1710] sm:$0xff]
        %v877 = vld [vmem:[%s117 + $0x1718] sm:$0xff]
        %v878 = vld [vmem:[%s117 + $0x1720] sm:$0xff]
        %v879 = vld [vmem:[%s117 + $0x1728] sm:$0xff]
        %v880 = vld [vmem:[%s117 + $0x1730] sm:$0xff]
        %v881 = vld [vmem:[%s117 + $0x1738] sm:$0xff]
        %v882 = vld [vmem:[%s117 + $0x1740] sm:$0xff]
        %v883 = vld [vmem:[%s117 + $0x1748] sm:$0xff]
        %v884 = vld [vmem:[%s117 + $0x1750] sm:$0xff]
        %v885 = vld [vmem:[%s117 + $0x1758] sm:$0xff]
        %v886 = vld [vmem:[%s117 + $0x1760] sm:$0xff]
        %v887 = vld [vmem:[%s117 + $0x1768] sm:$0xff]
        %v888 = vld [vmem:[%s117 + $0x1770] sm:$0xff]
        %v889 = vld [vmem:[%s117 + $0x1778] sm:$0xff]
        %v890 = vld [vmem:[%s117 + $0x1780] sm:$0xff]
        %v891 = vld [vmem:[%s117 + $0x1788] sm:$0xff]
        %v892 = vld [vmem:[%s117 + $0x1790] sm:$0xff]
        %v893 = vld [vmem:[%s117 + $0x1798] sm:$0xff]
        %v894 = vld [vmem:[%s117 + $0x17a0] sm:$0xff]
        %v895 = vld [vmem:[%s117 + $0x17a8] sm:$0xff]
        %v896 = vld [vmem:[%s117 + $0x17b0] sm:$0xff]
        %v897 = vld [vmem:[%s117 + $0x17b8] sm:$0xff]
        %v898 = vld [vmem:[%s117 + $0x17c0] sm:$0xff]
        %v899 = vld [vmem:[%s117 + $0x17c8] sm:$0xff]
        %v900 = vld [vmem:[%s117 + $0x17d0] sm:$0xff]
        %v901 = vld [vmem:[%s117 + $0x17d8] sm:$0xff]
        %v902 = vld [vmem:[%s117 + $0x17e0] sm:$0xff]
        %v903 = vld [vmem:[%s117 + $0x17e8] sm:$0xff]
        %v904 = vld [vmem:[%s117 + $0x17f0] sm:$0xff]
        %v905 = vld [vmem:[%s117 + $0x17f8] sm:$0xff]
        %v906 = vld [vmem:[%s117 + $0x1800] sm:$0xff]
        %v907 = vld [vmem:[%s117 + $0x1808] sm:$0xff]
        %v908 = vld [vmem:[%s117 + $0x1810] sm:$0xff]
        %v909 = vld [vmem:[%s117 + $0x1818] sm:$0xff]
        %v910 = vld [vmem:[%s117 + $0x1820] sm:$0xff]
        %v911 = vld [vmem:[%s117 + $0x1828] sm:$0xff]
        %v912 = vld [vmem:[%s117 + $0x1830] sm:$0xff]
        %v913 = vld [vmem:[%s117 + $0x1838] sm:$0xff]
        %v914 = vld [vmem:[%s117 + $0x1840] sm:$0xff]
        %v915 = vld [vmem:[%s117 + $0x1848] sm:$0xff]
        %v916 = vld [vmem:[%s117 + $0x1850] sm:$0xff]
        %v917 = vld [vmem:[%s117 + $0x1858] sm:$0xff]
        %v918 = vld [vmem:[%s117 + $0x1860] sm:$0xff]
        %v919 = vld [vmem:[%s117 + $0x1868] sm:$0xff]
        %v920 = vld [vmem:[%s117 + $0x1870] sm:$0xff]
        %v921 = vld [vmem:[%s117 + $0x1878] sm:$0xff]
        %v922 = vld [vmem:[%s117 + $0x1880] sm:$0xff]
        %v923 = vld [vmem:[%s117 + $0x1888] sm:$0xff]
        %v924 = vld [vmem:[%s117 + $0x1890] sm:$0xff]
        %v925 = vld [vmem:[%s117 + $0x1898] sm:$0xff]
        %v926 = vld [vmem:[%s117 + $0x18a0] sm:$0xff]
        %v927 = vld [vmem:[%s117 + $0x18a8] sm:$0xff]
        %v928 = vld [vmem:[%s117 + $0x18b0] sm:$0xff]
        %v929 = vld [vmem:[%s117 + $0x18b8] sm:$0xff]
        %v930 = vld [vmem:[%s117 + $0x18c0] sm:$0xff]
        %v931 = vld [vmem:[%s117 + $0x18c8] sm:$0xff]
        %v932 = vld [vmem:[%s117 + $0x18d0] sm:$0xff]
        %v933 = vld [vmem:[%s117 + $0x18d8] sm:$0xff]
        %v934 = vld [vmem:[%s117 + $0x18e0] sm:$0xff]
        %v935 = vld [vmem:[%s117 + $0x18e8] sm:$0xff]
        %v936 = vld [vmem:[%s117 + $0x18f0] sm:$0xff]
        %v937 = vld [vmem:[%s117 + $0x18f8] sm:$0xff]
        %v938 = vld [vmem:[%s117 + $0x1900] sm:$0xff]
        %v939 = vld [vmem:[%s117 + $0x1908] sm:$0xff]
        %v940 = vld [vmem:[%s117 + $0x1910] sm:$0xff]
        %v941 = vld [vmem:[%s117 + $0x1918] sm:$0xff]
        %v942 = vld [vmem:[%s117 + $0x1920] sm:$0xff]
        %v943 = vld [vmem:[%s117 + $0x1928] sm:$0xff]
        %v944 = vld [vmem:[%s117 + $0x1930] sm:$0xff]
        %v945 = vld [vmem:[%s117 + $0x1938] sm:$0xff]
        %v946 = vld [vmem:[%s117 + $0x1940] sm:$0xff]
        %v947 = vld [vmem:[%s117 + $0x1948] sm:$0xff]
        %v948 = vld [vmem:[%s117 + $0x1950] sm:$0xff]
        %v949 = vld [vmem:[%s117 + $0x1958] sm:$0xff]
        %v950 = vld [vmem:[%s117 + $0x1960] sm:$0xff]
        %v951 = vld [vmem:[%s117 + $0x1968] sm:$0xff]
        %v952 = vld [vmem:[%s117 + $0x1970] sm:$0xff]
        %v953 = vld [vmem:[%s117 + $0x1978] sm:$0xff]
        %v954 = vld [vmem:[%s117 + $0x1980] sm:$0xff]
        %v955 = vld [vmem:[%s117 + $0x1988] sm:$0xff]
        %v956 = vld [vmem:[%s117 + $0x1990] sm:$0xff]
        %v957 = vld [vmem:[%s117 + $0x1998] sm:$0xff]
        %v958 = vld [vmem:[%s117 + $0x19a0] sm:$0xff]
        %v959 = vld [vmem:[%s117 + $0x19a8] sm:$0xff]
        %v960 = vld [vmem:[%s117 + $0x19b0] sm:$0xff]
        %v961 = vld [vmem:[%s117 + $0x19b8] sm:$0xff]
        %v962 = vld [vmem:[%s117 + $0x19c0] sm:$0xff]
        %v963 = vld [vmem:[%s117 + $0x19c8] sm:$0xff]
        %v964 = vld [vmem:[%s117 + $0x19d0] sm:$0xff]
        %v965 = vld [vmem:[%s117 + $0x19d8] sm:$0xff]
        %v966 = vld [vmem:[%s117 + $0x19e0] sm:$0xff]
        %v967 = vld [vmem:[%s117 + $0x19e8] sm:$0xff]
        %v968 = vld [vmem:[%s117 + $0x19f0] sm:$0xff]
        %v969 = vld [vmem:[%s117 + $0x19f8] sm:$0xff]
        %v970 = vld [vmem:[%s117 + $0x1a00] sm:$0xff]
        %v971 = vld [vmem:[%s117 + $0x1a08] sm:$0xff]
        %v972 = vld [vmem:[%s117 + $0x1a10] sm:$0xff]
        %v973 = vld [vmem:[%s117 + $0x1a18] sm:$0xff]
        %v974 = vld [vmem:[%s117 + $0x1a20] sm:$0xff]
        %v975 = vld [vmem:[%s117 + $0x1a28] sm:$0xff]
        %v976 = vld [vmem:[%s117 + $0x1a30] sm:$0xff]
        %v977 = vld [vmem:[%s117 + $0x1a38] sm:$0xff]
        %v978 = vld [vmem:[%s117 + $0x1a40] sm:$0xff]
        %v979 = vld [vmem:[%s117 + $0x1a48] sm:$0xff]
        %v980 = vld [vmem:[%s117 + $0x1a50] sm:$0xff]
        %v981 = vld [vmem:[%s117 + $0x1a58] sm:$0xff]
        %v982 = vld [vmem:[%s117 + $0x1a60] sm:$0xff]
        %v983 = vld [vmem:[%s117 + $0x1a68] sm:$0xff]
        %v984 = vld [vmem:[%s117 + $0x1a70] sm:$0xff]
        %v985 = vld [vmem:[%s117 + $0x1a78] sm:$0xff]
        %v986 = vld [vmem:[%s117 + $0x1a80] sm:$0xff]
        %v987 = vld [vmem:[%s117 + $0x1a88] sm:$0xff]
        %v988 = vld [vmem:[%s117 + $0x1a90] sm:$0xff]
        %v989 = vld [vmem:[%s117 + $0x1a98] sm:$0xff]
        %v990 = vld [vmem:[%s117 + $0x1aa0] sm:$0xff]
        %v991 = vld [vmem:[%s117 + $0x1aa8] sm:$0xff]
        %v992 = vld [vmem:[%s117 + $0x1ab0] sm:$0xff]
        %v993 = vld [vmem:[%s117 + $0x1ab8] sm:$0xff]
        %v994 = vld [vmem:[%s117 + $0x1ac0] sm:$0xff]
        %v995 = vld [vmem:[%s117 + $0x1ac8] sm:$0xff]
        %v996 = vld [vmem:[%s117 + $0x1ad0] sm:$0xff]
        %v997 = vld [vmem:[%s117 + $0x1ad8] sm:$0xff]
        %v998 = vld [vmem:[%s117 + $0x1ae0] sm:$0xff]
        %v999 = vld [vmem:[%s117 + $0x1ae8] sm:$0xff]
        %v1000 = vld [vmem:[%s117 + $0x1af0] sm:$0xff]
        %v1001 = vld [vmem:[%s117 + $0x1af8] sm:$0xff]
        %v1002 = vld [vmem:[%s117 + $0x1b00] sm:$0xff]
        %v1003 = vld [vmem:[%s117 + $0x1b08] sm:$0xff]
        %v1004 = vld [vmem:[%s117 + $0x1b10] sm:$0xff]
        %v1005 = vld [vmem:[%s117 + $0x1b18] sm:$0xff]
        %v1006 = vld [vmem:[%s117 + $0x1b20] sm:$0xff]
        %v1007 = vld [vmem:[%s117 + $0x1b28] sm:$0xff]
        %v1008 = vld [vmem:[%s117 + $0x1b30] sm:$0xff]
        %v1009 = vld [vmem:[%s117 + $0x1b38] sm:$0xff]
        %v1010 = vld [vmem:[%s117 + $0x1b40] sm:$0xff]
        %v1011 = vld [vmem:[%s117 + $0x1b48] sm:$0xff]
        %v1012 = vld [vmem:[%s117 + $0x1b50] sm:$0xff]
        %v1013 = vld [vmem:[%s117 + $0x1b58] sm:$0xff]
        %v1014 = vld [vmem:[%s117 + $0x1b60] sm:$0xff]
        %v1015 = vld [vmem:[%s117 + $0x1b68] sm:$0xff]
        %v1016 = vld [vmem:[%s117 + $0x1b70] sm:$0xff]
        %v1017 = vld [vmem:[%s117 + $0x1b78] sm:$0xff]
        %v1018 = vld [vmem:[%s117 + $0x1b80] sm:$0xff]
        %v1019 = vld [vmem:[%s117 + $0x1b88] sm:$0xff]
        %v1020 = vld [vmem:[%s117 + $0x1b90] sm:$0xff]
        %v1021 = vld [vmem:[%s117 + $0x1b98] sm:$0xff]
        %v1022 = vld [vmem:[%s117 + $0x1ba0] sm:$0xff]
        %v1023 = vld [vmem:[%s117 + $0x1ba8] sm:$0xff]
        %v1024 = vld [vmem:[%s117 + $0x1bb0] sm:$0xff]
        %v1025 = vld [vmem:[%s117 + $0x1bb8] sm:$0xff]
        %v1026 = vld [vmem:[%s117 + $0x1bc0] sm:$0xff]
        %v1027 = vld [vmem:[%s117 + $0x1bc8] sm:$0xff]
        %v1028 = vld [vmem:[%s117 + $0x1bd0] sm:$0xff]
        %v1029 = vld [vmem:[%s117 + $0x1bd8] sm:$0xff]
        %v1030 = vld [vmem:[%s117 + $0x1be0] sm:$0xff]
        %v1031 = vld [vmem:[%s117 + $0x1be8] sm:$0xff]
        %v1032 = vld [vmem:[%s117 + $0x1bf0] sm:$0xff]
        %v1033 = vld [vmem:[%s117 + $0x1bf8] sm:$0xff]
        %v1034 = vld [vmem:[%s117 + $0x1c00] sm:$0xff]
        %v1035 = vld [vmem:[%s117 + $0x1c08] sm:$0xff]
        %v1036 = vld [vmem:[%s117 + $0x1c10] sm:$0xff]
        %v1037 = vld [vmem:[%s117 + $0x1c18] sm:$0xff]
        %v1038 = vld [vmem:[%s117 + $0x1c20] sm:$0xff]
        %v1039 = vld [vmem:[%s117 + $0x1c28] sm:$0xff]
        %v1040 = vld [vmem:[%s117 + $0x1c30] sm:$0xff]
        %v1041 = vld [vmem:[%s117 + $0x1c38] sm:$0xff]
        %v1042 = vld [vmem:[%s117 + $0x1c40] sm:$0xff]
        %v1043 = vld [vmem:[%s117 + $0x1c48] sm:$0xff]
        %v1044 = vld [vmem:[%s117 + $0x1c50] sm:$0xff]
        %v1045 = vld [vmem:[%s117 + $0x1c58] sm:$0xff]
        %v1046 = vld [vmem:[%s117 + $0x1c60] sm:$0xff]
        %v1047 = vld [vmem:[%s117 + $0x1c68] sm:$0xff]
        %v1048 = vld [vmem:[%s117 + $0x1c70] sm:$0xff]
        %v1049 = vld [vmem:[%s117 + $0x1c78] sm:$0xff]
        %v1050 = vld [vmem:[%s117 + $0x1c80] sm:$0xff]
        %v1051 = vld [vmem:[%s117 + $0x1c88] sm:$0xff]
        %v1052 = vld [vmem:[%s117 + $0x1c90] sm:$0xff]
        %v1053 = vld [vmem:[%s117 + $0x1c98] sm:$0xff]
        %v1054 = vld [vmem:[%s117 + $0x1ca0] sm:$0xff]
        %v1055 = vld [vmem:[%s117 + $0x1ca8] sm:$0xff]
        %v1056 = vld [vmem:[%s117 + $0x1cb0] sm:$0xff]
        %v1057 = vld [vmem:[%s117 + $0x1cb8] sm:$0xff]
        %v1058 = vld [vmem:[%s117 + $0x1cc0] sm:$0xff]
        %v1059 = vld [vmem:[%s117 + $0x1cc8] sm:$0xff]
        %v1060 = vld [vmem:[%s117 + $0x1cd0] sm:$0xff]
        %v1061 = vld [vmem:[%s117 + $0x1cd8] sm:$0xff]
        %v1062 = vld [vmem:[%s117 + $0x1ce0] sm:$0xff]
        %v1063 = vld [vmem:[%s117 + $0x1ce8] sm:$0xff]
        %v1064 = vld [vmem:[%s117 + $0x1cf0] sm:$0xff]
        %v1065 = vld [vmem:[%s117 + $0x1cf8] sm:$0xff]
        %v1066 = vld [vmem:[%s117 + $0x1d00] sm:$0xff]
        %v1067 = vld [vmem:[%s117 + $0x1d08] sm:$0xff]
        %v1068 = vld [vmem:[%s117 + $0x1d10] sm:$0xff]
        %v1069 = vld [vmem:[%s117 + $0x1d18] sm:$0xff]
        %v1070 = vld [vmem:[%s117 + $0x1d20] sm:$0xff]
        %v1071 = vld [vmem:[%s117 + $0x1d28] sm:$0xff]
        %v1072 = vld [vmem:[%s117 + $0x1d30] sm:$0xff]
        %v1073 = vld [vmem:[%s117 + $0x1d38] sm:$0xff]
        %v1074 = vld [vmem:[%s117 + $0x1d40] sm:$0xff]
        %v1075 = vld [vmem:[%s117 + $0x1d48] sm:$0xff]
        %v1076 = vld [vmem:[%s117 + $0x1d50] sm:$0xff]
        %v1077 = vld [vmem:[%s117 + $0x1d58] sm:$0xff]
        %v1078 = vld [vmem:[%s117 + $0x1d60] sm:$0xff]
        %v1079 = vld [vmem:[%s117 + $0x1d68] sm:$0xff]
        %v1080 = vld [vmem:[%s117 + $0x1d70] sm:$0xff]
        %v1081 = vld [vmem:[%s117 + $0x1d78] sm:$0xff]
        %v1082 = vld [vmem:[%s117 + $0x1d80] sm:$0xff]
        %v1083 = vld [vmem:[%s117 + $0x1d88] sm:$0xff]
        %v1084 = vld [vmem:[%s117 + $0x1d90] sm:$0xff]
        %v1085 = vld [vmem:[%s117 + $0x1d98] sm:$0xff]
        %v1086 = vld [vmem:[%s117 + $0x1da0] sm:$0xff]
        %v1087 = vld [vmem:[%s117 + $0x1da8] sm:$0xff]
        %v1088 = vld [vmem:[%s117 + $0x1db0] sm:$0xff]
        %v1089 = vld [vmem:[%s117 + $0x1db8] sm:$0xff]
        %v1090 = vld [vmem:[%s117 + $0x1dc0] sm:$0xff]
        %v1091 = vld [vmem:[%s117 + $0x1dc8] sm:$0xff]
        %v1092 = vld [vmem:[%s117 + $0x1dd0] sm:$0xff]
        %v1093 = vld [vmem:[%s117 + $0x1dd8] sm:$0xff]
        %v1094 = vld [vmem:[%s117 + $0x1de0] sm:$0xff]
        %v1095 = vld [vmem:[%s117 + $0x1de8] sm:$0xff]
        %v1096 = vld [vmem:[%s117 + $0x1df0] sm:$0xff]
        %v1097 = vld [vmem:[%s117 + $0x1df8] sm:$0xff]
        %v1098 = vld [vmem:[%s117 + $0x1e00] sm:$0xff]
        %v1099 = vld [vmem:[%s117 + $0x1e08] sm:$0xff]
        %v1100 = vld [vmem:[%s117 + $0x1e10] sm:$0xff]
        %v1101 = vld [vmem:[%s117 + $0x1e18] sm:$0xff]
        %v1102 = vld [vmem:[%s117 + $0x1e20] sm:$0xff]
        %v1103 = vld [vmem:[%s117 + $0x1e28] sm:$0xff]
        %v1104 = vld [vmem:[%s117 + $0x1e30] sm:$0xff]
        %v1105 = vld [vmem:[%s117 + $0x1e38] sm:$0xff]
        %v1106 = vld [vmem:[%s117 + $0x1e40] sm:$0xff]
        %v1107 = vld [vmem:[%s117 + $0x1e48] sm:$0xff]
        %v1108 = vld [vmem:[%s117 + $0x1e50] sm:$0xff]
        %v1109 = vld [vmem:[%s117 + $0x1e58] sm:$0xff]
        %v1110 = vld [vmem:[%s117 + $0x1e60] sm:$0xff]
        %v1111 = vld [vmem:[%s117 + $0x1e68] sm:$0xff]
        %v1112 = vld [vmem:[%s117 + $0x1e70] sm:$0xff]
        %v1113 = vld [vmem:[%s117 + $0x1e78] sm:$0xff]
        %v1114 = vld [vmem:[%s117 + $0x1e80] sm:$0xff]
        %v1115 = vld [vmem:[%s117 + $0x1e88] sm:$0xff]
        %v1116 = vld [vmem:[%s117 + $0x1e90] sm:$0xff]
        %v1117 = vld [vmem:[%s117 + $0x1e98] sm:$0xff]
        %v1118 = vld [vmem:[%s117 + $0x1ea0] sm:$0xff]
        %v1119 = vld [vmem:[%s117 + $0x1ea8] sm:$0xff]
        %v1120 = vld [vmem:[%s117 + $0x1eb0] sm:$0xff]
        %v1121 = vld [vmem:[%s117 + $0x1eb8] sm:$0xff]
        %v1122 = vld [vmem:[%s117 + $0x1ec0] sm:$0xff]
        %v1123 = vld [vmem:[%s117 + $0x1ec8] sm:$0xff]
        %v1124 = vld [vmem:[%s117 + $0x1ed0] sm:$0xff]
        %v1125 = vld [vmem:[%s117 + $0x1ed8] sm:$0xff]
        %v1126 = vld [vmem:[%s117 + $0x1ee0] sm:$0xff]
        %v1127 = vld [vmem:[%s117 + $0x1ee8] sm:$0xff]
        %v1128 = vld [vmem:[%s117 + $0x1ef0] sm:$0xff]
        %v1129 = vld [vmem:[%s117 + $0x1ef8] sm:$0xff]
        %v1130 = vld [vmem:[%s117 + $0x1f00] sm:$0xff]
        %v1131 = vld [vmem:[%s117 + $0x1f08] sm:$0xff]
        %v1132 = vld [vmem:[%s117 + $0x1f10] sm:$0xff]
        %v1133 = vld [vmem:[%s117 + $0x1f18] sm:$0xff]
        %v1134 = vld [vmem:[%s117 + $0x1f20] sm:$0xff]
        %v1135 = vld [vmem:[%s117 + $0x1f28] sm:$0xff]
        %v1136 = vld [vmem:[%s117 + $0x1f30] sm:$0xff]
        %v1137 = vld [vmem:[%s117 + $0x1f38] sm:$0xff]
        %v1138 = vld [vmem:[%s117 + $0x1f40] sm:$0xff]
        %v1139 = vld [vmem:[%s117 + $0x1f48] sm:$0xff]
        %v1140 = vld [vmem:[%s117 + $0x1f50] sm:$0xff]
        %v1141 = vld [vmem:[%s117 + $0x1f58] sm:$0xff]
        %v1142 = vld [vmem:[%s117 + $0x1f60] sm:$0xff]
        %v1143 = vld [vmem:[%s117 + $0x1f68] sm:$0xff]
        %v1144 = vld [vmem:[%s117 + $0x1f70] sm:$0xff]
        %v1145 = vld [vmem:[%s117 + $0x1f78] sm:$0xff]
        %v1146 = vld [vmem:[%s117 + $0x1f80] sm:$0xff]
        %v1147 = vld [vmem:[%s117 + $0x1f88] sm:$0xff]
        %v1148 = vld [vmem:[%s117 + $0x1f90] sm:$0xff]
        %v1149 = vld [vmem:[%s117 + $0x1f98] sm:$0xff]
        %v1150 = vld [vmem:[%s117 + $0x1fa0] sm:$0xff]
        %v1151 = vld [vmem:[%s117 + $0x1fa8] sm:$0xff]
        %v1152 = vld [vmem:[%s117 + $0x1fb0] sm:$0xff]
        %v1153 = vld [vmem:[%s117 + $0x1fb8] sm:$0xff]
        %v1154 = vld [vmem:[%s117 + $0x1fc0] sm:$0xff]
        %v1155 = vld [vmem:[%s117 + $0x1fc8] sm:$0xff]
        %v1156 = vld [vmem:[%s117 + $0x1fd0] sm:$0xff]
        %v1157 = vld [vmem:[%s117 + $0x1fd8] sm:$0xff]
        %v1158 = vld [vmem:[%s117 + $0x1fe0] sm:$0xff]
        %v1159 = vld [vmem:[%s117 + $0x1fe8] sm:$0xff]
        %v1160 = vld [vmem:[%s117 + $0x1ff0] sm:$0xff]
        %v1161 = vld [vmem:[%s117 + $0x1ff8] sm:$0xff]
        %v1162 = vmul.f32 %v138, 0.5
        %v1163 = vmul.f32 %v139, 0.5
        %v1164 = vmul.f32 %v140, 0.5
        %v1165 = vmul.f32 %v141, 0.5
        %v1166 = vmul.f32 %v142, 0.5
        %v1167 = vmul.f32 %v143, 0.5
        %v1168 = vmul.f32 %v144, 0.5
        %v1169 = vmul.f32 %v145, 0.5
        %v1170 = vmul.f32 %v146, 0.5
        %v1171 = vmul.f32 %v147, 0.5
        %v1172 = vmul.f32 %v148, 0.5
        %v1173 = vmul.f32 %v149, 0.5
        %v1174 = vmul.f32 %v150, 0.5
        %v1175 = vmul.f32 %v151, 0.5
        %v1176 = vmul.f32 %v152, 0.5
        %v1177 = vmul.f32 %v153, 0.5
        %v1178 = vmul.f32 %v154, 0.5
        %v1179 = vmul.f32 %v155, 0.5
        %v1180 = vmul.f32 %v156, 0.5
        %v1181 = vmul.f32 %v157, 0.5
        %v1182 = vmul.f32 %v158, 0.5
        %v1183 = vmul.f32 %v159, 0.5
        %v1184 = vmul.f32 %v160, 0.5
        %v1185 = vmul.f32 %v161, 0.5
        %v1186 = vmul.f32 %v162, 0.5
        %v1187 = vmul.f32 %v163, 0.5
        %v1188 = vmul.f32 %v164, 0.5
        %v1189 = vmul.f32 %v165, 0.5
        %v1190 = vmul.f32 %v166, 0.5
        %v1191 = vmul.f32 %v167, 0.5
        %v1192 = vmul.f32 %v168, 0.5
        %v1193 = vmul.f32 %v169, 0.5
        %v1194 = vmul.f32 %v170, 0.5
        %v1195 = vmul.f32 %v171, 0.5
        %v1196 = vmul.f32 %v172, 0.5
        %v1197 = vmul.f32 %v173, 0.5
        %v1198 = vmul.f32 %v174, 0.5
        %v1199 = vmul.f32 %v175, 0.5
        %v1200 = vmul.f32 %v176, 0.5
        %v1201 = vmul.f32 %v177, 0.5
        %v1202 = vmul.f32 %v178, 0.5
        %v1203 = vmul.f32 %v179, 0.5
        %v1204 = vmul.f32 %v180, 0.5
        %v1205 = vmul.f32 %v181, 0.5
        %v1206 = vmul.f32 %v182, 0.5
        %v1207 = vmul.f32 %v183, 0.5
        %v1208 = vmul.f32 %v184, 0.5
        %v1209 = vmul.f32 %v185, 0.5
        %v1210 = vmul.f32 %v186, 0.5
        %v1211 = vmul.f32 %v187, 0.5
        %v1212 = vmul.f32 %v188, 0.5
        %v1213 = vmul.f32 %v189, 0.5
        %v1214 = vmul.f32 %v190, 0.5
        %v1215 = vmul.f32 %v191, 0.5
        %v1216 = vmul.f32 %v192, 0.5
        %v1217 = vmul.f32 %v193, 0.5
        %v1218 = vmul.f32 %v194, 0.5
        %v1219 = vmul.f32 %v195, 0.5
        %v1220 = vmul.f32 %v196, 0.5
        %v1221 = vmul.f32 %v197, 0.5
        %v1222 = vmul.f32 %v198, 0.5
        %v1223 = vmul.f32 %v199, 0.5
        %v1224 = vmul.f32 %v200, 0.5
        %v1225 = vmul.f32 %v201, 0.5
        %v1226 = vmul.f32 %v202, 0.5
        %v1227 = vmul.f32 %v203, 0.5
        %v1228 = vmul.f32 %v204, 0.5
        %v1229 = vmul.f32 %v205, 0.5
        %v1230 = vmul.f32 %v206, 0.5
        %v1231 = vmul.f32 %v207, 0.5
        %v1232 = vmul.f32 %v208, 0.5
        %v1233 = vmul.f32 %v209, 0.5
        %v1234 = vmul.f32 %v210, 0.5
        %v1235 = vmul.f32 %v211, 0.5
        %v1236 = vmul.f32 %v212, 0.5
        %v1237 = vmul.f32 %v213, 0.5
        %v1238 = vmul.f32 %v214, 0.5
        %v1239 = vmul.f32 %v215, 0.5
        %v1240 = vmul.f32 %v216, 0.5
        %v1241 = vmul.f32 %v217, 0.5
        %v1242 = vmul.f32 %v218, 0.5
        %v1243 = vmul.f32 %v219, 0.5
        %v1244 = vmul.f32 %v220, 0.5
        %v1245 = vmul.f32 %v221, 0.5
        %v1246 = vmul.f32 %v222, 0.5
        %v1247 = vmul.f32 %v223, 0.5
        %v1248 = vmul.f32 %v224, 0.5
        %v1249 = vmul.f32 %v225, 0.5
        %v1250 = vmul.f32 %v226, 0.5
        %v1251 = vmul.f32 %v227, 0.5
        %v1252 = vmul.f32 %v228, 0.5
        %v1253 = vmul.f32 %v229, 0.5
        %v1254 = vmul.f32 %v230, 0.5
        %v1255 = vmul.f32 %v231, 0.5
        %v1256 = vmul.f32 %v232, 0.5
        %v1257 = vmul.f32 %v233, 0.5
        %v1258 = vmul.f32 %v234, 0.5
        %v1259 = vmul.f32 %v235, 0.5
        %v1260 = vmul.f32 %v236, 0.5
        %v1261 = vmul.f32 %v237, 0.5
        %v1262 = vmul.f32 %v238, 0.5
        %v1263 = vmul.f32 %v239, 0.5
        %v1264 = vmul.f32 %v240, 0.5
        %v1265 = vmul.f32 %v241, 0.5
        %v1266 = vmul.f32 %v242, 0.5
        %v1267 = vmul.f32 %v243, 0.5
        %v1268 = vmul.f32 %v244, 0.5
        %v1269 = vmul.f32 %v245, 0.5
        %v1270 = vmul.f32 %v246, 0.5
        %v1271 = vmul.f32 %v247, 0.5
        %v1272 = vmul.f32 %v248, 0.5
        %v1273 = vmul.f32 %v249, 0.5
        %v1274 = vmul.f32 %v250, 0.5
        %v1275 = vmul.f32 %v251, 0.5
        %v1276 = vmul.f32 %v252, 0.5
        %v1277 = vmul.f32 %v253, 0.5
        %v1278 = vmul.f32 %v254, 0.5
        %v1279 = vmul.f32 %v255, 0.5
        %v1280 = vmul.f32 %v256, 0.5
        %v1281 = vmul.f32 %v257, 0.5
        %v1282 = vmul.f32 %v258, 0.5
        %v1283 = vmul.f32 %v259, 0.5
        %v1284 = vmul.f32 %v260, 0.5
        %v1285 = vmul.f32 %v261, 0.5
        %v1286 = vmul.f32 %v262, 0.5
        %v1287 = vmul.f32 %v263, 0.5
        %v1288 = vmul.f32 %v264, 0.5
        %v1289 = vmul.f32 %v265, 0.5
        %v1290 = vmul.f32 %v266, 0.5
        %v1291 = vmul.f32 %v267, 0.5
        %v1292 = vmul.f32 %v268, 0.5
        %v1293 = vmul.f32 %v269, 0.5
        %v1294 = vmul.f32 %v270, 0.5
        %v1295 = vmul.f32 %v271, 0.5
        %v1296 = vmul.f32 %v272, 0.5
        %v1297 = vmul.f32 %v273, 0.5
        %v1298 = vmul.f32 %v274, 0.5
        %v1299 = vmul.f32 %v275, 0.5
        %v1300 = vmul.f32 %v276, 0.5
        %v1301 = vmul.f32 %v277, 0.5
        %v1302 = vmul.f32 %v278, 0.5
        %v1303 = vmul.f32 %v279, 0.5
        %v1304 = vmul.f32 %v280, 0.5
        %v1305 = vmul.f32 %v281, 0.5
        %v1306 = vmul.f32 %v282, 0.5
        %v1307 = vmul.f32 %v283, 0.5
        %v1308 = vmul.f32 %v284, 0.5
        %v1309 = vmul.f32 %v285, 0.5
        %v1310 = vmul.f32 %v286, 0.5
        %v1311 = vmul.f32 %v287, 0.5
        %v1312 = vmul.f32 %v288, 0.5
        %v1313 = vmul.f32 %v289, 0.5
        %v1314 = vmul.f32 %v290, 0.5
        %v1315 = vmul.f32 %v291, 0.5
        %v1316 = vmul.f32 %v292, 0.5
        %v1317 = vmul.f32 %v293, 0.5
        %v1318 = vmul.f32 %v294, 0.5
        %v1319 = vmul.f32 %v295, 0.5
        %v1320 = vmul.f32 %v296, 0.5
        %v1321 = vmul.f32 %v297, 0.5
        %v1322 = vmul.f32 %v298, 0.5
        %v1323 = vmul.f32 %v299, 0.5
        %v1324 = vmul.f32 %v300, 0.5
        %v1325 = vmul.f32 %v301, 0.5
        %v1326 = vmul.f32 %v302, 0.5
        %v1327 = vmul.f32 %v303, 0.5
        %v1328 = vmul.f32 %v304, 0.5
        %v1329 = vmul.f32 %v305, 0.5
        %v1330 = vmul.f32 %v306, 0.5
        %v1331 = vmul.f32 %v307, 0.5
        %v1332 = vmul.f32 %v308, 0.5
        %v1333 = vmul.f32 %v309, 0.5
        %v1334 = vmul.f32 %v310, 0.5
        %v1335 = vmul.f32 %v311, 0.5
        %v1336 = vmul.f32 %v312, 0.5
        %v1337 = vmul.f32 %v313, 0.5
        %v1338 = vmul.f32 %v314, 0.5
        %v1339 = vmul.f32 %v315, 0.5
        %v1340 = vmul.f32 %v316, 0.5
        %v1341 = vmul.f32 %v317, 0.5
        %v1342 = vmul.f32 %v318, 0.5
        %v1343 = vmul.f32 %v319, 0.5
        %v1344 = vmul.f32 %v320, 0.5
        %v1345 = vmul.f32 %v321, 0.5
        %v1346 = vmul.f32 %v322, 0.5
        %v1347 = vmul.f32 %v323, 0.5
        %v1348 = vmul.f32 %v324, 0.5
        %v1349 = vmul.f32 %v325, 0.5
        %v1350 = vmul.f32 %v326, 0.5
        %v1351 = vmul.f32 %v327, 0.5
        %v1352 = vmul.f32 %v328, 0.5
        %v1353 = vmul.f32 %v329, 0.5
        %v1354 = vmul.f32 %v330, 0.5
        %v1355 = vmul.f32 %v331, 0.5
        %v1356 = vmul.f32 %v332, 0.5
        %v1357 = vmul.f32 %v333, 0.5
        %v1358 = vmul.f32 %v334, 0.5
        %v1359 = vmul.f32 %v335, 0.5
        %v1360 = vmul.f32 %v336, 0.5
        %v1361 = vmul.f32 %v337, 0.5
        %v1362 = vmul.f32 %v338, 0.5
        %v1363 = vmul.f32 %v339, 0.5
        %v1364 = vmul.f32 %v340, 0.5
        %v1365 = vmul.f32 %v341, 0.5
        %v1366 = vmul.f32 %v342, 0.5
        %v1367 = vmul.f32 %v343, 0.5
        %v1368 = vmul.f32 %v344, 0.5
        %v1369 = vmul.f32 %v345, 0.5
        %v1370 = vmul.f32 %v346, 0.5
        %v1371 = vmul.f32 %v347, 0.5
        %v1372 = vmul.f32 %v348, 0.5
        %v1373 = vmul.f32 %v349, 0.5
        %v1374 = vmul.f32 %v350, 0.5
        %v1375 = vmul.f32 %v351, 0.5
        %v1376 = vmul.f32 %v352, 0.5
        %v1377 = vmul.f32 %v353, 0.5
        %v1378 = vmul.f32 %v354, 0.5
        %v1379 = vmul.f32 %v355, 0.5
        %v1380 = vmul.f32 %v356, 0.5
        %v1381 = vmul.f32 %v357, 0.5
        %v1382 = vmul.f32 %v358, 0.5
        %v1383 = vmul.f32 %v359, 0.5
        %v1384 = vmul.f32 %v360, 0.5
        %v1385 = vmul.f32 %v361, 0.5
        %v1386 = vmul.f32 %v362, 0.5
        %v1387 = vmul.f32 %v363, 0.5
        %v1388 = vmul.f32 %v364, 0.5
        %v1389 = vmul.f32 %v365, 0.5
        %v1390 = vmul.f32 %v366, 0.5
        %v1391 = vmul.f32 %v367, 0.5
        %v1392 = vmul.f32 %v368, 0.5
        %v1393 = vmul.f32 %v369, 0.5
        %v1394 = vmul.f32 %v370, 0.5
        %v1395 = vmul.f32 %v371, 0.5
        %v1396 = vmul.f32 %v372, 0.5
        %v1397 = vmul.f32 %v373, 0.5
        %v1398 = vmul.f32 %v374, 0.5
        %v1399 = vmul.f32 %v375, 0.5
        %v1400 = vmul.f32 %v376, 0.5
        %v1401 = vmul.f32 %v377, 0.5
        %v1402 = vmul.f32 %v378, 0.5
        %v1403 = vmul.f32 %v379, 0.5
        %v1404 = vmul.f32 %v380, 0.5
        %v1405 = vmul.f32 %v381, 0.5
        %v1406 = vmul.f32 %v382, 0.5
        %v1407 = vmul.f32 %v383, 0.5
        %v1408 = vmul.f32 %v384, 0.5
        %v1409 = vmul.f32 %v385, 0.5
        %v1410 = vmul.f32 %v386, 0.5
        %v1411 = vmul.f32 %v387, 0.5
        %v1412 = vmul.f32 %v388, 0.5
        %v1413 = vmul.f32 %v389, 0.5
        %v1414 = vmul.f32 %v390, 0.5
        %v1415 = vmul.f32 %v391, 0.5
        %v1416 = vmul.f32 %v392, 0.5
        %v1417 = vmul.f32 %v393, 0.5
        %v1418 = vmul.f32 %v394, 0.5
        %v1419 = vmul.f32 %v395, 0.5
        %v1420 = vmul.f32 %v396, 0.5
        %v1421 = vmul.f32 %v397, 0.5
        %v1422 = vmul.f32 %v398, 0.5
        %v1423 = vmul.f32 %v399, 0.5
        %v1424 = vmul.f32 %v400, 0.5
        %v1425 = vmul.f32 %v401, 0.5
        %v1426 = vmul.f32 %v402, 0.5
        %v1427 = vmul.f32 %v403, 0.5
        %v1428 = vmul.f32 %v404, 0.5
        %v1429 = vmul.f32 %v405, 0.5
        %v1430 = vmul.f32 %v406, 0.5
        %v1431 = vmul.f32 %v407, 0.5
        %v1432 = vmul.f32 %v408, 0.5
        %v1433 = vmul.f32 %v409, 0.5
        %v1434 = vmul.f32 %v410, 0.5
        %v1435 = vmul.f32 %v411, 0.5
        %v1436 = vmul.f32 %v412, 0.5
        %v1437 = vmul.f32 %v413, 0.5
        %v1438 = vmul.f32 %v414, 0.5
        %v1439 = vmul.f32 %v415, 0.5
        %v1440 = vmul.f32 %v416, 0.5
        %v1441 = vmul.f32 %v417, 0.5
        %v1442 = vmul.f32 %v418, 0.5
        %v1443 = vmul.f32 %v419, 0.5
        %v1444 = vmul.f32 %v420, 0.5
        %v1445 = vmul.f32 %v421, 0.5
        %v1446 = vmul.f32 %v422, 0.5
        %v1447 = vmul.f32 %v423, 0.5
        %v1448 = vmul.f32 %v424, 0.5
        %v1449 = vmul.f32 %v425, 0.5
        %v1450 = vmul.f32 %v426, 0.5
        %v1451 = vmul.f32 %v427, 0.5
        %v1452 = vmul.f32 %v428, 0.5
        %v1453 = vmul.f32 %v429, 0.5
        %v1454 = vmul.f32 %v430, 0.5
        %v1455 = vmul.f32 %v431, 0.5
        %v1456 = vmul.f32 %v432, 0.5
        %v1457 = vmul.f32 %v433, 0.5
        %v1458 = vmul.f32 %v434, 0.5
        %v1459 = vmul.f32 %v435, 0.5
        %v1460 = vmul.f32 %v436, 0.5
        %v1461 = vmul.f32 %v437, 0.5
        %v1462 = vmul.f32 %v438, 0.5
        %v1463 = vmul.f32 %v439, 0.5
        %v1464 = vmul.f32 %v440, 0.5
        %v1465 = vmul.f32 %v441, 0.5
        %v1466 = vmul.f32 %v442, 0.5
        %v1467 = vmul.f32 %v443, 0.5
        %v1468 = vmul.f32 %v444, 0.5
        %v1469 = vmul.f32 %v445, 0.5
        %v1470 = vmul.f32 %v446, 0.5
        %v1471 = vmul.f32 %v447, 0.5
        %v1472 = vmul.f32 %v448, 0.5
        %v1473 = vmul.f32 %v449, 0.5
        %v1474 = vmul.f32 %v450, 0.5
        %v1475 = vmul.f32 %v451, 0.5
        %v1476 = vmul.f32 %v452, 0.5
        %v1477 = vmul.f32 %v453, 0.5
        %v1478 = vmul.f32 %v454, 0.5
        %v1479 = vmul.f32 %v455, 0.5
        %v1480 = vmul.f32 %v456, 0.5
        %v1481 = vmul.f32 %v457, 0.5
        %v1482 = vmul.f32 %v458, 0.5
        %v1483 = vmul.f32 %v459, 0.5
        %v1484 = vmul.f32 %v460, 0.5
        %v1485 = vmul.f32 %v461, 0.5
        %v1486 = vmul.f32 %v462, 0.5
        %v1487 = vmul.f32 %v463, 0.5
        %v1488 = vmul.f32 %v464, 0.5
        %v1489 = vmul.f32 %v465, 0.5
        %v1490 = vmul.f32 %v466, 0.5
        %v1491 = vmul.f32 %v467, 0.5
        %v1492 = vmul.f32 %v468, 0.5
        %v1493 = vmul.f32 %v469, 0.5
        %v1494 = vmul.f32 %v470, 0.5
        %v1495 = vmul.f32 %v471, 0.5
        %v1496 = vmul.f32 %v472, 0.5
        %v1497 = vmul.f32 %v473, 0.5
        %v1498 = vmul.f32 %v474, 0.5
        %v1499 = vmul.f32 %v475, 0.5
        %v1500 = vmul.f32 %v476, 0.5
        %v1501 = vmul.f32 %v477, 0.5
        %v1502 = vmul.f32 %v478, 0.5
        %v1503 = vmul.f32 %v479, 0.5
        %v1504 = vmul.f32 %v480, 0.5
        %v1505 = vmul.f32 %v481, 0.5
        %v1506 = vmul.f32 %v482, 0.5
        %v1507 = vmul.f32 %v483, 0.5
        %v1508 = vmul.f32 %v484, 0.5
        %v1509 = vmul.f32 %v485, 0.5
        %v1510 = vmul.f32 %v486, 0.5
        %v1511 = vmul.f32 %v487, 0.5
        %v1512 = vmul.f32 %v488, 0.5
        %v1513 = vmul.f32 %v489, 0.5
        %v1514 = vmul.f32 %v490, 0.5
        %v1515 = vmul.f32 %v491, 0.5
        %v1516 = vmul.f32 %v492, 0.5
        %v1517 = vmul.f32 %v493, 0.5
        %v1518 = vmul.f32 %v494, 0.5
        %v1519 = vmul.f32 %v495, 0.5
        %v1520 = vmul.f32 %v496, 0.5
        %v1521 = vmul.f32 %v497, 0.5
        %v1522 = vmul.f32 %v498, 0.5
        %v1523 = vmul.f32 %v499, 0.5
        %v1524 = vmul.f32 %v500, 0.5
        %v1525 = vmul.f32 %v501, 0.5
        %v1526 = vmul.f32 %v502, 0.5
        %v1527 = vmul.f32 %v503, 0.5
        %v1528 = vmul.f32 %v504, 0.5
        %v1529 = vmul.f32 %v505, 0.5
        %v1530 = vmul.f32 %v506, 0.5
        %v1531 = vmul.f32 %v507, 0.5
        %v1532 = vmul.f32 %v508, 0.5
        %v1533 = vmul.f32 %v509, 0.5
        %v1534 = vmul.f32 %v510, 0.5
        %v1535 = vmul.f32 %v511, 0.5
        %v1536 = vmul.f32 %v512, 0.5
        %v1537 = vmul.f32 %v513, 0.5
        %v1538 = vmul.f32 %v514, 0.5
        %v1539 = vmul.f32 %v515, 0.5
        %v1540 = vmul.f32 %v516, 0.5
        %v1541 = vmul.f32 %v517, 0.5
        %v1542 = vmul.f32 %v518, 0.5
        %v1543 = vmul.f32 %v519, 0.5
        %v1544 = vmul.f32 %v520, 0.5
        %v1545 = vmul.f32 %v521, 0.5
        %v1546 = vmul.f32 %v522, 0.5
        %v1547 = vmul.f32 %v523, 0.5
        %v1548 = vmul.f32 %v524, 0.5
        %v1549 = vmul.f32 %v525, 0.5
        %v1550 = vmul.f32 %v526, 0.5
        %v1551 = vmul.f32 %v527, 0.5
        %v1552 = vmul.f32 %v528, 0.5
        %v1553 = vmul.f32 %v529, 0.5
        %v1554 = vmul.f32 %v530, 0.5
        %v1555 = vmul.f32 %v531, 0.5
        %v1556 = vmul.f32 %v532, 0.5
        %v1557 = vmul.f32 %v533, 0.5
        %v1558 = vmul.f32 %v534, 0.5
        %v1559 = vmul.f32 %v535, 0.5
        %v1560 = vmul.f32 %v536, 0.5
        %v1561 = vmul.f32 %v537, 0.5
        %v1562 = vmul.f32 %v538, 0.5
        %v1563 = vmul.f32 %v539, 0.5
        %v1564 = vmul.f32 %v540, 0.5
        %v1565 = vmul.f32 %v541, 0.5
        %v1566 = vmul.f32 %v542, 0.5
        %v1567 = vmul.f32 %v543, 0.5
        %v1568 = vmul.f32 %v544, 0.5
        %v1569 = vmul.f32 %v545, 0.5
        %v1570 = vmul.f32 %v546, 0.5
        %v1571 = vmul.f32 %v547, 0.5
        %v1572 = vmul.f32 %v548, 0.5
        %v1573 = vmul.f32 %v549, 0.5
        %v1574 = vmul.f32 %v550, 0.5
        %v1575 = vmul.f32 %v551, 0.5
        %v1576 = vmul.f32 %v552, 0.5
        %v1577 = vmul.f32 %v553, 0.5
        %v1578 = vmul.f32 %v554, 0.5
        %v1579 = vmul.f32 %v555, 0.5
        %v1580 = vmul.f32 %v556, 0.5
        %v1581 = vmul.f32 %v557, 0.5
        %v1582 = vmul.f32 %v558, 0.5
        %v1583 = vmul.f32 %v559, 0.5
        %v1584 = vmul.f32 %v560, 0.5
        %v1585 = vmul.f32 %v561, 0.5
        %v1586 = vmul.f32 %v562, 0.5
        %v1587 = vmul.f32 %v563, 0.5
        %v1588 = vmul.f32 %v564, 0.5
        %v1589 = vmul.f32 %v565, 0.5
        %v1590 = vmul.f32 %v566, 0.5
        %v1591 = vmul.f32 %v567, 0.5
        %v1592 = vmul.f32 %v568, 0.5
        %v1593 = vmul.f32 %v569, 0.5
        %v1594 = vmul.f32 %v570, 0.5
        %v1595 = vmul.f32 %v571, 0.5
        %v1596 = vmul.f32 %v572, 0.5
        %v1597 = vmul.f32 %v573, 0.5
        %v1598 = vmul.f32 %v574, 0.5
        %v1599 = vmul.f32 %v575, 0.5
        %v1600 = vmul.f32 %v576, 0.5
        %v1601 = vmul.f32 %v577, 0.5
        %v1602 = vmul.f32 %v578, 0.5
        %v1603 = vmul.f32 %v579, 0.5
        %v1604 = vmul.f32 %v580, 0.5
        %v1605 = vmul.f32 %v581, 0.5
        %v1606 = vmul.f32 %v582, 0.5
        %v1607 = vmul.f32 %v583, 0.5
        %v1608 = vmul.f32 %v584, 0.5
        %v1609 = vmul.f32 %v585, 0.5
        %v1610 = vmul.f32 %v586, 0.5
        %v1611 = vmul.f32 %v587, 0.5
        %v1612 = vmul.f32 %v588, 0.5
        %v1613 = vmul.f32 %v589, 0.5
        %v1614 = vmul.f32 %v590, 0.5
        %v1615 = vmul.f32 %v591, 0.5
        %v1616 = vmul.f32 %v592, 0.5
        %v1617 = vmul.f32 %v593, 0.5
        %v1618 = vmul.f32 %v594, 0.5
        %v1619 = vmul.f32 %v595, 0.5
        %v1620 = vmul.f32 %v596, 0.5
        %v1621 = vmul.f32 %v597, 0.5
        %v1622 = vmul.f32 %v598, 0.5
        %v1623 = vmul.f32 %v599, 0.5
        %v1624 = vmul.f32 %v600, 0.5
        %v1625 = vmul.f32 %v601, 0.5
        %v1626 = vmul.f32 %v602, 0.5
        %v1627 = vmul.f32 %v603, 0.5
        %v1628 = vmul.f32 %v604, 0.5
        %v1629 = vmul.f32 %v605, 0.5
        %v1630 = vmul.f32 %v606, 0.5
        %v1631 = vmul.f32 %v607, 0.5
        %v1632 = vmul.f32 %v608, 0.5
        %v1633 = vmul.f32 %v609, 0.5
        %v1634 = vmul.f32 %v610, 0.5
        %v1635 = vmul.f32 %v611, 0.5
        %v1636 = vmul.f32 %v612, 0.5
        %v1637 = vmul.f32 %v613, 0.5
        %v1638 = vmul.f32 %v614, 0.5
        %v1639 = vmul.f32 %v615, 0.5
        %v1640 = vmul.f32 %v616, 0.5
        %v1641 = vmul.f32 %v617, 0.5
        %v1642 = vmul.f32 %v618, 0.5
        %v1643 = vmul.f32 %v619, 0.5
        %v1644 = vmul.f32 %v620, 0.5
        %v1645 = vmul.f32 %v621, 0.5
        %v1646 = vmul.f32 %v622, 0.5
        %v1647 = vmul.f32 %v623, 0.5
        %v1648 = vmul.f32 %v624, 0.5
        %v1649 = vmul.f32 %v625, 0.5
        %v1650 = vmul.f32 %v626, 0.5
        %v1651 = vmul.f32 %v627, 0.5
        %v1652 = vmul.f32 %v628, 0.5
        %v1653 = vmul.f32 %v629, 0.5
        %v1654 = vmul.f32 %v630, 0.5
        %v1655 = vmul.f32 %v631, 0.5
        %v1656 = vmul.f32 %v632, 0.5
        %v1657 = vmul.f32 %v633, 0.5
        %v1658 = vmul.f32 %v634, 0.5
        %v1659 = vmul.f32 %v635, 0.5
        %v1660 = vmul.f32 %v636, 0.5
        %v1661 = vmul.f32 %v637, 0.5
        %v1662 = vmul.f32 %v638, 0.5
        %v1663 = vmul.f32 %v639, 0.5
        %v1664 = vmul.f32 %v640, 0.5
        %v1665 = vmul.f32 %v641, 0.5
        %v1666 = vmul.f32 %v642, 0.5
        %v1667 = vmul.f32 %v643, 0.5
        %v1668 = vmul.f32 %v644, 0.5
        %v1669 = vmul.f32 %v645, 0.5
        %v1670 = vmul.f32 %v646, 0.5
        %v1671 = vmul.f32 %v647, 0.5
        %v1672 = vmul.f32 %v648, 0.5
        %v1673 = vmul.f32 %v649, 0.5
        %v1674 = vmul.f32 %v650, 0.5
        %v1675 = vmul.f32 %v651, 0.5
        %v1676 = vmul.f32 %v652, 0.5
        %v1677 = vmul.f32 %v653, 0.5
        %v1678 = vmul.f32 %v654, 0.5
        %v1679 = vmul.f32 %v655, 0.5
        %v1680 = vmul.f32 %v656, 0.5
        %v1681 = vmul.f32 %v657, 0.5
        %v1682 = vmul.f32 %v658, 0.5
        %v1683 = vmul.f32 %v659, 0.5
        %v1684 = vmul.f32 %v660, 0.5
        %v1685 = vmul.f32 %v661, 0.5
        %v1686 = vmul.f32 %v662, 0.5
        %v1687 = vmul.f32 %v663, 0.5
        %v1688 = vmul.f32 %v664, 0.5
        %v1689 = vmul.f32 %v665, 0.5
        %v1690 = vmul.f32 %v666, 0.5
        %v1691 = vmul.f32 %v667, 0.5
        %v1692 = vmul.f32 %v668, 0.5
        %v1693 = vmul.f32 %v669, 0.5
        %v1694 = vmul.f32 %v670, 0.5
        %v1695 = vmul.f32 %v671, 0.5
        %v1696 = vmul.f32 %v672, 0.5
        %v1697 = vmul.f32 %v673, 0.5
        %v1698 = vmul.f32 %v674, 0.5
        %v1699 = vmul.f32 %v675, 0.5
        %v1700 = vmul.f32 %v676, 0.5
        %v1701 = vmul.f32 %v677, 0.5
        %v1702 = vmul.f32 %v678, 0.5
        %v1703 = vmul.f32 %v679, 0.5
        %v1704 = vmul.f32 %v680, 0.5
        %v1705 = vmul.f32 %v681, 0.5
        %v1706 = vmul.f32 %v682, 0.5
        %v1707 = vmul.f32 %v683, 0.5
        %v1708 = vmul.f32 %v684, 0.5
        %v1709 = vmul.f32 %v685, 0.5
        %v1710 = vmul.f32 %v686, 0.5
        %v1711 = vmul.f32 %v687, 0.5
        %v1712 = vmul.f32 %v688, 0.5
        %v1713 = vmul.f32 %v689, 0.5
        %v1714 = vmul.f32 %v690, 0.5
        %v1715 = vmul.f32 %v691, 0.5
        %v1716 = vmul.f32 %v692, 0.5
        %v1717 = vmul.f32 %v693, 0.5
        %v1718 = vmul.f32 %v694, 0.5
        %v1719 = vmul.f32 %v695, 0.5
        %v1720 = vmul.f32 %v696, 0.5
        %v1721 = vmul.f32 %v697, 0.5
        %v1722 = vmul.f32 %v698, 0.5
        %v1723 = vmul.f32 %v699, 0.5
        %v1724 = vmul.f32 %v700, 0.5
        %v1725 = vmul.f32 %v701, 0.5
        %v1726 = vmul.f32 %v702, 0.5
        %v1727 = vmul.f32 %v703, 0.5
        %v1728 = vmul.f32 %v704, 0.5
        %v1729 = vmul.f32 %v705, 0.5
        %v1730 = vmul.f32 %v706, 0.5
        %v1731 = vmul.f32 %v707, 0.5
        %v1732 = vmul.f32 %v708, 0.5
        %v1733 = vmul.f32 %v709, 0.5
        %v1734 = vmul.f32 %v710, 0.5
        %v1735 = vmul.f32 %v711, 0.5
        %v1736 = vmul.f32 %v712, 0.5
        %v1737 = vmul.f32 %v713, 0.5
        %v1738 = vmul.f32 %v714, 0.5
        %v1739 = vmul.f32 %v715, 0.5
        %v1740 = vmul.f32 %v716, 0.5
        %v1741 = vmul.f32 %v717, 0.5
        %v1742 = vmul.f32 %v718, 0.5
        %v1743 = vmul.f32 %v719, 0.5
        %v1744 = vmul.f32 %v720, 0.5
        %v1745 = vmul.f32 %v721, 0.5
        %v1746 = vmul.f32 %v722, 0.5
        %v1747 = vmul.f32 %v723, 0.5
        %v1748 = vmul.f32 %v724, 0.5
        %v1749 = vmul.f32 %v725, 0.5
        %v1750 = vmul.f32 %v726, 0.5
        %v1751 = vmul.f32 %v727, 0.5
        %v1752 = vmul.f32 %v728, 0.5
        %v1753 = vmul.f32 %v729, 0.5
        %v1754 = vmul.f32 %v730, 0.5
        %v1755 = vmul.f32 %v731, 0.5
        %v1756 = vmul.f32 %v732, 0.5
        %v1757 = vmul.f32 %v733, 0.5
        %v1758 = vmul.f32 %v734, 0.5
        %v1759 = vmul.f32 %v735, 0.5
        %v1760 = vmul.f32 %v736, 0.5
        %v1761 = vmul.f32 %v737, 0.5
        %v1762 = vmul.f32 %v738, 0.5
        %v1763 = vmul.f32 %v739, 0.5
        %v1764 = vmul.f32 %v740, 0.5
        %v1765 = vmul.f32 %v741, 0.5
        %v1766 = vmul.f32 %v742, 0.5
        %v1767 = vmul.f32 %v743, 0.5
        %v1768 = vmul.f32 %v744, 0.5
        %v1769 = vmul.f32 %v745, 0.5
        %v1770 = vmul.f32 %v746, 0.5
        %v1771 = vmul.f32 %v747, 0.5
        %v1772 = vmul.f32 %v748, 0.5
        %v1773 = vmul.f32 %v749, 0.5
        %v1774 = vmul.f32 %v750, 0.5
        %v1775 = vmul.f32 %v751, 0.5
        %v1776 = vmul.f32 %v752, 0.5
        %v1777 = vmul.f32 %v753, 0.5
        %v1778 = vmul.f32 %v754, 0.5
        %v1779 = vmul.f32 %v755, 0.5
        %v1780 = vmul.f32 %v756, 0.5
        %v1781 = vmul.f32 %v757, 0.5
        %v1782 = vmul.f32 %v758, 0.5
        %v1783 = vmul.f32 %v759, 0.5
        %v1784 = vmul.f32 %v760, 0.5
        %v1785 = vmul.f32 %v761, 0.5
        %v1786 = vmul.f32 %v762, 0.5
        %v1787 = vmul.f32 %v763, 0.5
        %v1788 = vmul.f32 %v764, 0.5
        %v1789 = vmul.f32 %v765, 0.5
        %v1790 = vmul.f32 %v766, 0.5
        %v1791 = vmul.f32 %v767, 0.5
        %v1792 = vmul.f32 %v768, 0.5
        %v1793 = vmul.f32 %v769, 0.5
        %v1794 = vmul.f32 %v770, 0.5
        %v1795 = vmul.f32 %v771, 0.5
        %v1796 = vmul.f32 %v772, 0.5
        %v1797 = vmul.f32 %v773, 0.5
        %v1798 = vmul.f32 %v774, 0.5
        %v1799 = vmul.f32 %v775, 0.5
        %v1800 = vmul.f32 %v776, 0.5
        %v1801 = vmul.f32 %v777, 0.5
        %v1802 = vmul.f32 %v778, 0.5
        %v1803 = vmul.f32 %v779, 0.5
        %v1804 = vmul.f32 %v780, 0.5
        %v1805 = vmul.f32 %v781, 0.5
        %v1806 = vmul.f32 %v782, 0.5
        %v1807 = vmul.f32 %v783, 0.5
        %v1808 = vmul.f32 %v784, 0.5
        %v1809 = vmul.f32 %v785, 0.5
        %v1810 = vmul.f32 %v786, 0.5
        %v1811 = vmul.f32 %v787, 0.5
        %v1812 = vmul.f32 %v788, 0.5
        %v1813 = vmul.f32 %v789, 0.5
        %v1814 = vmul.f32 %v790, 0.5
        %v1815 = vmul.f32 %v791, 0.5
        %v1816 = vmul.f32 %v792, 0.5
        %v1817 = vmul.f32 %v793, 0.5
        %v1818 = vmul.f32 %v794, 0.5
        %v1819 = vmul.f32 %v795, 0.5
        %v1820 = vmul.f32 %v796, 0.5
        %v1821 = vmul.f32 %v797, 0.5
        %v1822 = vmul.f32 %v798, 0.5
        %v1823 = vmul.f32 %v799, 0.5
        %v1824 = vmul.f32 %v800, 0.5
        %v1825 = vmul.f32 %v801, 0.5
        %v1826 = vmul.f32 %v802, 0.5
        %v1827 = vmul.f32 %v803, 0.5
        %v1828 = vmul.f32 %v804, 0.5
        %v1829 = vmul.f32 %v805, 0.5
        %v1830 = vmul.f32 %v806, 0.5
        %v1831 = vmul.f32 %v807, 0.5
        %v1832 = vmul.f32 %v808, 0.5
        %v1833 = vmul.f32 %v809, 0.5
        %v1834 = vmul.f32 %v810, 0.5
        %v1835 = vmul.f32 %v811, 0.5
        %v1836 = vmul.f32 %v812, 0.5
        %v1837 = vmul.f32 %v813, 0.5
        %v1838 = vmul.f32 %v814, 0.5
        %v1839 = vmul.f32 %v815, 0.5
        %v1840 = vmul.f32 %v816, 0.5
        %v1841 = vmul.f32 %v817, 0.5
        %v1842 = vmul.f32 %v818, 0.5
        %v1843 = vmul.f32 %v819, 0.5
        %v1844 = vmul.f32 %v820, 0.5
        %v1845 = vmul.f32 %v821, 0.5
        %v1846 = vmul.f32 %v822, 0.5
        %v1847 = vmul.f32 %v823, 0.5
        %v1848 = vmul.f32 %v824, 0.5
        %v1849 = vmul.f32 %v825, 0.5
        %v1850 = vmul.f32 %v826, 0.5
        %v1851 = vmul.f32 %v827, 0.5
        %v1852 = vmul.f32 %v828, 0.5
        %v1853 = vmul.f32 %v829, 0.5
        %v1854 = vmul.f32 %v830, 0.5
        %v1855 = vmul.f32 %v831, 0.5
        %v1856 = vmul.f32 %v832, 0.5
        %v1857 = vmul.f32 %v833, 0.5
        %v1858 = vmul.f32 %v834, 0.5
        %v1859 = vmul.f32 %v835, 0.5
        %v1860 = vmul.f32 %v836, 0.5
        %v1861 = vmul.f32 %v837, 0.5
        %v1862 = vmul.f32 %v838, 0.5
        %v1863 = vmul.f32 %v839, 0.5
        %v1864 = vmul.f32 %v840, 0.5
        %v1865 = vmul.f32 %v841, 0.5
        %v1866 = vmul.f32 %v842, 0.5
        %v1867 = vmul.f32 %v843, 0.5
        %v1868 = vmul.f32 %v844, 0.5
        %v1869 = vmul.f32 %v845, 0.5
        %v1870 = vmul.f32 %v846, 0.5
        %v1871 = vmul.f32 %v847, 0.5
        %v1872 = vmul.f32 %v848, 0.5
        %v1873 = vmul.f32 %v849, 0.5
        %v1874 = vmul.f32 %v850, 0.5
        %v1875 = vmul.f32 %v851, 0.5
        %v1876 = vmul.f32 %v852, 0.5
        %v1877 = vmul.f32 %v853, 0.5
        %v1878 = vmul.f32 %v854, 0.5
        %v1879 = vmul.f32 %v855, 0.5
        %v1880 = vmul.f32 %v856, 0.5
        %v1881 = vmul.f32 %v857, 0.5
        %v1882 = vmul.f32 %v858, 0.5
        %v1883 = vmul.f32 %v859, 0.5
        %v1884 = vmul.f32 %v860, 0.5
        %v1885 = vmul.f32 %v861, 0.5
        %v1886 = vmul.f32 %v862, 0.5
        %v1887 = vmul.f32 %v863, 0.5
        %v1888 = vmul.f32 %v864, 0.5
        %v1889 = vmul.f32 %v865, 0.5
        %v1890 = vmul.f32 %v866, 0.5
        %v1891 = vmul.f32 %v867, 0.5
        %v1892 = vmul.f32 %v868, 0.5
        %v1893 = vmul.f32 %v869, 0.5
        %v1894 = vmul.f32 %v870, 0.5
        %v1895 = vmul.f32 %v871, 0.5
        %v1896 = vmul.f32 %v872, 0.5
        %v1897 = vmul.f32 %v873, 0.5
        %v1898 = vmul.f32 %v874, 0.5
        %v1899 = vmul.f32 %v875, 0.5
        %v1900 = vmul.f32 %v876, 0.5
        %v1901 = vmul.f32 %v877, 0.5
        %v1902 = vmul.f32 %v878, 0.5
        %v1903 = vmul.f32 %v879, 0.5
        %v1904 = vmul.f32 %v880, 0.5
        %v1905 = vmul.f32 %v881, 0.5
        %v1906 = vmul.f32 %v882, 0.5
        %v1907 = vmul.f32 %v883, 0.5
        %v1908 = vmul.f32 %v884, 0.5
        %v1909 = vmul.f32 %v885, 0.5
        %v1910 = vmul.f32 %v886, 0.5
        %v1911 = vmul.f32 %v887, 0.5
        %v1912 = vmul.f32 %v888, 0.5
        %v1913 = vmul.f32 %v889, 0.5
        %v1914 = vmul.f32 %v890, 0.5
        %v1915 = vmul.f32 %v891, 0.5
        %v1916 = vmul.f32 %v892, 0.5
        %v1917 = vmul.f32 %v893, 0.5
        %v1918 = vmul.f32 %v894, 0.5
        %v1919 = vmul.f32 %v895, 0.5
        %v1920 = vmul.f32 %v896, 0.5
        %v1921 = vmul.f32 %v897, 0.5
        %v1922 = vmul.f32 %v898, 0.5
        %v1923 = vmul.f32 %v899, 0.5
        %v1924 = vmul.f32 %v900, 0.5
        %v1925 = vmul.f32 %v901, 0.5
        %v1926 = vmul.f32 %v902, 0.5
        %v1927 = vmul.f32 %v903, 0.5
        %v1928 = vmul.f32 %v904, 0.5
        %v1929 = vmul.f32 %v905, 0.5
        %v1930 = vmul.f32 %v906, 0.5
        %v1931 = vmul.f32 %v907, 0.5
        %v1932 = vmul.f32 %v908, 0.5
        %v1933 = vmul.f32 %v909, 0.5
        %v1934 = vmul.f32 %v910, 0.5
        %v1935 = vmul.f32 %v911, 0.5
        %v1936 = vmul.f32 %v912, 0.5
        %v1937 = vmul.f32 %v913, 0.5
        %v1938 = vmul.f32 %v914, 0.5
        %v1939 = vmul.f32 %v915, 0.5
        %v1940 = vmul.f32 %v916, 0.5
        %v1941 = vmul.f32 %v917, 0.5
        %v1942 = vmul.f32 %v918, 0.5
        %v1943 = vmul.f32 %v919, 0.5
        %v1944 = vmul.f32 %v920, 0.5
        %v1945 = vmul.f32 %v921, 0.5
        %v1946 = vmul.f32 %v922, 0.5
        %v1947 = vmul.f32 %v923, 0.5
        %v1948 = vmul.f32 %v924, 0.5
        %v1949 = vmul.f32 %v925, 0.5
        %v1950 = vmul.f32 %v926, 0.5
        %v1951 = vmul.f32 %v927, 0.5
        %v1952 = vmul.f32 %v928, 0.5
        %v1953 = vmul.f32 %v929, 0.5
        %v1954 = vmul.f32 %v930, 0.5
        %v1955 = vmul.f32 %v931, 0.5
        %v1956 = vmul.f32 %v932, 0.5
        %v1957 = vmul.f32 %v933, 0.5
        %v1958 = vmul.f32 %v934, 0.5
        %v1959 = vmul.f32 %v935, 0.5
        %v1960 = vmul.f32 %v936, 0.5
        %v1961 = vmul.f32 %v937, 0.5
        %v1962 = vmul.f32 %v938, 0.5
        %v1963 = vmul.f32 %v939, 0.5
        %v1964 = vmul.f32 %v940, 0.5
        %v1965 = vmul.f32 %v941, 0.5
        %v1966 = vmul.f32 %v942, 0.5
        %v1967 = vmul.f32 %v943, 0.5
        %v1968 = vmul.f32 %v944, 0.5
        %v1969 = vmul.f32 %v945, 0.5
        %v1970 = vmul.f32 %v946, 0.5
        %v1971 = vmul.f32 %v947, 0.5
        %v1972 = vmul.f32 %v948, 0.5
        %v1973 = vmul.f32 %v949, 0.5
        %v1974 = vmul.f32 %v950, 0.5
        %v1975 = vmul.f32 %v951, 0.5
        %v1976 = vmul.f32 %v952, 0.5
        %v1977 = vmul.f32 %v953, 0.5
        %v1978 = vmul.f32 %v954, 0.5
        %v1979 = vmul.f32 %v955, 0.5
        %v1980 = vmul.f32 %v956, 0.5
        %v1981 = vmul.f32 %v957, 0.5
        %v1982 = vmul.f32 %v958, 0.5
        %v1983 = vmul.f32 %v959, 0.5
        %v1984 = vmul.f32 %v960, 0.5
        %v1985 = vmul.f32 %v961, 0.5
        %v1986 = vmul.f32 %v962, 0.5
        %v1987 = vmul.f32 %v963, 0.5
        %v1988 = vmul.f32 %v964, 0.5
        %v1989 = vmul.f32 %v965, 0.5
        %v1990 = vmul.f32 %v966, 0.5
        %v1991 = vmul.f32 %v967, 0.5
        %v1992 = vmul.f32 %v968, 0.5
        %v1993 = vmul.f32 %v969, 0.5
        %v1994 = vmul.f32 %v970, 0.5
        %v1995 = vmul.f32 %v971, 0.5
        %v1996 = vmul.f32 %v972, 0.5
        %v1997 = vmul.f32 %v973, 0.5
        %v1998 = vmul.f32 %v974, 0.5
        %v1999 = vmul.f32 %v975, 0.5
        %v2000 = vmul.f32 %v976, 0.5
        %v2001 = vmul.f32 %v977, 0.5
        %v2002 = vmul.f32 %v978, 0.5
        %v2003 = vmul.f32 %v979, 0.5
        %v2004 = vmul.f32 %v980, 0.5
        %v2005 = vmul.f32 %v981, 0.5
        %v2006 = vmul.f32 %v982, 0.5
        %v2007 = vmul.f32 %v983, 0.5
        %v2008 = vmul.f32 %v984, 0.5
        %v2009 = vmul.f32 %v985, 0.5
        %v2010 = vmul.f32 %v986, 0.5
        %v2011 = vmul.f32 %v987, 0.5
        %v2012 = vmul.f32 %v988, 0.5
        %v2013 = vmul.f32 %v989, 0.5
        %v2014 = vmul.f32 %v990, 0.5
        %v2015 = vmul.f32 %v991, 0.5
        %v2016 = vmul.f32 %v992, 0.5
        %v2017 = vmul.f32 %v993, 0.5
        %v2018 = vmul.f32 %v994, 0.5
        %v2019 = vmul.f32 %v995, 0.5
        %v2020 = vmul.f32 %v996, 0.5
        %v2021 = vmul.f32 %v997, 0.5
        %v2022 = vmul.f32 %v998, 0.5
        %v2023 = vmul.f32 %v999, 0.5
        %v2024 = vmul.f32 %v1000, 0.5
        %v2025 = vmul.f32 %v1001, 0.5
        %v2026 = vmul.f32 %v1002, 0.5
        %v2027 = vmul.f32 %v1003, 0.5
        %v2028 = vmul.f32 %v1004, 0.5
        %v2029 = vmul.f32 %v1005, 0.5
        %v2030 = vmul.f32 %v1006, 0.5
        %v2031 = vmul.f32 %v1007, 0.5
        %v2032 = vmul.f32 %v1008, 0.5
        %v2033 = vmul.f32 %v1009, 0.5
        %v2034 = vmul.f32 %v1010, 0.5
        %v2035 = vmul.f32 %v1011, 0.5
        %v2036 = vmul.f32 %v1012, 0.5
        %v2037 = vmul.f32 %v1013, 0.5
        %v2038 = vmul.f32 %v1014, 0.5
        %v2039 = vmul.f32 %v1015, 0.5
        %v2040 = vmul.f32 %v1016, 0.5
        %v2041 = vmul.f32 %v1017, 0.5
        %v2042 = vmul.f32 %v1018, 0.5
        %v2043 = vmul.f32 %v1019, 0.5
        %v2044 = vmul.f32 %v1020, 0.5
        %v2045 = vmul.f32 %v1021, 0.5
        %v2046 = vmul.f32 %v1022, 0.5
        %v2047 = vmul.f32 %v1023, 0.5
        %v2048 = vmul.f32 %v1024, 0.5
        %v2049 = vmul.f32 %v1025, 0.5
        %v2050 = vmul.f32 %v1026, 0.5
        %v2051 = vmul.f32 %v1027, 0.5
        %v2052 = vmul.f32 %v1028, 0.5
        %v2053 = vmul.f32 %v1029, 0.5
        %v2054 = vmul.f32 %v1030, 0.5
        %v2055 = vmul.f32 %v1031, 0.5
        %v2056 = vmul.f32 %v1032, 0.5
        %v2057 = vmul.f32 %v1033, 0.5
        %v2058 = vmul.f32 %v1034, 0.5
        %v2059 = vmul.f32 %v1035, 0.5
        %v2060 = vmul.f32 %v1036, 0.5
        %v2061 = vmul.f32 %v1037, 0.5
        %v2062 = vmul.f32 %v1038, 0.5
        %v2063 = vmul.f32 %v1039, 0.5
        %v2064 = vmul.f32 %v1040, 0.5
        %v2065 = vmul.f32 %v1041, 0.5
        %v2066 = vmul.f32 %v1042, 0.5
        %v2067 = vmul.f32 %v1043, 0.5
        %v2068 = vmul.f32 %v1044, 0.5
        %v2069 = vmul.f32 %v1045, 0.5
        %v2070 = vmul.f32 %v1046, 0.5
        %v2071 = vmul.f32 %v1047, 0.5
        %v2072 = vmul.f32 %v1048, 0.5
        %v2073 = vmul.f32 %v1049, 0.5
        %v2074 = vmul.f32 %v1050, 0.5
        %v2075 = vmul.f32 %v1051, 0.5
        %v2076 = vmul.f32 %v1052, 0.5
        %v2077 = vmul.f32 %v1053, 0.5
        %v2078 = vmul.f32 %v1054, 0.5
        %v2079 = vmul.f32 %v1055, 0.5
        %v2080 = vmul.f32 %v1056, 0.5
        %v2081 = vmul.f32 %v1057, 0.5
        %v2082 = vmul.f32 %v1058, 0.5
        %v2083 = vmul.f32 %v1059, 0.5
        %v2084 = vmul.f32 %v1060, 0.5
        %v2085 = vmul.f32 %v1061, 0.5
        %v2086 = vmul.f32 %v1062, 0.5
        %v2087 = vmul.f32 %v1063, 0.5
        %v2088 = vmul.f32 %v1064, 0.5
        %v2089 = vmul.f32 %v1065, 0.5
        %v2090 = vmul.f32 %v1066, 0.5
        %v2091 = vmul.f32 %v1067, 0.5
        %v2092 = vmul.f32 %v1068, 0.5
        %v2093 = vmul.f32 %v1069, 0.5
        %v2094 = vmul.f32 %v1070, 0.5
        %v2095 = vmul.f32 %v1071, 0.5
        %v2096 = vmul.f32 %v1072, 0.5
        %v2097 = vmul.f32 %v1073, 0.5
        %v2098 = vmul.f32 %v1074, 0.5
        %v2099 = vmul.f32 %v1075, 0.5
        %v2100 = vmul.f32 %v1076, 0.5
        %v2101 = vmul.f32 %v1077, 0.5
        %v2102 = vmul.f32 %v1078, 0.5
        %v2103 = vmul.f32 %v1079, 0.5
        %v2104 = vmul.f32 %v1080, 0.5
        %v2105 = vmul.f32 %v1081, 0.5
        %v2106 = vmul.f32 %v1082, 0.5
        %v2107 = vmul.f32 %v1083, 0.5
        %v2108 = vmul.f32 %v1084, 0.5
        %v2109 = vmul.f32 %v1085, 0.5
        %v2110 = vmul.f32 %v1086, 0.5
        %v2111 = vmul.f32 %v1087, 0.5
        %v2112 = vmul.f32 %v1088, 0.5
        %v2113 = vmul.f32 %v1089, 0.5
        %v2114 = vmul.f32 %v1090, 0.5
        %v2115 = vmul.f32 %v1091, 0.5
        %v2116 = vmul.f32 %v1092, 0.5
        %v2117 = vmul.f32 %v1093, 0.5
        %v2118 = vmul.f32 %v1094, 0.5
        %v2119 = vmul.f32 %v1095, 0.5
        %v2120 = vmul.f32 %v1096, 0.5
        %v2121 = vmul.f32 %v1097, 0.5
        %v2122 = vmul.f32 %v1098, 0.5
        %v2123 = vmul.f32 %v1099, 0.5
        %v2124 = vmul.f32 %v1100, 0.5
        %v2125 = vmul.f32 %v1101, 0.5
        %v2126 = vmul.f32 %v1102, 0.5
        %v2127 = vmul.f32 %v1103, 0.5
        %v2128 = vmul.f32 %v1104, 0.5
        %v2129 = vmul.f32 %v1105, 0.5
        %v2130 = vmul.f32 %v1106, 0.5
        %v2131 = vmul.f32 %v1107, 0.5
        %v2132 = vmul.f32 %v1108, 0.5
        %v2133 = vmul.f32 %v1109, 0.5
        %v2134 = vmul.f32 %v1110, 0.5
        %v2135 = vmul.f32 %v1111, 0.5
        %v2136 = vmul.f32 %v1112, 0.5
        %v2137 = vmul.f32 %v1113, 0.5
        %v2138 = vmul.f32 %v1114, 0.5
        %v2139 = vmul.f32 %v1115, 0.5
        %v2140 = vmul.f32 %v1116, 0.5
        %v2141 = vmul.f32 %v1117, 0.5
        %v2142 = vmul.f32 %v1118, 0.5
        %v2143 = vmul.f32 %v1119, 0.5
        %v2144 = vmul.f32 %v1120, 0.5
        %v2145 = vmul.f32 %v1121, 0.5
        %v2146 = vmul.f32 %v1122, 0.5
        %v2147 = vmul.f32 %v1123, 0.5
        %v2148 = vmul.f32 %v1124, 0.5
        %v2149 = vmul.f32 %v1125, 0.5
        %v2150 = vmul.f32 %v1126, 0.5
        %v2151 = vmul.f32 %v1127, 0.5
        %v2152 = vmul.f32 %v1128, 0.5
        %v2153 = vmul.f32 %v1129, 0.5
        %v2154 = vmul.f32 %v1130, 0.5
        %v2155 = vmul.f32 %v1131, 0.5
        %v2156 = vmul.f32 %v1132, 0.5
        %v2157 = vmul.f32 %v1133, 0.5
        %v2158 = vmul.f32 %v1134, 0.5
        %v2159 = vmul.f32 %v1135, 0.5
        %v2160 = vmul.f32 %v1136, 0.5
        %v2161 = vmul.f32 %v1137, 0.5
        %v2162 = vmul.f32 %v1138, 0.5
        %v2163 = vmul.f32 %v1139, 0.5
        %v2164 = vmul.f32 %v1140, 0.5
        %v2165 = vmul.f32 %v1141, 0.5
        %v2166 = vmul.f32 %v1142, 0.5
        %v2167 = vmul.f32 %v1143, 0.5
        %v2168 = vmul.f32 %v1144, 0.5
        %v2169 = vmul.f32 %v1145, 0.5
        %v2170 = vmul.f32 %v1146, 0.5
        %v2171 = vmul.f32 %v1147, 0.5
        %v2172 = vmul.f32 %v1148, 0.5
        %v2173 = vmul.f32 %v1149, 0.5
        %v2174 = vmul.f32 %v1150, 0.5
        %v2175 = vmul.f32 %v1151, 0.5
        %v2176 = vmul.f32 %v1152, 0.5
        %v2177 = vmul.f32 %v1153, 0.5
        %v2178 = vmul.f32 %v1154, 0.5
        %v2179 = vmul.f32 %v1155, 0.5
        %v2180 = vmul.f32 %v1156, 0.5
        %v2181 = vmul.f32 %v1157, 0.5
        %v2182 = vmul.f32 %v1158, 0.5
        %v2183 = vmul.f32 %v1159, 0.5
        %v2184 = vmul.f32 %v1160, 0.5
        %v2185 = vmul.f32 %v1161, 0.5
        %v2186 = vtanh.pop %v1162
        %v2187 = vtanh.pop %v1163
        %v2188 = vtanh.pop %v1164
        %v2189 = vtanh.pop %v1165
        %v2190 = vtanh.pop %v1166
        %v2191 = vtanh.pop %v1167
        %v2192 = vtanh.pop %v1168
        %v2193 = vtanh.pop %v1169
        %v2194 = vtanh.pop %v1170
        %v2195 = vtanh.pop %v1171
        %v2196 = vtanh.pop %v1172
        %v2197 = vtanh.pop %v1173
        %v2198 = vtanh.pop %v1174
        %v2199 = vtanh.pop %v1175
        %v2200 = vtanh.pop %v1176
        %v2201 = vtanh.pop %v1177
        %v2202 = vtanh.pop %v1178
        %v2203 = vtanh.pop %v1179
        %v2204 = vtanh.pop %v1180
        %v2205 = vtanh.pop %v1181
        %v2206 = vtanh.pop %v1182
        %v2207 = vtanh.pop %v1183
        %v2208 = vtanh.pop %v1184
        %v2209 = vtanh.pop %v1185
        %v2210 = vtanh.pop %v1186
        %v2211 = vtanh.pop %v1187
        %v2212 = vtanh.pop %v1188
        %v2213 = vtanh.pop %v1189
        %v2214 = vtanh.pop %v1190
        %v2215 = vtanh.pop %v1191
        %v2216 = vtanh.pop %v1192
        %v2217 = vtanh.pop %v1193
        %v2218 = vtanh.pop %v1194
        %v2219 = vtanh.pop %v1195
        %v2220 = vtanh.pop %v1196
        %v2221 = vtanh.pop %v1197
        %v2222 = vtanh.pop %v1198
        %v2223 = vtanh.pop %v1199
        %v2224 = vtanh.pop %v1200
        %v2225 = vtanh.pop %v1201
        %v2226 = vtanh.pop %v1202
        %v2227 = vtanh.pop %v1203
        %v2228 = vtanh.pop %v1204
        %v2229 = vtanh.pop %v1205
        %v2230 = vtanh.pop %v1206
        %v2231 = vtanh.pop %v1207
        %v2232 = vtanh.pop %v1208
        %v2233 = vtanh.pop %v1209
        %v2234 = vtanh.pop %v1210
        %v2235 = vtanh.pop %v1211
        %v2236 = vtanh.pop %v1212
        %v2237 = vtanh.pop %v1213
        %v2238 = vtanh.pop %v1214
        %v2239 = vtanh.pop %v1215
        %v2240 = vtanh.pop %v1216
        %v2241 = vtanh.pop %v1217
        %v2242 = vtanh.pop %v1218
        %v2243 = vtanh.pop %v1219
        %v2244 = vtanh.pop %v1220
        %v2245 = vtanh.pop %v1221
        %v2246 = vtanh.pop %v1222
        %v2247 = vtanh.pop %v1223
        %v2248 = vtanh.pop %v1224
        %v2249 = vtanh.pop %v1225
        %v2250 = vtanh.pop %v1226
        %v2251 = vtanh.pop %v1227
        %v2252 = vtanh.pop %v1228
        %v2253 = vtanh.pop %v1229
        %v2254 = vtanh.pop %v1230
        %v2255 = vtanh.pop %v1231
        %v2256 = vtanh.pop %v1232
        %v2257 = vtanh.pop %v1233
        %v2258 = vtanh.pop %v1234
        %v2259 = vtanh.pop %v1235
        %v2260 = vtanh.pop %v1236
        %v2261 = vtanh.pop %v1237
        %v2262 = vtanh.pop %v1238
        %v2263 = vtanh.pop %v1239
        %v2264 = vtanh.pop %v1240
        %v2265 = vtanh.pop %v1241
        %v2266 = vtanh.pop %v1242
        %v2267 = vtanh.pop %v1243
        %v2268 = vtanh.pop %v1244
        %v2269 = vtanh.pop %v1245
        %v2270 = vtanh.pop %v1246
        %v2271 = vtanh.pop %v1247
        %v2272 = vtanh.pop %v1248
        %v2273 = vtanh.pop %v1249
        %v2274 = vtanh.pop %v1250
        %v2275 = vtanh.pop %v1251
        %v2276 = vtanh.pop %v1252
        %v2277 = vtanh.pop %v1253
        %v2278 = vtanh.pop %v1254
        %v2279 = vtanh.pop %v1255
        %v2280 = vtanh.pop %v1256
        %v2281 = vtanh.pop %v1257
        %v2282 = vtanh.pop %v1258
        %v2283 = vtanh.pop %v1259
        %v2284 = vtanh.pop %v1260
        %v2285 = vtanh.pop %v1261
        %v2286 = vtanh.pop %v1262
        %v2287 = vtanh.pop %v1263
        %v2288 = vtanh.pop %v1264
        %v2289 = vtanh.pop %v1265
        %v2290 = vtanh.pop %v1266
        %v2291 = vtanh.pop %v1267
        %v2292 = vtanh.pop %v1268
        %v2293 = vtanh.pop %v1269
        %v2294 = vtanh.pop %v1270
        %v2295 = vtanh.pop %v1271
        %v2296 = vtanh.pop %v1272
        %v2297 = vtanh.pop %v1273
        %v2298 = vtanh.pop %v1274
        %v2299 = vtanh.pop %v1275
        %v2300 = vtanh.pop %v1276
        %v2301 = vtanh.pop %v1277
        %v2302 = vtanh.pop %v1278
        %v2303 = vtanh.pop %v1279
        %v2304 = vtanh.pop %v1280
        %v2305 = vtanh.pop %v1281
        %v2306 = vtanh.pop %v1282
        %v2307 = vtanh.pop %v1283
        %v2308 = vtanh.pop %v1284
        %v2309 = vtanh.pop %v1285
        %v2310 = vtanh.pop %v1286
        %v2311 = vtanh.pop %v1287
        %v2312 = vtanh.pop %v1288
        %v2313 = vtanh.pop %v1289
        %v2314 = vtanh.pop %v1290
        %v2315 = vtanh.pop %v1291
        %v2316 = vtanh.pop %v1292
        %v2317 = vtanh.pop %v1293
        %v2318 = vtanh.pop %v1294
        %v2319 = vtanh.pop %v1295
        %v2320 = vtanh.pop %v1296
        %v2321 = vtanh.pop %v1297
        %v2322 = vtanh.pop %v1298
        %v2323 = vtanh.pop %v1299
        %v2324 = vtanh.pop %v1300
        %v2325 = vtanh.pop %v1301
        %v2326 = vtanh.pop %v1302
        %v2327 = vtanh.pop %v1303
        %v2328 = vtanh.pop %v1304
        %v2329 = vtanh.pop %v1305
        %v2330 = vtanh.pop %v1306
        %v2331 = vtanh.pop %v1307
        %v2332 = vtanh.pop %v1308
        %v2333 = vtanh.pop %v1309
        %v2334 = vtanh.pop %v1310
        %v2335 = vtanh.pop %v1311
        %v2336 = vtanh.pop %v1312
        %v2337 = vtanh.pop %v1313
        %v2338 = vtanh.pop %v1314
        %v2339 = vtanh.pop %v1315
        %v2340 = vtanh.pop %v1316
        %v2341 = vtanh.pop %v1317
        %v2342 = vtanh.pop %v1318
        %v2343 = vtanh.pop %v1319
        %v2344 = vtanh.pop %v1320
        %v2345 = vtanh.pop %v1321
        %v2346 = vtanh.pop %v1322
        %v2347 = vtanh.pop %v1323
        %v2348 = vtanh.pop %v1324
        %v2349 = vtanh.pop %v1325
        %v2350 = vtanh.pop %v1326
        %v2351 = vtanh.pop %v1327
        %v2352 = vtanh.pop %v1328
        %v2353 = vtanh.pop %v1329
        %v2354 = vtanh.pop %v1330
        %v2355 = vtanh.pop %v1331
        %v2356 = vtanh.pop %v1332
        %v2357 = vtanh.pop %v1333
        %v2358 = vtanh.pop %v1334
        %v2359 = vtanh.pop %v1335
        %v2360 = vtanh.pop %v1336
        %v2361 = vtanh.pop %v1337
        %v2362 = vtanh.pop %v1338
        %v2363 = vtanh.pop %v1339
        %v2364 = vtanh.pop %v1340
        %v2365 = vtanh.pop %v1341
        %v2366 = vtanh.pop %v1342
        %v2367 = vtanh.pop %v1343
        %v2368 = vtanh.pop %v1344
        %v2369 = vtanh.pop %v1345
        %v2370 = vtanh.pop %v1346
        %v2371 = vtanh.pop %v1347
        %v2372 = vtanh.pop %v1348
        %v2373 = vtanh.pop %v1349
        %v2374 = vtanh.pop %v1350
        %v2375 = vtanh.pop %v1351
        %v2376 = vtanh.pop %v1352
        %v2377 = vtanh.pop %v1353
        %v2378 = vtanh.pop %v1354
        %v2379 = vtanh.pop %v1355
        %v2380 = vtanh.pop %v1356
        %v2381 = vtanh.pop %v1357
        %v2382 = vtanh.pop %v1358
        %v2383 = vtanh.pop %v1359
        %v2384 = vtanh.pop %v1360
        %v2385 = vtanh.pop %v1361
        %v2386 = vtanh.pop %v1362
        %v2387 = vtanh.pop %v1363
        %v2388 = vtanh.pop %v1364
        %v2389 = vtanh.pop %v1365
        %v2390 = vtanh.pop %v1366
        %v2391 = vtanh.pop %v1367
        %v2392 = vtanh.pop %v1368
        %v2393 = vtanh.pop %v1369
        %v2394 = vtanh.pop %v1370
        %v2395 = vtanh.pop %v1371
        %v2396 = vtanh.pop %v1372
        %v2397 = vtanh.pop %v1373
        %v2398 = vtanh.pop %v1374
        %v2399 = vtanh.pop %v1375
        %v2400 = vtanh.pop %v1376
        %v2401 = vtanh.pop %v1377
        %v2402 = vtanh.pop %v1378
        %v2403 = vtanh.pop %v1379
        %v2404 = vtanh.pop %v1380
        %v2405 = vtanh.pop %v1381
        %v2406 = vtanh.pop %v1382
        %v2407 = vtanh.pop %v1383
        %v2408 = vtanh.pop %v1384
        %v2409 = vtanh.pop %v1385
        %v2410 = vtanh.pop %v1386
        %v2411 = vtanh.pop %v1387
        %v2412 = vtanh.pop %v1388
        %v2413 = vtanh.pop %v1389
        %v2414 = vtanh.pop %v1390
        %v2415 = vtanh.pop %v1391
        %v2416 = vtanh.pop %v1392
        %v2417 = vtanh.pop %v1393
        %v2418 = vtanh.pop %v1394
        %v2419 = vtanh.pop %v1395
        %v2420 = vtanh.pop %v1396
        %v2421 = vtanh.pop %v1397
        %v2422 = vtanh.pop %v1398
        %v2423 = vtanh.pop %v1399
        %v2424 = vtanh.pop %v1400
        %v2425 = vtanh.pop %v1401
        %v2426 = vtanh.pop %v1402
        %v2427 = vtanh.pop %v1403
        %v2428 = vtanh.pop %v1404
        %v2429 = vtanh.pop %v1405
        %v2430 = vtanh.pop %v1406
        %v2431 = vtanh.pop %v1407
        %v2432 = vtanh.pop %v1408
        %v2433 = vtanh.pop %v1409
        %v2434 = vtanh.pop %v1410
        %v2435 = vtanh.pop %v1411
        %v2436 = vtanh.pop %v1412
        %v2437 = vtanh.pop %v1413
        %v2438 = vtanh.pop %v1414
        %v2439 = vtanh.pop %v1415
        %v2440 = vtanh.pop %v1416
        %v2441 = vtanh.pop %v1417
        %v2442 = vtanh.pop %v1418
        %v2443 = vtanh.pop %v1419
        %v2444 = vtanh.pop %v1420
        %v2445 = vtanh.pop %v1421
        %v2446 = vtanh.pop %v1422
        %v2447 = vtanh.pop %v1423
        %v2448 = vtanh.pop %v1424
        %v2449 = vtanh.pop %v1425
        %v2450 = vtanh.pop %v1426
        %v2451 = vtanh.pop %v1427
        %v2452 = vtanh.pop %v1428
        %v2453 = vtanh.pop %v1429
        %v2454 = vtanh.pop %v1430
        %v2455 = vtanh.pop %v1431
        %v2456 = vtanh.pop %v1432
        %v2457 = vtanh.pop %v1433
        %v2458 = vtanh.pop %v1434
        %v2459 = vtanh.pop %v1435
        %v2460 = vtanh.pop %v1436
        %v2461 = vtanh.pop %v1437
        %v2462 = vtanh.pop %v1438
        %v2463 = vtanh.pop %v1439
        %v2464 = vtanh.pop %v1440
        %v2465 = vtanh.pop %v1441
        %v2466 = vtanh.pop %v1442
        %v2467 = vtanh.pop %v1443
        %v2468 = vtanh.pop %v1444
        %v2469 = vtanh.pop %v1445
        %v2470 = vtanh.pop %v1446
        %v2471 = vtanh.pop %v1447
        %v2472 = vtanh.pop %v1448
        %v2473 = vtanh.pop %v1449
        %v2474 = vtanh.pop %v1450
        %v2475 = vtanh.pop %v1451
        %v2476 = vtanh.pop %v1452
        %v2477 = vtanh.pop %v1453
        %v2478 = vtanh.pop %v1454
        %v2479 = vtanh.pop %v1455
        %v2480 = vtanh.pop %v1456
        %v2481 = vtanh.pop %v1457
        %v2482 = vtanh.pop %v1458
        %v2483 = vtanh.pop %v1459
        %v2484 = vtanh.pop %v1460
        %v2485 = vtanh.pop %v1461
        %v2486 = vtanh.pop %v1462
        %v2487 = vtanh.pop %v1463
        %v2488 = vtanh.pop %v1464
        %v2489 = vtanh.pop %v1465
        %v2490 = vtanh.pop %v1466
        %v2491 = vtanh.pop %v1467
        %v2492 = vtanh.pop %v1468
        %v2493 = vtanh.pop %v1469
        %v2494 = vtanh.pop %v1470
        %v2495 = vtanh.pop %v1471
        %v2496 = vtanh.pop %v1472
        %v2497 = vtanh.pop %v1473
        %v2498 = vtanh.pop %v1474
        %v2499 = vtanh.pop %v1475
        %v2500 = vtanh.pop %v1476
        %v2501 = vtanh.pop %v1477
        %v2502 = vtanh.pop %v1478
        %v2503 = vtanh.pop %v1479
        %v2504 = vtanh.pop %v1480
        %v2505 = vtanh.pop %v1481
        %v2506 = vtanh.pop %v1482
        %v2507 = vtanh.pop %v1483
        %v2508 = vtanh.pop %v1484
        %v2509 = vtanh.pop %v1485
        %v2510 = vtanh.pop %v1486
        %v2511 = vtanh.pop %v1487
        %v2512 = vtanh.pop %v1488
        %v2513 = vtanh.pop %v1489
        %v2514 = vtanh.pop %v1490
        %v2515 = vtanh.pop %v1491
        %v2516 = vtanh.pop %v1492
        %v2517 = vtanh.pop %v1493
        %v2518 = vtanh.pop %v1494
        %v2519 = vtanh.pop %v1495
        %v2520 = vtanh.pop %v1496
        %v2521 = vtanh.pop %v1497
        %v2522 = vtanh.pop %v1498
        %v2523 = vtanh.pop %v1499
        %v2524 = vtanh.pop %v1500
        %v2525 = vtanh.pop %v1501
        %v2526 = vtanh.pop %v1502
        %v2527 = vtanh.pop %v1503
        %v2528 = vtanh.pop %v1504
        %v2529 = vtanh.pop %v1505
        %v2530 = vtanh.pop %v1506
        %v2531 = vtanh.pop %v1507
        %v2532 = vtanh.pop %v1508
        %v2533 = vtanh.pop %v1509
        %v2534 = vtanh.pop %v1510
        %v2535 = vtanh.pop %v1511
        %v2536 = vtanh.pop %v1512
        %v2537 = vtanh.pop %v1513
        %v2538 = vtanh.pop %v1514
        %v2539 = vtanh.pop %v1515
        %v2540 = vtanh.pop %v1516
        %v2541 = vtanh.pop %v1517
        %v2542 = vtanh.pop %v1518
        %v2543 = vtanh.pop %v1519
        %v2544 = vtanh.pop %v1520
        %v2545 = vtanh.pop %v1521
        %v2546 = vtanh.pop %v1522
        %v2547 = vtanh.pop %v1523
        %v2548 = vtanh.pop %v1524
        %v2549 = vtanh.pop %v1525
        %v2550 = vtanh.pop %v1526
        %v2551 = vtanh.pop %v1527
        %v2552 = vtanh.pop %v1528
        %v2553 = vtanh.pop %v1529
        %v2554 = vtanh.pop %v1530
        %v2555 = vtanh.pop %v1531
        %v2556 = vtanh.pop %v1532
        %v2557 = vtanh.pop %v1533
        %v2558 = vtanh.pop %v1534
        %v2559 = vtanh.pop %v1535
        %v2560 = vtanh.pop %v1536
        %v2561 = vtanh.pop %v1537
        %v2562 = vtanh.pop %v1538
        %v2563 = vtanh.pop %v1539
        %v2564 = vtanh.pop %v1540
        %v2565 = vtanh.pop %v1541
        %v2566 = vtanh.pop %v1542
        %v2567 = vtanh.pop %v1543
        %v2568 = vtanh.pop %v1544
        %v2569 = vtanh.pop %v1545
        %v2570 = vtanh.pop %v1546
        %v2571 = vtanh.pop %v1547
        %v2572 = vtanh.pop %v1548
        %v2573 = vtanh.pop %v1549
        %v2574 = vtanh.pop %v1550
        %v2575 = vtanh.pop %v1551
        %v2576 = vtanh.pop %v1552
        %v2577 = vtanh.pop %v1553
        %v2578 = vtanh.pop %v1554
        %v2579 = vtanh.pop %v1555
        %v2580 = vtanh.pop %v1556
        %v2581 = vtanh.pop %v1557
        %v2582 = vtanh.pop %v1558
        %v2583 = vtanh.pop %v1559
        %v2584 = vtanh.pop %v1560
        %v2585 = vtanh.pop %v1561
        %v2586 = vtanh.pop %v1562
        %v2587 = vtanh.pop %v1563
        %v2588 = vtanh.pop %v1564
        %v2589 = vtanh.pop %v1565
        %v2590 = vtanh.pop %v1566
        %v2591 = vtanh.pop %v1567
        %v2592 = vtanh.pop %v1568
        %v2593 = vtanh.pop %v1569
        %v2594 = vtanh.pop %v1570
        %v2595 = vtanh.pop %v1571
        %v2596 = vtanh.pop %v1572
        %v2597 = vtanh.pop %v1573
        %v2598 = vtanh.pop %v1574
        %v2599 = vtanh.pop %v1575
        %v2600 = vtanh.pop %v1576
        %v2601 = vtanh.pop %v1577
        %v2602 = vtanh.pop %v1578
        %v2603 = vtanh.pop %v1579
        %v2604 = vtanh.pop %v1580
        %v2605 = vtanh.pop %v1581
        %v2606 = vtanh.pop %v1582
        %v2607 = vtanh.pop %v1583
        %v2608 = vtanh.pop %v1584
        %v2609 = vtanh.pop %v1585
        %v2610 = vtanh.pop %v1586
        %v2611 = vtanh.pop %v1587
        %v2612 = vtanh.pop %v1588
        %v2613 = vtanh.pop %v1589
        %v2614 = vtanh.pop %v1590
        %v2615 = vtanh.pop %v1591
        %v2616 = vtanh.pop %v1592
        %v2617 = vtanh.pop %v1593
        %v2618 = vtanh.pop %v1594
        %v2619 = vtanh.pop %v1595
        %v2620 = vtanh.pop %v1596
        %v2621 = vtanh.pop %v1597
        %v2622 = vtanh.pop %v1598
        %v2623 = vtanh.pop %v1599
        %v2624 = vtanh.pop %v1600
        %v2625 = vtanh.pop %v1601
        %v2626 = vtanh.pop %v1602
        %v2627 = vtanh.pop %v1603
        %v2628 = vtanh.pop %v1604
        %v2629 = vtanh.pop %v1605
        %v2630 = vtanh.pop %v1606
        %v2631 = vtanh.pop %v1607
        %v2632 = vtanh.pop %v1608
        %v2633 = vtanh.pop %v1609
        %v2634 = vtanh.pop %v1610
        %v2635 = vtanh.pop %v1611
        %v2636 = vtanh.pop %v1612
        %v2637 = vtanh.pop %v1613
        %v2638 = vtanh.pop %v1614
        %v2639 = vtanh.pop %v1615
        %v2640 = vtanh.pop %v1616
        %v2641 = vtanh.pop %v1617
        %v2642 = vtanh.pop %v1618
        %v2643 = vtanh.pop %v1619
        %v2644 = vtanh.pop %v1620
        %v2645 = vtanh.pop %v1621
        %v2646 = vtanh.pop %v1622
        %v2647 = vtanh.pop %v1623
        %v2648 = vtanh.pop %v1624
        %v2649 = vtanh.pop %v1625
        %v2650 = vtanh.pop %v1626
        %v2651 = vtanh.pop %v1627
        %v2652 = vtanh.pop %v1628
        %v2653 = vtanh.pop %v1629
        %v2654 = vtanh.pop %v1630
        %v2655 = vtanh.pop %v1631
        %v2656 = vtanh.pop %v1632
        %v2657 = vtanh.pop %v1633
        %v2658 = vtanh.pop %v1634
        %v2659 = vtanh.pop %v1635
        %v2660 = vtanh.pop %v1636
        %v2661 = vtanh.pop %v1637
        %v2662 = vtanh.pop %v1638
        %v2663 = vtanh.pop %v1639
        %v2664 = vtanh.pop %v1640
        %v2665 = vtanh.pop %v1641
        %v2666 = vtanh.pop %v1642
        %v2667 = vtanh.pop %v1643
        %v2668 = vtanh.pop %v1644
        %v2669 = vtanh.pop %v1645
        %v2670 = vtanh.pop %v1646
        %v2671 = vtanh.pop %v1647
        %v2672 = vtanh.pop %v1648
        %v2673 = vtanh.pop %v1649
        %v2674 = vtanh.pop %v1650
        %v2675 = vtanh.pop %v1651
        %v2676 = vtanh.pop %v1652
        %v2677 = vtanh.pop %v1653
        %v2678 = vtanh.pop %v1654
        %v2679 = vtanh.pop %v1655
        %v2680 = vtanh.pop %v1656
        %v2681 = vtanh.pop %v1657
        %v2682 = vtanh.pop %v1658
        %v2683 = vtanh.pop %v1659
        %v2684 = vtanh.pop %v1660
        %v2685 = vtanh.pop %v1661
        %v2686 = vtanh.pop %v1662
        %v2687 = vtanh.pop %v1663
        %v2688 = vtanh.pop %v1664
        %v2689 = vtanh.pop %v1665
        %v2690 = vtanh.pop %v1666
        %v2691 = vtanh.pop %v1667
        %v2692 = vtanh.pop %v1668
        %v2693 = vtanh.pop %v1669
        %v2694 = vtanh.pop %v1670
        %v2695 = vtanh.pop %v1671
        %v2696 = vtanh.pop %v1672
        %v2697 = vtanh.pop %v1673
        %v2698 = vtanh.pop %v1674
        %v2699 = vtanh.pop %v1675
        %v2700 = vtanh.pop %v1676
        %v2701 = vtanh.pop %v1677
        %v2702 = vtanh.pop %v1678
        %v2703 = vtanh.pop %v1679
        %v2704 = vtanh.pop %v1680
        %v2705 = vtanh.pop %v1681
        %v2706 = vtanh.pop %v1682
        %v2707 = vtanh.pop %v1683
        %v2708 = vtanh.pop %v1684
        %v2709 = vtanh.pop %v1685
        %v2710 = vtanh.pop %v1686
        %v2711 = vtanh.pop %v1687
        %v2712 = vtanh.pop %v1688
        %v2713 = vtanh.pop %v1689
        %v2714 = vtanh.pop %v1690
        %v2715 = vtanh.pop %v1691
        %v2716 = vtanh.pop %v1692
        %v2717 = vtanh.pop %v1693
        %v2718 = vtanh.pop %v1694
        %v2719 = vtanh.pop %v1695
        %v2720 = vtanh.pop %v1696
        %v2721 = vtanh.pop %v1697
        %v2722 = vtanh.pop %v1698
        %v2723 = vtanh.pop %v1699
        %v2724 = vtanh.pop %v1700
        %v2725 = vtanh.pop %v1701
        %v2726 = vtanh.pop %v1702
        %v2727 = vtanh.pop %v1703
        %v2728 = vtanh.pop %v1704
        %v2729 = vtanh.pop %v1705
        %v2730 = vtanh.pop %v1706
        %v2731 = vtanh.pop %v1707
        %v2732 = vtanh.pop %v1708
        %v2733 = vtanh.pop %v1709
        %v2734 = vtanh.pop %v1710
        %v2735 = vtanh.pop %v1711
        %v2736 = vtanh.pop %v1712
        %v2737 = vtanh.pop %v1713
        %v2738 = vtanh.pop %v1714
        %v2739 = vtanh.pop %v1715
        %v2740 = vtanh.pop %v1716
        %v2741 = vtanh.pop %v1717
        %v2742 = vtanh.pop %v1718
        %v2743 = vtanh.pop %v1719
        %v2744 = vtanh.pop %v1720
        %v2745 = vtanh.pop %v1721
        %v2746 = vtanh.pop %v1722
        %v2747 = vtanh.pop %v1723
        %v2748 = vtanh.pop %v1724
        %v2749 = vtanh.pop %v1725
        %v2750 = vtanh.pop %v1726
        %v2751 = vtanh.pop %v1727
        %v2752 = vtanh.pop %v1728
        %v2753 = vtanh.pop %v1729
        %v2754 = vtanh.pop %v1730
        %v2755 = vtanh.pop %v1731
        %v2756 = vtanh.pop %v1732
        %v2757 = vtanh.pop %v1733
        %v2758 = vtanh.pop %v1734
        %v2759 = vtanh.pop %v1735
        %v2760 = vtanh.pop %v1736
        %v2761 = vtanh.pop %v1737
        %v2762 = vtanh.pop %v1738
        %v2763 = vtanh.pop %v1739
        %v2764 = vtanh.pop %v1740
        %v2765 = vtanh.pop %v1741
        %v2766 = vtanh.pop %v1742
        %v2767 = vtanh.pop %v1743
        %v2768 = vtanh.pop %v1744
        %v2769 = vtanh.pop %v1745
        %v2770 = vtanh.pop %v1746
        %v2771 = vtanh.pop %v1747
        %v2772 = vtanh.pop %v1748
        %v2773 = vtanh.pop %v1749
        %v2774 = vtanh.pop %v1750
        %v2775 = vtanh.pop %v1751
        %v2776 = vtanh.pop %v1752
        %v2777 = vtanh.pop %v1753
        %v2778 = vtanh.pop %v1754
        %v2779 = vtanh.pop %v1755
        %v2780 = vtanh.pop %v1756
        %v2781 = vtanh.pop %v1757
        %v2782 = vtanh.pop %v1758
        %v2783 = vtanh.pop %v1759
        %v2784 = vtanh.pop %v1760
        %v2785 = vtanh.pop %v1761
        %v2786 = vtanh.pop %v1762
        %v2787 = vtanh.pop %v1763
        %v2788 = vtanh.pop %v1764
        %v2789 = vtanh.pop %v1765
        %v2790 = vtanh.pop %v1766
        %v2791 = vtanh.pop %v1767
        %v2792 = vtanh.pop %v1768
        %v2793 = vtanh.pop %v1769
        %v2794 = vtanh.pop %v1770
        %v2795 = vtanh.pop %v1771
        %v2796 = vtanh.pop %v1772
        %v2797 = vtanh.pop %v1773
        %v2798 = vtanh.pop %v1774
        %v2799 = vtanh.pop %v1775
        %v2800 = vtanh.pop %v1776
        %v2801 = vtanh.pop %v1777
        %v2802 = vtanh.pop %v1778
        %v2803 = vtanh.pop %v1779
        %v2804 = vtanh.pop %v1780
        %v2805 = vtanh.pop %v1781
        %v2806 = vtanh.pop %v1782
        %v2807 = vtanh.pop %v1783
        %v2808 = vtanh.pop %v1784
        %v2809 = vtanh.pop %v1785
        %v2810 = vtanh.pop %v1786
        %v2811 = vtanh.pop %v1787
        %v2812 = vtanh.pop %v1788
        %v2813 = vtanh.pop %v1789
        %v2814 = vtanh.pop %v1790
        %v2815 = vtanh.pop %v1791
        %v2816 = vtanh.pop %v1792
        %v2817 = vtanh.pop %v1793
        %v2818 = vtanh.pop %v1794
        %v2819 = vtanh.pop %v1795
        %v2820 = vtanh.pop %v1796
        %v2821 = vtanh.pop %v1797
        %v2822 = vtanh.pop %v1798
        %v2823 = vtanh.pop %v1799
        %v2824 = vtanh.pop %v1800
        %v2825 = vtanh.pop %v1801
        %v2826 = vtanh.pop %v1802
        %v2827 = vtanh.pop %v1803
        %v2828 = vtanh.pop %v1804
        %v2829 = vtanh.pop %v1805
        %v2830 = vtanh.pop %v1806
        %v2831 = vtanh.pop %v1807
        %v2832 = vtanh.pop %v1808
        %v2833 = vtanh.pop %v1809
        %v2834 = vtanh.pop %v1810
        %v2835 = vtanh.pop %v1811
        %v2836 = vtanh.pop %v1812
        %v2837 = vtanh.pop %v1813
        %v2838 = vtanh.pop %v1814
        %v2839 = vtanh.pop %v1815
        %v2840 = vtanh.pop %v1816
        %v2841 = vtanh.pop %v1817
        %v2842 = vtanh.pop %v1818
        %v2843 = vtanh.pop %v1819
        %v2844 = vtanh.pop %v1820
        %v2845 = vtanh.pop %v1821
        %v2846 = vtanh.pop %v1822
        %v2847 = vtanh.pop %v1823
        %v2848 = vtanh.pop %v1824
        %v2849 = vtanh.pop %v1825
        %v2850 = vtanh.pop %v1826
        %v2851 = vtanh.pop %v1827
        %v2852 = vtanh.pop %v1828
        %v2853 = vtanh.pop %v1829
        %v2854 = vtanh.pop %v1830
        %v2855 = vtanh.pop %v1831
        %v2856 = vtanh.pop %v1832
        %v2857 = vtanh.pop %v1833
        %v2858 = vtanh.pop %v1834
        %v2859 = vtanh.pop %v1835
        %v2860 = vtanh.pop %v1836
        %v2861 = vtanh.pop %v1837
        %v2862 = vtanh.pop %v1838
        %v2863 = vtanh.pop %v1839
        %v2864 = vtanh.pop %v1840
        %v2865 = vtanh.pop %v1841
        %v2866 = vtanh.pop %v1842
        %v2867 = vtanh.pop %v1843
        %v2868 = vtanh.pop %v1844
        %v2869 = vtanh.pop %v1845
        %v2870 = vtanh.pop %v1846
        %v2871 = vtanh.pop %v1847
        %v2872 = vtanh.pop %v1848
        %v2873 = vtanh.pop %v1849
        %v2874 = vtanh.pop %v1850
        %v2875 = vtanh.pop %v1851
        %v2876 = vtanh.pop %v1852
        %v2877 = vtanh.pop %v1853
        %v2878 = vtanh.pop %v1854
        %v2879 = vtanh.pop %v1855
        %v2880 = vtanh.pop %v1856
        %v2881 = vtanh.pop %v1857
        %v2882 = vtanh.pop %v1858
        %v2883 = vtanh.pop %v1859
        %v2884 = vtanh.pop %v1860
        %v2885 = vtanh.pop %v1861
        %v2886 = vtanh.pop %v1862
        %v2887 = vtanh.pop %v1863
        %v2888 = vtanh.pop %v1864
        %v2889 = vtanh.pop %v1865
        %v2890 = vtanh.pop %v1866
        %v2891 = vtanh.pop %v1867
        %v2892 = vtanh.pop %v1868
        %v2893 = vtanh.pop %v1869
        %v2894 = vtanh.pop %v1870
        %v2895 = vtanh.pop %v1871
        %v2896 = vtanh.pop %v1872
        %v2897 = vtanh.pop %v1873
        %v2898 = vtanh.pop %v1874
        %v2899 = vtanh.pop %v1875
        %v2900 = vtanh.pop %v1876
        %v2901 = vtanh.pop %v1877
        %v2902 = vtanh.pop %v1878
        %v2903 = vtanh.pop %v1879
        %v2904 = vtanh.pop %v1880
        %v2905 = vtanh.pop %v1881
        %v2906 = vtanh.pop %v1882
        %v2907 = vtanh.pop %v1883
        %v2908 = vtanh.pop %v1884
        %v2909 = vtanh.pop %v1885
        %v2910 = vtanh.pop %v1886
        %v2911 = vtanh.pop %v1887
        %v2912 = vtanh.pop %v1888
        %v2913 = vtanh.pop %v1889
        %v2914 = vtanh.pop %v1890
        %v2915 = vtanh.pop %v1891
        %v2916 = vtanh.pop %v1892
        %v2917 = vtanh.pop %v1893
        %v2918 = vtanh.pop %v1894
        %v2919 = vtanh.pop %v1895
        %v2920 = vtanh.pop %v1896
        %v2921 = vtanh.pop %v1897
        %v2922 = vtanh.pop %v1898
        %v2923 = vtanh.pop %v1899
        %v2924 = vtanh.pop %v1900
        %v2925 = vtanh.pop %v1901
        %v2926 = vtanh.pop %v1902
        %v2927 = vtanh.pop %v1903
        %v2928 = vtanh.pop %v1904
        %v2929 = vtanh.pop %v1905
        %v2930 = vtanh.pop %v1906
        %v2931 = vtanh.pop %v1907
        %v2932 = vtanh.pop %v1908
        %v2933 = vtanh.pop %v1909
        %v2934 = vtanh.pop %v1910
        %v2935 = vtanh.pop %v1911
        %v2936 = vtanh.pop %v1912
        %v2937 = vtanh.pop %v1913
        %v2938 = vtanh.pop %v1914
        %v2939 = vtanh.pop %v1915
        %v2940 = vtanh.pop %v1916
        %v2941 = vtanh.pop %v1917
        %v2942 = vtanh.pop %v1918
        %v2943 = vtanh.pop %v1919
        %v2944 = vtanh.pop %v1920
        %v2945 = vtanh.pop %v1921
        %v2946 = vtanh.pop %v1922
        %v2947 = vtanh.pop %v1923
        %v2948 = vtanh.pop %v1924
        %v2949 = vtanh.pop %v1925
        %v2950 = vtanh.pop %v1926
        %v2951 = vtanh.pop %v1927
        %v2952 = vtanh.pop %v1928
        %v2953 = vtanh.pop %v1929
        %v2954 = vtanh.pop %v1930
        %v2955 = vtanh.pop %v1931
        %v2956 = vtanh.pop %v1932
        %v2957 = vtanh.pop %v1933
        %v2958 = vtanh.pop %v1934
        %v2959 = vtanh.pop %v1935
        %v2960 = vtanh.pop %v1936
        %v2961 = vtanh.pop %v1937
        %v2962 = vtanh.pop %v1938
        %v2963 = vtanh.pop %v1939
        %v2964 = vtanh.pop %v1940
        %v2965 = vtanh.pop %v1941
        %v2966 = vtanh.pop %v1942
        %v2967 = vtanh.pop %v1943
        %v2968 = vtanh.pop %v1944
        %v2969 = vtanh.pop %v1945
        %v2970 = vtanh.pop %v1946
        %v2971 = vtanh.pop %v1947
        %v2972 = vtanh.pop %v1948
        %v2973 = vtanh.pop %v1949
        %v2974 = vtanh.pop %v1950
        %v2975 = vtanh.pop %v1951
        %v2976 = vtanh.pop %v1952
        %v2977 = vtanh.pop %v1953
        %v2978 = vtanh.pop %v1954
        %v2979 = vtanh.pop %v1955
        %v2980 = vtanh.pop %v1956
        %v2981 = vtanh.pop %v1957
        %v2982 = vtanh.pop %v1958
        %v2983 = vtanh.pop %v1959
        %v2984 = vtanh.pop %v1960
        %v2985 = vtanh.pop %v1961
        %v2986 = vtanh.pop %v1962
        %v2987 = vtanh.pop %v1963
        %v2988 = vtanh.pop %v1964
        %v2989 = vtanh.pop %v1965
        %v2990 = vtanh.pop %v1966
        %v2991 = vtanh.pop %v1967
        %v2992 = vtanh.pop %v1968
        %v2993 = vtanh.pop %v1969
        %v2994 = vtanh.pop %v1970
        %v2995 = vtanh.pop %v1971
        %v2996 = vtanh.pop %v1972
        %v2997 = vtanh.pop %v1973
        %v2998 = vtanh.pop %v1974
        %v2999 = vtanh.pop %v1975
        %v3000 = vtanh.pop %v1976
        %v3001 = vtanh.pop %v1977
        %v3002 = vtanh.pop %v1978
        %v3003 = vtanh.pop %v1979
        %v3004 = vtanh.pop %v1980
        %v3005 = vtanh.pop %v1981
        %v3006 = vtanh.pop %v1982
        %v3007 = vtanh.pop %v1983
        %v3008 = vtanh.pop %v1984
        %v3009 = vtanh.pop %v1985
        %v3010 = vtanh.pop %v1986
        %v3011 = vtanh.pop %v1987
        %v3012 = vtanh.pop %v1988
        %v3013 = vtanh.pop %v1989
        %v3014 = vtanh.pop %v1990
        %v3015 = vtanh.pop %v1991
        %v3016 = vtanh.pop %v1992
        %v3017 = vtanh.pop %v1993
        %v3018 = vtanh.pop %v1994
        %v3019 = vtanh.pop %v1995
        %v3020 = vtanh.pop %v1996
        %v3021 = vtanh.pop %v1997
        %v3022 = vtanh.pop %v1998
        %v3023 = vtanh.pop %v1999
        %v3024 = vtanh.pop %v2000
        %v3025 = vtanh.pop %v2001
        %v3026 = vtanh.pop %v2002
        %v3027 = vtanh.pop %v2003
        %v3028 = vtanh.pop %v2004
        %v3029 = vtanh.pop %v2005
        %v3030 = vtanh.pop %v2006
        %v3031 = vtanh.pop %v2007
        %v3032 = vtanh.pop %v2008
        %v3033 = vtanh.pop %v2009
        %v3034 = vtanh.pop %v2010
        %v3035 = vtanh.pop %v2011
        %v3036 = vtanh.pop %v2012
        %v3037 = vtanh.pop %v2013
        %v3038 = vtanh.pop %v2014
        %v3039 = vtanh.pop %v2015
        %v3040 = vtanh.pop %v2016
        %v3041 = vtanh.pop %v2017
        %v3042 = vtanh.pop %v2018
        %v3043 = vtanh.pop %v2019
        %v3044 = vtanh.pop %v2020
        %v3045 = vtanh.pop %v2021
        %v3046 = vtanh.pop %v2022
        %v3047 = vtanh.pop %v2023
        %v3048 = vtanh.pop %v2024
        %v3049 = vtanh.pop %v2025
        %v3050 = vtanh.pop %v2026
        %v3051 = vtanh.pop %v2027
        %v3052 = vtanh.pop %v2028
        %v3053 = vtanh.pop %v2029
        %v3054 = vtanh.pop %v2030
        %v3055 = vtanh.pop %v2031
        %v3056 = vtanh.pop %v2032
        %v3057 = vtanh.pop %v2033
        %v3058 = vtanh.pop %v2034
        %v3059 = vtanh.pop %v2035
        %v3060 = vtanh.pop %v2036
        %v3061 = vtanh.pop %v2037
        %v3062 = vtanh.pop %v2038
        %v3063 = vtanh.pop %v2039
        %v3064 = vtanh.pop %v2040
        %v3065 = vtanh.pop %v2041
        %v3066 = vtanh.pop %v2042
        %v3067 = vtanh.pop %v2043
        %v3068 = vtanh.pop %v2044
        %v3069 = vtanh.pop %v2045
        %v3070 = vtanh.pop %v2046
        %v3071 = vtanh.pop %v2047
        %v3072 = vtanh.pop %v2048
        %v3073 = vtanh.pop %v2049
        %v3074 = vtanh.pop %v2050
        %v3075 = vtanh.pop %v2051
        %v3076 = vtanh.pop %v2052
        %v3077 = vtanh.pop %v2053
        %v3078 = vtanh.pop %v2054
        %v3079 = vtanh.pop %v2055
        %v3080 = vtanh.pop %v2056
        %v3081 = vtanh.pop %v2057
        %v3082 = vtanh.pop %v2058
        %v3083 = vtanh.pop %v2059
        %v3084 = vtanh.pop %v2060
        %v3085 = vtanh.pop %v2061
        %v3086 = vtanh.pop %v2062
        %v3087 = vtanh.pop %v2063
        %v3088 = vtanh.pop %v2064
        %v3089 = vtanh.pop %v2065
        %v3090 = vtanh.pop %v2066
        %v3091 = vtanh.pop %v2067
        %v3092 = vtanh.pop %v2068
        %v3093 = vtanh.pop %v2069
        %v3094 = vtanh.pop %v2070
        %v3095 = vtanh.pop %v2071
        %v3096 = vtanh.pop %v2072
        %v3097 = vtanh.pop %v2073
        %v3098 = vtanh.pop %v2074
        %v3099 = vtanh.pop %v2075
        %v3100 = vtanh.pop %v2076
        %v3101 = vtanh.pop %v2077
        %v3102 = vtanh.pop %v2078
        %v3103 = vtanh.pop %v2079
        %v3104 = vtanh.pop %v2080
        %v3105 = vtanh.pop %v2081
        %v3106 = vtanh.pop %v2082
        %v3107 = vtanh.pop %v2083
        %v3108 = vtanh.pop %v2084
        %v3109 = vtanh.pop %v2085
        %v3110 = vtanh.pop %v2086
        %v3111 = vtanh.pop %v2087
        %v3112 = vtanh.pop %v2088
        %v3113 = vtanh.pop %v2089
        %v3114 = vtanh.pop %v2090
        %v3115 = vtanh.pop %v2091
        %v3116 = vtanh.pop %v2092
        %v3117 = vtanh.pop %v2093
        %v3118 = vtanh.pop %v2094
        %v3119 = vtanh.pop %v2095
        %v3120 = vtanh.pop %v2096
        %v3121 = vtanh.pop %v2097
        %v3122 = vtanh.pop %v2098
        %v3123 = vtanh.pop %v2099
        %v3124 = vtanh.pop %v2100
        %v3125 = vtanh.pop %v2101
        %v3126 = vtanh.pop %v2102
        %v3127 = vtanh.pop %v2103
        %v3128 = vtanh.pop %v2104
        %v3129 = vtanh.pop %v2105
        %v3130 = vtanh.pop %v2106
        %v3131 = vtanh.pop %v2107
        %v3132 = vtanh.pop %v2108
        %v3133 = vtanh.pop %v2109
        %v3134 = vtanh.pop %v2110
        %v3135 = vtanh.pop %v2111
        %v3136 = vtanh.pop %v2112
        %v3137 = vtanh.pop %v2113
        %v3138 = vtanh.pop %v2114
        %v3139 = vtanh.pop %v2115
        %v3140 = vtanh.pop %v2116
        %v3141 = vtanh.pop %v2117
        %v3142 = vtanh.pop %v2118
        %v3143 = vtanh.pop %v2119
        %v3144 = vtanh.pop %v2120
        %v3145 = vtanh.pop %v2121
        %v3146 = vtanh.pop %v2122
        %v3147 = vtanh.pop %v2123
        %v3148 = vtanh.pop %v2124
        %v3149 = vtanh.pop %v2125
        %v3150 = vtanh.pop %v2126
        %v3151 = vtanh.pop %v2127
        %v3152 = vtanh.pop %v2128
        %v3153 = vtanh.pop %v2129
        %v3154 = vtanh.pop %v2130
        %v3155 = vtanh.pop %v2131
        %v3156 = vtanh.pop %v2132
        %v3157 = vtanh.pop %v2133
        %v3158 = vtanh.pop %v2134
        %v3159 = vtanh.pop %v2135
        %v3160 = vtanh.pop %v2136
        %v3161 = vtanh.pop %v2137
        %v3162 = vtanh.pop %v2138
        %v3163 = vtanh.pop %v2139
        %v3164 = vtanh.pop %v2140
        %v3165 = vtanh.pop %v2141
        %v3166 = vtanh.pop %v2142
        %v3167 = vtanh.pop %v2143
        %v3168 = vtanh.pop %v2144
        %v3169 = vtanh.pop %v2145
        %v3170 = vtanh.pop %v2146
        %v3171 = vtanh.pop %v2147
        %v3172 = vtanh.pop %v2148
        %v3173 = vtanh.pop %v2149
        %v3174 = vtanh.pop %v2150
        %v3175 = vtanh.pop %v2151
        %v3176 = vtanh.pop %v2152
        %v3177 = vtanh.pop %v2153
        %v3178 = vtanh.pop %v2154
        %v3179 = vtanh.pop %v2155
        %v3180 = vtanh.pop %v2156
        %v3181 = vtanh.pop %v2157
        %v3182 = vtanh.pop %v2158
        %v3183 = vtanh.pop %v2159
        %v3184 = vtanh.pop %v2160
        %v3185 = vtanh.pop %v2161
        %v3186 = vtanh.pop %v2162
        %v3187 = vtanh.pop %v2163
        %v3188 = vtanh.pop %v2164
        %v3189 = vtanh.pop %v2165
        %v3190 = vtanh.pop %v2166
        %v3191 = vtanh.pop %v2167
        %v3192 = vtanh.pop %v2168
        %v3193 = vtanh.pop %v2169
        %v3194 = vtanh.pop %v2170
        %v3195 = vtanh.pop %v2171
        %v3196 = vtanh.pop %v2172
        %v3197 = vtanh.pop %v2173
        %v3198 = vtanh.pop %v2174
        %v3199 = vtanh.pop %v2175
        %v3200 = vtanh.pop %v2176
        %v3201 = vtanh.pop %v2177
        %v3202 = vtanh.pop %v2178
        %v3203 = vtanh.pop %v2179
        %v3204 = vtanh.pop %v2180
        %v3205 = vtanh.pop %v2181
        %v3206 = vtanh.pop %v2182
        %v3207 = vtanh.pop %v2183
        %v3208 = vtanh.pop %v2184
        %v3209 = vtanh.pop %v2185
        %v3210 = vadd.f32 %v2186, 1.0
        %v3211 = vadd.f32 %v2187, 1.0
        %v3212 = vadd.f32 %v2188, 1.0
        %v3213 = vadd.f32 %v2189, 1.0
        %v3214 = vadd.f32 %v2190, 1.0
        %v3215 = vadd.f32 %v2191, 1.0
        %v3216 = vadd.f32 %v2192, 1.0
        %v3217 = vadd.f32 %v2193, 1.0
        %v3218 = vadd.f32 %v2194, 1.0
        %v3219 = vadd.f32 %v2195, 1.0
        %v3220 = vadd.f32 %v2196, 1.0
        %v3221 = vadd.f32 %v2197, 1.0
        %v3222 = vadd.f32 %v2198, 1.0
        %v3223 = vadd.f32 %v2199, 1.0
        %v3224 = vadd.f32 %v2200, 1.0
        %v3225 = vadd.f32 %v2201, 1.0
        %v3226 = vadd.f32 %v2202, 1.0
        %v3227 = vadd.f32 %v2203, 1.0
        %v3228 = vadd.f32 %v2204, 1.0
        %v3229 = vadd.f32 %v2205, 1.0
        %v3230 = vadd.f32 %v2206, 1.0
        %v3231 = vadd.f32 %v2207, 1.0
        %v3232 = vadd.f32 %v2208, 1.0
        %v3233 = vadd.f32 %v2209, 1.0
        %v3234 = vadd.f32 %v2210, 1.0
        %v3235 = vadd.f32 %v2211, 1.0
        %v3236 = vadd.f32 %v2212, 1.0
        %v3237 = vadd.f32 %v2213, 1.0
        %v3238 = vadd.f32 %v2214, 1.0
        %v3239 = vadd.f32 %v2215, 1.0
        %v3240 = vadd.f32 %v2216, 1.0
        %v3241 = vadd.f32 %v2217, 1.0
        %v3242 = vadd.f32 %v2218, 1.0
        %v3243 = vadd.f32 %v2219, 1.0
        %v3244 = vadd.f32 %v2220, 1.0
        %v3245 = vadd.f32 %v2221, 1.0
        %v3246 = vadd.f32 %v2222, 1.0
        %v3247 = vadd.f32 %v2223, 1.0
        %v3248 = vadd.f32 %v2224, 1.0
        %v3249 = vadd.f32 %v2225, 1.0
        %v3250 = vadd.f32 %v2226, 1.0
        %v3251 = vadd.f32 %v2227, 1.0
        %v3252 = vadd.f32 %v2228, 1.0
        %v3253 = vadd.f32 %v2229, 1.0
        %v3254 = vadd.f32 %v2230, 1.0
        %v3255 = vadd.f32 %v2231, 1.0
        %v3256 = vadd.f32 %v2232, 1.0
        %v3257 = vadd.f32 %v2233, 1.0
        %v3258 = vadd.f32 %v2234, 1.0
        %v3259 = vadd.f32 %v2235, 1.0
        %v3260 = vadd.f32 %v2236, 1.0
        %v3261 = vadd.f32 %v2237, 1.0
        %v3262 = vadd.f32 %v2238, 1.0
        %v3263 = vadd.f32 %v2239, 1.0
        %v3264 = vadd.f32 %v2240, 1.0
        %v3265 = vadd.f32 %v2241, 1.0
        %v3266 = vadd.f32 %v2242, 1.0
        %v3267 = vadd.f32 %v2243, 1.0
        %v3268 = vadd.f32 %v2244, 1.0
        %v3269 = vadd.f32 %v2245, 1.0
        %v3270 = vadd.f32 %v2246, 1.0
        %v3271 = vadd.f32 %v2247, 1.0
        %v3272 = vadd.f32 %v2248, 1.0
        %v3273 = vadd.f32 %v2249, 1.0
        %v3274 = vadd.f32 %v2250, 1.0
        %v3275 = vadd.f32 %v2251, 1.0
        %v3276 = vadd.f32 %v2252, 1.0
        %v3277 = vadd.f32 %v2253, 1.0
        %v3278 = vadd.f32 %v2254, 1.0
        %v3279 = vadd.f32 %v2255, 1.0
        %v3280 = vadd.f32 %v2256, 1.0
        %v3281 = vadd.f32 %v2257, 1.0
        %v3282 = vadd.f32 %v2258, 1.0
        %v3283 = vadd.f32 %v2259, 1.0
        %v3284 = vadd.f32 %v2260, 1.0
        %v3285 = vadd.f32 %v2261, 1.0
        %v3286 = vadd.f32 %v2262, 1.0
        %v3287 = vadd.f32 %v2263, 1.0
        %v3288 = vadd.f32 %v2264, 1.0
        %v3289 = vadd.f32 %v2265, 1.0
        %v3290 = vadd.f32 %v2266, 1.0
        %v3291 = vadd.f32 %v2267, 1.0
        %v3292 = vadd.f32 %v2268, 1.0
        %v3293 = vadd.f32 %v2269, 1.0
        %v3294 = vadd.f32 %v2270, 1.0
        %v3295 = vadd.f32 %v2271, 1.0
        %v3296 = vadd.f32 %v2272, 1.0
        %v3297 = vadd.f32 %v2273, 1.0
        %v3298 = vadd.f32 %v2274, 1.0
        %v3299 = vadd.f32 %v2275, 1.0
        %v3300 = vadd.f32 %v2276, 1.0
        %v3301 = vadd.f32 %v2277, 1.0
        %v3302 = vadd.f32 %v2278, 1.0
        %v3303 = vadd.f32 %v2279, 1.0
        %v3304 = vadd.f32 %v2280, 1.0
        %v3305 = vadd.f32 %v2281, 1.0
        %v3306 = vadd.f32 %v2282, 1.0
        %v3307 = vadd.f32 %v2283, 1.0
        %v3308 = vadd.f32 %v2284, 1.0
        %v3309 = vadd.f32 %v2285, 1.0
        %v3310 = vadd.f32 %v2286, 1.0
        %v3311 = vadd.f32 %v2287, 1.0
        %v3312 = vadd.f32 %v2288, 1.0
        %v3313 = vadd.f32 %v2289, 1.0
        %v3314 = vadd.f32 %v2290, 1.0
        %v3315 = vadd.f32 %v2291, 1.0
        %v3316 = vadd.f32 %v2292, 1.0
        %v3317 = vadd.f32 %v2293, 1.0
        %v3318 = vadd.f32 %v2294, 1.0
        %v3319 = vadd.f32 %v2295, 1.0
        %v3320 = vadd.f32 %v2296, 1.0
        %v3321 = vadd.f32 %v2297, 1.0
        %v3322 = vadd.f32 %v2298, 1.0
        %v3323 = vadd.f32 %v2299, 1.0
        %v3324 = vadd.f32 %v2300, 1.0
        %v3325 = vadd.f32 %v2301, 1.0
        %v3326 = vadd.f32 %v2302, 1.0
        %v3327 = vadd.f32 %v2303, 1.0
        %v3328 = vadd.f32 %v2304, 1.0
        %v3329 = vadd.f32 %v2305, 1.0
        %v3330 = vadd.f32 %v2306, 1.0
        %v3331 = vadd.f32 %v2307, 1.0
        %v3332 = vadd.f32 %v2308, 1.0
        %v3333 = vadd.f32 %v2309, 1.0
        %v3334 = vadd.f32 %v2310, 1.0
        %v3335 = vadd.f32 %v2311, 1.0
        %v3336 = vadd.f32 %v2312, 1.0
        %v3337 = vadd.f32 %v2313, 1.0
        %v3338 = vadd.f32 %v2314, 1.0
        %v3339 = vadd.f32 %v2315, 1.0
        %v3340 = vadd.f32 %v2316, 1.0
        %v3341 = vadd.f32 %v2317, 1.0
        %v3342 = vadd.f32 %v2318, 1.0
        %v3343 = vadd.f32 %v2319, 1.0
        %v3344 = vadd.f32 %v2320, 1.0
        %v3345 = vadd.f32 %v2321, 1.0
        %v3346 = vadd.f32 %v2322, 1.0
        %v3347 = vadd.f32 %v2323, 1.0
        %v3348 = vadd.f32 %v2324, 1.0
        %v3349 = vadd.f32 %v2325, 1.0
        %v3350 = vadd.f32 %v2326, 1.0
        %v3351 = vadd.f32 %v2327, 1.0
        %v3352 = vadd.f32 %v2328, 1.0
        %v3353 = vadd.f32 %v2329, 1.0
        %v3354 = vadd.f32 %v2330, 1.0
        %v3355 = vadd.f32 %v2331, 1.0
        %v3356 = vadd.f32 %v2332, 1.0
        %v3357 = vadd.f32 %v2333, 1.0
        %v3358 = vadd.f32 %v2334, 1.0
        %v3359 = vadd.f32 %v2335, 1.0
        %v3360 = vadd.f32 %v2336, 1.0
        %v3361 = vadd.f32 %v2337, 1.0
        %v3362 = vadd.f32 %v2338, 1.0
        %v3363 = vadd.f32 %v2339, 1.0
        %v3364 = vadd.f32 %v2340, 1.0
        %v3365 = vadd.f32 %v2341, 1.0
        %v3366 = vadd.f32 %v2342, 1.0
        %v3367 = vadd.f32 %v2343, 1.0
        %v3368 = vadd.f32 %v2344, 1.0
        %v3369 = vadd.f32 %v2345, 1.0
        %v3370 = vadd.f32 %v2346, 1.0
        %v3371 = vadd.f32 %v2347, 1.0
        %v3372 = vadd.f32 %v2348, 1.0
        %v3373 = vadd.f32 %v2349, 1.0
        %v3374 = vadd.f32 %v2350, 1.0
        %v3375 = vadd.f32 %v2351, 1.0
        %v3376 = vadd.f32 %v2352, 1.0
        %v3377 = vadd.f32 %v2353, 1.0
        %v3378 = vadd.f32 %v2354, 1.0
        %v3379 = vadd.f32 %v2355, 1.0
        %v3380 = vadd.f32 %v2356, 1.0
        %v3381 = vadd.f32 %v2357, 1.0
        %v3382 = vadd.f32 %v2358, 1.0
        %v3383 = vadd.f32 %v2359, 1.0
        %v3384 = vadd.f32 %v2360, 1.0
        %v3385 = vadd.f32 %v2361, 1.0
        %v3386 = vadd.f32 %v2362, 1.0
        %v3387 = vadd.f32 %v2363, 1.0
        %v3388 = vadd.f32 %v2364, 1.0
        %v3389 = vadd.f32 %v2365, 1.0
        %v3390 = vadd.f32 %v2366, 1.0
        %v3391 = vadd.f32 %v2367, 1.0
        %v3392 = vadd.f32 %v2368, 1.0
        %v3393 = vadd.f32 %v2369, 1.0
        %v3394 = vadd.f32 %v2370, 1.0
        %v3395 = vadd.f32 %v2371, 1.0
        %v3396 = vadd.f32 %v2372, 1.0
        %v3397 = vadd.f32 %v2373, 1.0
        %v3398 = vadd.f32 %v2374, 1.0
        %v3399 = vadd.f32 %v2375, 1.0
        %v3400 = vadd.f32 %v2376, 1.0
        %v3401 = vadd.f32 %v2377, 1.0
        %v3402 = vadd.f32 %v2378, 1.0
        %v3403 = vadd.f32 %v2379, 1.0
        %v3404 = vadd.f32 %v2380, 1.0
        %v3405 = vadd.f32 %v2381, 1.0
        %v3406 = vadd.f32 %v2382, 1.0
        %v3407 = vadd.f32 %v2383, 1.0
        %v3408 = vadd.f32 %v2384, 1.0
        %v3409 = vadd.f32 %v2385, 1.0
        %v3410 = vadd.f32 %v2386, 1.0
        %v3411 = vadd.f32 %v2387, 1.0
        %v3412 = vadd.f32 %v2388, 1.0
        %v3413 = vadd.f32 %v2389, 1.0
        %v3414 = vadd.f32 %v2390, 1.0
        %v3415 = vadd.f32 %v2391, 1.0
        %v3416 = vadd.f32 %v2392, 1.0
        %v3417 = vadd.f32 %v2393, 1.0
        %v3418 = vadd.f32 %v2394, 1.0
        %v3419 = vadd.f32 %v2395, 1.0
        %v3420 = vadd.f32 %v2396, 1.0
        %v3421 = vadd.f32 %v2397, 1.0
        %v3422 = vadd.f32 %v2398, 1.0
        %v3423 = vadd.f32 %v2399, 1.0
        %v3424 = vadd.f32 %v2400, 1.0
        %v3425 = vadd.f32 %v2401, 1.0
        %v3426 = vadd.f32 %v2402, 1.0
        %v3427 = vadd.f32 %v2403, 1.0
        %v3428 = vadd.f32 %v2404, 1.0
        %v3429 = vadd.f32 %v2405, 1.0
        %v3430 = vadd.f32 %v2406, 1.0
        %v3431 = vadd.f32 %v2407, 1.0
        %v3432 = vadd.f32 %v2408, 1.0
        %v3433 = vadd.f32 %v2409, 1.0
        %v3434 = vadd.f32 %v2410, 1.0
        %v3435 = vadd.f32 %v2411, 1.0
        %v3436 = vadd.f32 %v2412, 1.0
        %v3437 = vadd.f32 %v2413, 1.0
        %v3438 = vadd.f32 %v2414, 1.0
        %v3439 = vadd.f32 %v2415, 1.0
        %v3440 = vadd.f32 %v2416, 1.0
        %v3441 = vadd.f32 %v2417, 1.0
        %v3442 = vadd.f32 %v2418, 1.0
        %v3443 = vadd.f32 %v2419, 1.0
        %v3444 = vadd.f32 %v2420, 1.0
        %v3445 = vadd.f32 %v2421, 1.0
        %v3446 = vadd.f32 %v2422, 1.0
        %v3447 = vadd.f32 %v2423, 1.0
        %v3448 = vadd.f32 %v2424, 1.0
        %v3449 = vadd.f32 %v2425, 1.0
        %v3450 = vadd.f32 %v2426, 1.0
        %v3451 = vadd.f32 %v2427, 1.0
        %v3452 = vadd.f32 %v2428, 1.0
        %v3453 = vadd.f32 %v2429, 1.0
        %v3454 = vadd.f32 %v2430, 1.0
        %v3455 = vadd.f32 %v2431, 1.0
        %v3456 = vadd.f32 %v2432, 1.0
        %v3457 = vadd.f32 %v2433, 1.0
        %v3458 = vadd.f32 %v2434, 1.0
        %v3459 = vadd.f32 %v2435, 1.0
        %v3460 = vadd.f32 %v2436, 1.0
        %v3461 = vadd.f32 %v2437, 1.0
        %v3462 = vadd.f32 %v2438, 1.0
        %v3463 = vadd.f32 %v2439, 1.0
        %v3464 = vadd.f32 %v2440, 1.0
        %v3465 = vadd.f32 %v2441, 1.0
        %v3466 = vadd.f32 %v2442, 1.0
        %v3467 = vadd.f32 %v2443, 1.0
        %v3468 = vadd.f32 %v2444, 1.0
        %v3469 = vadd.f32 %v2445, 1.0
        %v3470 = vadd.f32 %v2446, 1.0
        %v3471 = vadd.f32 %v2447, 1.0
        %v3472 = vadd.f32 %v2448, 1.0
        %v3473 = vadd.f32 %v2449, 1.0
        %v3474 = vadd.f32 %v2450, 1.0
        %v3475 = vadd.f32 %v2451, 1.0
        %v3476 = vadd.f32 %v2452, 1.0
        %v3477 = vadd.f32 %v2453, 1.0
        %v3478 = vadd.f32 %v2454, 1.0
        %v3479 = vadd.f32 %v2455, 1.0
        %v3480 = vadd.f32 %v2456, 1.0
        %v3481 = vadd.f32 %v2457, 1.0
        %v3482 = vadd.f32 %v2458, 1.0
        %v3483 = vadd.f32 %v2459, 1.0
        %v3484 = vadd.f32 %v2460, 1.0
        %v3485 = vadd.f32 %v2461, 1.0
        %v3486 = vadd.f32 %v2462, 1.0
        %v3487 = vadd.f32 %v2463, 1.0
        %v3488 = vadd.f32 %v2464, 1.0
        %v3489 = vadd.f32 %v2465, 1.0
        %v3490 = vadd.f32 %v2466, 1.0
        %v3491 = vadd.f32 %v2467, 1.0
        %v3492 = vadd.f32 %v2468, 1.0
        %v3493 = vadd.f32 %v2469, 1.0
        %v3494 = vadd.f32 %v2470, 1.0
        %v3495 = vadd.f32 %v2471, 1.0
        %v3496 = vadd.f32 %v2472, 1.0
        %v3497 = vadd.f32 %v2473, 1.0
        %v3498 = vadd.f32 %v2474, 1.0
        %v3499 = vadd.f32 %v2475, 1.0
        %v3500 = vadd.f32 %v2476, 1.0
        %v3501 = vadd.f32 %v2477, 1.0
        %v3502 = vadd.f32 %v2478, 1.0
        %v3503 = vadd.f32 %v2479, 1.0
        %v3504 = vadd.f32 %v2480, 1.0
        %v3505 = vadd.f32 %v2481, 1.0
        %v3506 = vadd.f32 %v2482, 1.0
        %v3507 = vadd.f32 %v2483, 1.0
        %v3508 = vadd.f32 %v2484, 1.0
        %v3509 = vadd.f32 %v2485, 1.0
        %v3510 = vadd.f32 %v2486, 1.0
        %v3511 = vadd.f32 %v2487, 1.0
        %v3512 = vadd.f32 %v2488, 1.0
        %v3513 = vadd.f32 %v2489, 1.0
        %v3514 = vadd.f32 %v2490, 1.0
        %v3515 = vadd.f32 %v2491, 1.0
        %v3516 = vadd.f32 %v2492, 1.0
        %v3517 = vadd.f32 %v2493, 1.0
        %v3518 = vadd.f32 %v2494, 1.0
        %v3519 = vadd.f32 %v2495, 1.0
        %v3520 = vadd.f32 %v2496, 1.0
        %v3521 = vadd.f32 %v2497, 1.0
        %v3522 = vadd.f32 %v2498, 1.0
        %v3523 = vadd.f32 %v2499, 1.0
        %v3524 = vadd.f32 %v2500, 1.0
        %v3525 = vadd.f32 %v2501, 1.0
        %v3526 = vadd.f32 %v2502, 1.0
        %v3527 = vadd.f32 %v2503, 1.0
        %v3528 = vadd.f32 %v2504, 1.0
        %v3529 = vadd.f32 %v2505, 1.0
        %v3530 = vadd.f32 %v2506, 1.0
        %v3531 = vadd.f32 %v2507, 1.0
        %v3532 = vadd.f32 %v2508, 1.0
        %v3533 = vadd.f32 %v2509, 1.0
        %v3534 = vadd.f32 %v2510, 1.0
        %v3535 = vadd.f32 %v2511, 1.0
        %v3536 = vadd.f32 %v2512, 1.0
        %v3537 = vadd.f32 %v2513, 1.0
        %v3538 = vadd.f32 %v2514, 1.0
        %v3539 = vadd.f32 %v2515, 1.0
        %v3540 = vadd.f32 %v2516, 1.0
        %v3541 = vadd.f32 %v2517, 1.0
        %v3542 = vadd.f32 %v2518, 1.0
        %v3543 = vadd.f32 %v2519, 1.0
        %v3544 = vadd.f32 %v2520, 1.0
        %v3545 = vadd.f32 %v2521, 1.0
        %v3546 = vadd.f32 %v2522, 1.0
        %v3547 = vadd.f32 %v2523, 1.0
        %v3548 = vadd.f32 %v2524, 1.0
        %v3549 = vadd.f32 %v2525, 1.0
        %v3550 = vadd.f32 %v2526, 1.0
        %v3551 = vadd.f32 %v2527, 1.0
        %v3552 = vadd.f32 %v2528, 1.0
        %v3553 = vadd.f32 %v2529, 1.0
        %v3554 = vadd.f32 %v2530, 1.0
        %v3555 = vadd.f32 %v2531, 1.0
        %v3556 = vadd.f32 %v2532, 1.0
        %v3557 = vadd.f32 %v2533, 1.0
        %v3558 = vadd.f32 %v2534, 1.0
        %v3559 = vadd.f32 %v2535, 1.0
        %v3560 = vadd.f32 %v2536, 1.0
        %v3561 = vadd.f32 %v2537, 1.0
        %v3562 = vadd.f32 %v2538, 1.0
        %v3563 = vadd.f32 %v2539, 1.0
        %v3564 = vadd.f32 %v2540, 1.0
        %v3565 = vadd.f32 %v2541, 1.0
        %v3566 = vadd.f32 %v2542, 1.0
        %v3567 = vadd.f32 %v2543, 1.0
        %v3568 = vadd.f32 %v2544, 1.0
        %v3569 = vadd.f32 %v2545, 1.0
        %v3570 = vadd.f32 %v2546, 1.0
        %v3571 = vadd.f32 %v2547, 1.0
        %v3572 = vadd.f32 %v2548, 1.0
        %v3573 = vadd.f32 %v2549, 1.0
        %v3574 = vadd.f32 %v2550, 1.0
        %v3575 = vadd.f32 %v2551, 1.0
        %v3576 = vadd.f32 %v2552, 1.0
        %v3577 = vadd.f32 %v2553, 1.0
        %v3578 = vadd.f32 %v2554, 1.0
        %v3579 = vadd.f32 %v2555, 1.0
        %v3580 = vadd.f32 %v2556, 1.0
        %v3581 = vadd.f32 %v2557, 1.0
        %v3582 = vadd.f32 %v2558, 1.0
        %v3583 = vadd.f32 %v2559, 1.0
        %v3584 = vadd.f32 %v2560, 1.0
        %v3585 = vadd.f32 %v2561, 1.0
        %v3586 = vadd.f32 %v2562, 1.0
        %v3587 = vadd.f32 %v2563, 1.0
        %v3588 = vadd.f32 %v2564, 1.0
        %v3589 = vadd.f32 %v2565, 1.0
        %v3590 = vadd.f32 %v2566, 1.0
        %v3591 = vadd.f32 %v2567, 1.0
        %v3592 = vadd.f32 %v2568, 1.0
        %v3593 = vadd.f32 %v2569, 1.0
        %v3594 = vadd.f32 %v2570, 1.0
        %v3595 = vadd.f32 %v2571, 1.0
        %v3596 = vadd.f32 %v2572, 1.0
        %v3597 = vadd.f32 %v2573, 1.0
        %v3598 = vadd.f32 %v2574, 1.0
        %v3599 = vadd.f32 %v2575, 1.0
        %v3600 = vadd.f32 %v2576, 1.0
        %v3601 = vadd.f32 %v2577, 1.0
        %v3602 = vadd.f32 %v2578, 1.0
        %v3603 = vadd.f32 %v2579, 1.0
        %v3604 = vadd.f32 %v2580, 1.0
        %v3605 = vadd.f32 %v2581, 1.0
        %v3606 = vadd.f32 %v2582, 1.0
        %v3607 = vadd.f32 %v2583, 1.0
        %v3608 = vadd.f32 %v2584, 1.0
        %v3609 = vadd.f32 %v2585, 1.0
        %v3610 = vadd.f32 %v2586, 1.0
        %v3611 = vadd.f32 %v2587, 1.0
        %v3612 = vadd.f32 %v2588, 1.0
        %v3613 = vadd.f32 %v2589, 1.0
        %v3614 = vadd.f32 %v2590, 1.0
        %v3615 = vadd.f32 %v2591, 1.0
        %v3616 = vadd.f32 %v2592, 1.0
        %v3617 = vadd.f32 %v2593, 1.0
        %v3618 = vadd.f32 %v2594, 1.0
        %v3619 = vadd.f32 %v2595, 1.0
        %v3620 = vadd.f32 %v2596, 1.0
        %v3621 = vadd.f32 %v2597, 1.0
        %v3622 = vadd.f32 %v2598, 1.0
        %v3623 = vadd.f32 %v2599, 1.0
        %v3624 = vadd.f32 %v2600, 1.0
        %v3625 = vadd.f32 %v2601, 1.0
        %v3626 = vadd.f32 %v2602, 1.0
        %v3627 = vadd.f32 %v2603, 1.0
        %v3628 = vadd.f32 %v2604, 1.0
        %v3629 = vadd.f32 %v2605, 1.0
        %v3630 = vadd.f32 %v2606, 1.0
        %v3631 = vadd.f32 %v2607, 1.0
        %v3632 = vadd.f32 %v2608, 1.0
        %v3633 = vadd.f32 %v2609, 1.0
        %v3634 = vadd.f32 %v2610, 1.0
        %v3635 = vadd.f32 %v2611, 1.0
        %v3636 = vadd.f32 %v2612, 1.0
        %v3637 = vadd.f32 %v2613, 1.0
        %v3638 = vadd.f32 %v2614, 1.0
        %v3639 = vadd.f32 %v2615, 1.0
        %v3640 = vadd.f32 %v2616, 1.0
        %v3641 = vadd.f32 %v2617, 1.0
        %v3642 = vadd.f32 %v2618, 1.0
        %v3643 = vadd.f32 %v2619, 1.0
        %v3644 = vadd.f32 %v2620, 1.0
        %v3645 = vadd.f32 %v2621, 1.0
        %v3646 = vadd.f32 %v2622, 1.0
        %v3647 = vadd.f32 %v2623, 1.0
        %v3648 = vadd.f32 %v2624, 1.0
        %v3649 = vadd.f32 %v2625, 1.0
        %v3650 = vadd.f32 %v2626, 1.0
        %v3651 = vadd.f32 %v2627, 1.0
        %v3652 = vadd.f32 %v2628, 1.0
        %v3653 = vadd.f32 %v2629, 1.0
        %v3654 = vadd.f32 %v2630, 1.0
        %v3655 = vadd.f32 %v2631, 1.0
        %v3656 = vadd.f32 %v2632, 1.0
        %v3657 = vadd.f32 %v2633, 1.0
        %v3658 = vadd.f32 %v2634, 1.0
        %v3659 = vadd.f32 %v2635, 1.0
        %v3660 = vadd.f32 %v2636, 1.0
        %v3661 = vadd.f32 %v2637, 1.0
        %v3662 = vadd.f32 %v2638, 1.0
        %v3663 = vadd.f32 %v2639, 1.0
        %v3664 = vadd.f32 %v2640, 1.0
        %v3665 = vadd.f32 %v2641, 1.0
        %v3666 = vadd.f32 %v2642, 1.0
        %v3667 = vadd.f32 %v2643, 1.0
        %v3668 = vadd.f32 %v2644, 1.0
        %v3669 = vadd.f32 %v2645, 1.0
        %v3670 = vadd.f32 %v2646, 1.0
        %v3671 = vadd.f32 %v2647, 1.0
        %v3672 = vadd.f32 %v2648, 1.0
        %v3673 = vadd.f32 %v2649, 1.0
        %v3674 = vadd.f32 %v2650, 1.0
        %v3675 = vadd.f32 %v2651, 1.0
        %v3676 = vadd.f32 %v2652, 1.0
        %v3677 = vadd.f32 %v2653, 1.0
        %v3678 = vadd.f32 %v2654, 1.0
        %v3679 = vadd.f32 %v2655, 1.0
        %v3680 = vadd.f32 %v2656, 1.0
        %v3681 = vadd.f32 %v2657, 1.0
        %v3682 = vadd.f32 %v2658, 1.0
        %v3683 = vadd.f32 %v2659, 1.0
        %v3684 = vadd.f32 %v2660, 1.0
        %v3685 = vadd.f32 %v2661, 1.0
        %v3686 = vadd.f32 %v2662, 1.0
        %v3687 = vadd.f32 %v2663, 1.0
        %v3688 = vadd.f32 %v2664, 1.0
        %v3689 = vadd.f32 %v2665, 1.0
        %v3690 = vadd.f32 %v2666, 1.0
        %v3691 = vadd.f32 %v2667, 1.0
        %v3692 = vadd.f32 %v2668, 1.0
        %v3693 = vadd.f32 %v2669, 1.0
        %v3694 = vadd.f32 %v2670, 1.0
        %v3695 = vadd.f32 %v2671, 1.0
        %v3696 = vadd.f32 %v2672, 1.0
        %v3697 = vadd.f32 %v2673, 1.0
        %v3698 = vadd.f32 %v2674, 1.0
        %v3699 = vadd.f32 %v2675, 1.0
        %v3700 = vadd.f32 %v2676, 1.0
        %v3701 = vadd.f32 %v2677, 1.0
        %v3702 = vadd.f32 %v2678, 1.0
        %v3703 = vadd.f32 %v2679, 1.0
        %v3704 = vadd.f32 %v2680, 1.0
        %v3705 = vadd.f32 %v2681, 1.0
        %v3706 = vadd.f32 %v2682, 1.0
        %v3707 = vadd.f32 %v2683, 1.0
        %v3708 = vadd.f32 %v2684, 1.0
        %v3709 = vadd.f32 %v2685, 1.0
        %v3710 = vadd.f32 %v2686, 1.0
        %v3711 = vadd.f32 %v2687, 1.0
        %v3712 = vadd.f32 %v2688, 1.0
        %v3713 = vadd.f32 %v2689, 1.0
        %v3714 = vadd.f32 %v2690, 1.0
        %v3715 = vadd.f32 %v2691, 1.0
        %v3716 = vadd.f32 %v2692, 1.0
        %v3717 = vadd.f32 %v2693, 1.0
        %v3718 = vadd.f32 %v2694, 1.0
        %v3719 = vadd.f32 %v2695, 1.0
        %v3720 = vadd.f32 %v2696, 1.0
        %v3721 = vadd.f32 %v2697, 1.0
        %v3722 = vadd.f32 %v2698, 1.0
        %v3723 = vadd.f32 %v2699, 1.0
        %v3724 = vadd.f32 %v2700, 1.0
        %v3725 = vadd.f32 %v2701, 1.0
        %v3726 = vadd.f32 %v2702, 1.0
        %v3727 = vadd.f32 %v2703, 1.0
        %v3728 = vadd.f32 %v2704, 1.0
        %v3729 = vadd.f32 %v2705, 1.0
        %v3730 = vadd.f32 %v2706, 1.0
        %v3731 = vadd.f32 %v2707, 1.0
        %v3732 = vadd.f32 %v2708, 1.0
        %v3733 = vadd.f32 %v2709, 1.0
        %v3734 = vadd.f32 %v2710, 1.0
        %v3735 = vadd.f32 %v2711, 1.0
        %v3736 = vadd.f32 %v2712, 1.0
        %v3737 = vadd.f32 %v2713, 1.0
        %v3738 = vadd.f32 %v2714, 1.0
        %v3739 = vadd.f32 %v2715, 1.0
        %v3740 = vadd.f32 %v2716, 1.0
        %v3741 = vadd.f32 %v2717, 1.0
        %v3742 = vadd.f32 %v2718, 1.0
        %v3743 = vadd.f32 %v2719, 1.0
        %v3744 = vadd.f32 %v2720, 1.0
        %v3745 = vadd.f32 %v2721, 1.0
        %v3746 = vadd.f32 %v2722, 1.0
        %v3747 = vadd.f32 %v2723, 1.0
        %v3748 = vadd.f32 %v2724, 1.0
        %v3749 = vadd.f32 %v2725, 1.0
        %v3750 = vadd.f32 %v2726, 1.0
        %v3751 = vadd.f32 %v2727, 1.0
        %v3752 = vadd.f32 %v2728, 1.0
        %v3753 = vadd.f32 %v2729, 1.0
        %v3754 = vadd.f32 %v2730, 1.0
        %v3755 = vadd.f32 %v2731, 1.0
        %v3756 = vadd.f32 %v2732, 1.0
        %v3757 = vadd.f32 %v2733, 1.0
        %v3758 = vadd.f32 %v2734, 1.0
        %v3759 = vadd.f32 %v2735, 1.0
        %v3760 = vadd.f32 %v2736, 1.0
        %v3761 = vadd.f32 %v2737, 1.0
        %v3762 = vadd.f32 %v2738, 1.0
        %v3763 = vadd.f32 %v2739, 1.0
        %v3764 = vadd.f32 %v2740, 1.0
        %v3765 = vadd.f32 %v2741, 1.0
        %v3766 = vadd.f32 %v2742, 1.0
        %v3767 = vadd.f32 %v2743, 1.0
        %v3768 = vadd.f32 %v2744, 1.0
        %v3769 = vadd.f32 %v2745, 1.0
        %v3770 = vadd.f32 %v2746, 1.0
        %v3771 = vadd.f32 %v2747, 1.0
        %v3772 = vadd.f32 %v2748, 1.0
        %v3773 = vadd.f32 %v2749, 1.0
        %v3774 = vadd.f32 %v2750, 1.0
        %v3775 = vadd.f32 %v2751, 1.0
        %v3776 = vadd.f32 %v2752, 1.0
        %v3777 = vadd.f32 %v2753, 1.0
        %v3778 = vadd.f32 %v2754, 1.0
        %v3779 = vadd.f32 %v2755, 1.0
        %v3780 = vadd.f32 %v2756, 1.0
        %v3781 = vadd.f32 %v2757, 1.0
        %v3782 = vadd.f32 %v2758, 1.0
        %v3783 = vadd.f32 %v2759, 1.0
        %v3784 = vadd.f32 %v2760, 1.0
        %v3785 = vadd.f32 %v2761, 1.0
        %v3786 = vadd.f32 %v2762, 1.0
        %v3787 = vadd.f32 %v2763, 1.0
        %v3788 = vadd.f32 %v2764, 1.0
        %v3789 = vadd.f32 %v2765, 1.0
        %v3790 = vadd.f32 %v2766, 1.0
        %v3791 = vadd.f32 %v2767, 1.0
        %v3792 = vadd.f32 %v2768, 1.0
        %v3793 = vadd.f32 %v2769, 1.0
        %v3794 = vadd.f32 %v2770, 1.0
        %v3795 = vadd.f32 %v2771, 1.0
        %v3796 = vadd.f32 %v2772, 1.0
        %v3797 = vadd.f32 %v2773, 1.0
        %v3798 = vadd.f32 %v2774, 1.0
        %v3799 = vadd.f32 %v2775, 1.0
        %v3800 = vadd.f32 %v2776, 1.0
        %v3801 = vadd.f32 %v2777, 1.0
        %v3802 = vadd.f32 %v2778, 1.0
        %v3803 = vadd.f32 %v2779, 1.0
        %v3804 = vadd.f32 %v2780, 1.0
        %v3805 = vadd.f32 %v2781, 1.0
        %v3806 = vadd.f32 %v2782, 1.0
        %v3807 = vadd.f32 %v2783, 1.0
        %v3808 = vadd.f32 %v2784, 1.0
        %v3809 = vadd.f32 %v2785, 1.0
        %v3810 = vadd.f32 %v2786, 1.0
        %v3811 = vadd.f32 %v2787, 1.0
        %v3812 = vadd.f32 %v2788, 1.0
        %v3813 = vadd.f32 %v2789, 1.0
        %v3814 = vadd.f32 %v2790, 1.0
        %v3815 = vadd.f32 %v2791, 1.0
        %v3816 = vadd.f32 %v2792, 1.0
        %v3817 = vadd.f32 %v2793, 1.0
        %v3818 = vadd.f32 %v2794, 1.0
        %v3819 = vadd.f32 %v2795, 1.0
        %v3820 = vadd.f32 %v2796, 1.0
        %v3821 = vadd.f32 %v2797, 1.0
        %v3822 = vadd.f32 %v2798, 1.0
        %v3823 = vadd.f32 %v2799, 1.0
        %v3824 = vadd.f32 %v2800, 1.0
        %v3825 = vadd.f32 %v2801, 1.0
        %v3826 = vadd.f32 %v2802, 1.0
        %v3827 = vadd.f32 %v2803, 1.0
        %v3828 = vadd.f32 %v2804, 1.0
        %v3829 = vadd.f32 %v2805, 1.0
        %v3830 = vadd.f32 %v2806, 1.0
        %v3831 = vadd.f32 %v2807, 1.0
        %v3832 = vadd.f32 %v2808, 1.0
        %v3833 = vadd.f32 %v2809, 1.0
        %v3834 = vadd.f32 %v2810, 1.0
        %v3835 = vadd.f32 %v2811, 1.0
        %v3836 = vadd.f32 %v2812, 1.0
        %v3837 = vadd.f32 %v2813, 1.0
        %v3838 = vadd.f32 %v2814, 1.0
        %v3839 = vadd.f32 %v2815, 1.0
        %v3840 = vadd.f32 %v2816, 1.0
        %v3841 = vadd.f32 %v2817, 1.0
        %v3842 = vadd.f32 %v2818, 1.0
        %v3843 = vadd.f32 %v2819, 1.0
        %v3844 = vadd.f32 %v2820, 1.0
        %v3845 = vadd.f32 %v2821, 1.0
        %v3846 = vadd.f32 %v2822, 1.0
        %v3847 = vadd.f32 %v2823, 1.0
        %v3848 = vadd.f32 %v2824, 1.0
        %v3849 = vadd.f32 %v2825, 1.0
        %v3850 = vadd.f32 %v2826, 1.0
        %v3851 = vadd.f32 %v2827, 1.0
        %v3852 = vadd.f32 %v2828, 1.0
        %v3853 = vadd.f32 %v2829, 1.0
        %v3854 = vadd.f32 %v2830, 1.0
        %v3855 = vadd.f32 %v2831, 1.0
        %v3856 = vadd.f32 %v2832, 1.0
        %v3857 = vadd.f32 %v2833, 1.0
        %v3858 = vadd.f32 %v2834, 1.0
        %v3859 = vadd.f32 %v2835, 1.0
        %v3860 = vadd.f32 %v2836, 1.0
        %v3861 = vadd.f32 %v2837, 1.0
        %v3862 = vadd.f32 %v2838, 1.0
        %v3863 = vadd.f32 %v2839, 1.0
        %v3864 = vadd.f32 %v2840, 1.0
        %v3865 = vadd.f32 %v2841, 1.0
        %v3866 = vadd.f32 %v2842, 1.0
        %v3867 = vadd.f32 %v2843, 1.0
        %v3868 = vadd.f32 %v2844, 1.0
        %v3869 = vadd.f32 %v2845, 1.0
        %v3870 = vadd.f32 %v2846, 1.0
        %v3871 = vadd.f32 %v2847, 1.0
        %v3872 = vadd.f32 %v2848, 1.0
        %v3873 = vadd.f32 %v2849, 1.0
        %v3874 = vadd.f32 %v2850, 1.0
        %v3875 = vadd.f32 %v2851, 1.0
        %v3876 = vadd.f32 %v2852, 1.0
        %v3877 = vadd.f32 %v2853, 1.0
        %v3878 = vadd.f32 %v2854, 1.0
        %v3879 = vadd.f32 %v2855, 1.0
        %v3880 = vadd.f32 %v2856, 1.0
        %v3881 = vadd.f32 %v2857, 1.0
        %v3882 = vadd.f32 %v2858, 1.0
        %v3883 = vadd.f32 %v2859, 1.0
        %v3884 = vadd.f32 %v2860, 1.0
        %v3885 = vadd.f32 %v2861, 1.0
        %v3886 = vadd.f32 %v2862, 1.0
        %v3887 = vadd.f32 %v2863, 1.0
        %v3888 = vadd.f32 %v2864, 1.0
        %v3889 = vadd.f32 %v2865, 1.0
        %v3890 = vadd.f32 %v2866, 1.0
        %v3891 = vadd.f32 %v2867, 1.0
        %v3892 = vadd.f32 %v2868, 1.0
        %v3893 = vadd.f32 %v2869, 1.0
        %v3894 = vadd.f32 %v2870, 1.0
        %v3895 = vadd.f32 %v2871, 1.0
        %v3896 = vadd.f32 %v2872, 1.0
        %v3897 = vadd.f32 %v2873, 1.0
        %v3898 = vadd.f32 %v2874, 1.0
        %v3899 = vadd.f32 %v2875, 1.0
        %v3900 = vadd.f32 %v2876, 1.0
        %v3901 = vadd.f32 %v2877, 1.0
        %v3902 = vadd.f32 %v2878, 1.0
        %v3903 = vadd.f32 %v2879, 1.0
        %v3904 = vadd.f32 %v2880, 1.0
        %v3905 = vadd.f32 %v2881, 1.0
        %v3906 = vadd.f32 %v2882, 1.0
        %v3907 = vadd.f32 %v2883, 1.0
        %v3908 = vadd.f32 %v2884, 1.0
        %v3909 = vadd.f32 %v2885, 1.0
        %v3910 = vadd.f32 %v2886, 1.0
        %v3911 = vadd.f32 %v2887, 1.0
        %v3912 = vadd.f32 %v2888, 1.0
        %v3913 = vadd.f32 %v2889, 1.0
        %v3914 = vadd.f32 %v2890, 1.0
        %v3915 = vadd.f32 %v2891, 1.0
        %v3916 = vadd.f32 %v2892, 1.0
        %v3917 = vadd.f32 %v2893, 1.0
        %v3918 = vadd.f32 %v2894, 1.0
        %v3919 = vadd.f32 %v2895, 1.0
        %v3920 = vadd.f32 %v2896, 1.0
        %v3921 = vadd.f32 %v2897, 1.0
        %v3922 = vadd.f32 %v2898, 1.0
        %v3923 = vadd.f32 %v2899, 1.0
        %v3924 = vadd.f32 %v2900, 1.0
        %v3925 = vadd.f32 %v2901, 1.0
        %v3926 = vadd.f32 %v2902, 1.0
        %v3927 = vadd.f32 %v2903, 1.0
        %v3928 = vadd.f32 %v2904, 1.0
        %v3929 = vadd.f32 %v2905, 1.0
        %v3930 = vadd.f32 %v2906, 1.0
        %v3931 = vadd.f32 %v2907, 1.0
        %v3932 = vadd.f32 %v2908, 1.0
        %v3933 = vadd.f32 %v2909, 1.0
        %v3934 = vadd.f32 %v2910, 1.0
        %v3935 = vadd.f32 %v2911, 1.0
        %v3936 = vadd.f32 %v2912, 1.0
        %v3937 = vadd.f32 %v2913, 1.0
        %v3938 = vadd.f32 %v2914, 1.0
        %v3939 = vadd.f32 %v2915, 1.0
        %v3940 = vadd.f32 %v2916, 1.0
        %v3941 = vadd.f32 %v2917, 1.0
        %v3942 = vadd.f32 %v2918, 1.0
        %v3943 = vadd.f32 %v2919, 1.0
        %v3944 = vadd.f32 %v2920, 1.0
        %v3945 = vadd.f32 %v2921, 1.0
        %v3946 = vadd.f32 %v2922, 1.0
        %v3947 = vadd.f32 %v2923, 1.0
        %v3948 = vadd.f32 %v2924, 1.0
        %v3949 = vadd.f32 %v2925, 1.0
        %v3950 = vadd.f32 %v2926, 1.0
        %v3951 = vadd.f32 %v2927, 1.0
        %v3952 = vadd.f32 %v2928, 1.0
        %v3953 = vadd.f32 %v2929, 1.0
        %v3954 = vadd.f32 %v2930, 1.0
        %v3955 = vadd.f32 %v2931, 1.0
        %v3956 = vadd.f32 %v2932, 1.0
        %v3957 = vadd.f32 %v2933, 1.0
        %v3958 = vadd.f32 %v2934, 1.0
        %v3959 = vadd.f32 %v2935, 1.0
        %v3960 = vadd.f32 %v2936, 1.0
        %v3961 = vadd.f32 %v2937, 1.0
        %v3962 = vadd.f32 %v2938, 1.0
        %v3963 = vadd.f32 %v2939, 1.0
        %v3964 = vadd.f32 %v2940, 1.0
        %v3965 = vadd.f32 %v2941, 1.0
        %v3966 = vadd.f32 %v2942, 1.0
        %v3967 = vadd.f32 %v2943, 1.0
        %v3968 = vadd.f32 %v2944, 1.0
        %v3969 = vadd.f32 %v2945, 1.0
        %v3970 = vadd.f32 %v2946, 1.0
        %v3971 = vadd.f32 %v2947, 1.0
        %v3972 = vadd.f32 %v2948, 1.0
        %v3973 = vadd.f32 %v2949, 1.0
        %v3974 = vadd.f32 %v2950, 1.0
        %v3975 = vadd.f32 %v2951, 1.0
        %v3976 = vadd.f32 %v2952, 1.0
        %v3977 = vadd.f32 %v2953, 1.0
        %v3978 = vadd.f32 %v2954, 1.0
        %v3979 = vadd.f32 %v2955, 1.0
        %v3980 = vadd.f32 %v2956, 1.0
        %v3981 = vadd.f32 %v2957, 1.0
        %v3982 = vadd.f32 %v2958, 1.0
        %v3983 = vadd.f32 %v2959, 1.0
        %v3984 = vadd.f32 %v2960, 1.0
        %v3985 = vadd.f32 %v2961, 1.0
        %v3986 = vadd.f32 %v2962, 1.0
        %v3987 = vadd.f32 %v2963, 1.0
        %v3988 = vadd.f32 %v2964, 1.0
        %v3989 = vadd.f32 %v2965, 1.0
        %v3990 = vadd.f32 %v2966, 1.0
        %v3991 = vadd.f32 %v2967, 1.0
        %v3992 = vadd.f32 %v2968, 1.0
        %v3993 = vadd.f32 %v2969, 1.0
        %v3994 = vadd.f32 %v2970, 1.0
        %v3995 = vadd.f32 %v2971, 1.0
        %v3996 = vadd.f32 %v2972, 1.0
        %v3997 = vadd.f32 %v2973, 1.0
        %v3998 = vadd.f32 %v2974, 1.0
        %v3999 = vadd.f32 %v2975, 1.0
        %v4000 = vadd.f32 %v2976, 1.0
        %v4001 = vadd.f32 %v2977, 1.0
        %v4002 = vadd.f32 %v2978, 1.0
        %v4003 = vadd.f32 %v2979, 1.0
        %v4004 = vadd.f32 %v2980, 1.0
        %v4005 = vadd.f32 %v2981, 1.0
        %v4006 = vadd.f32 %v2982, 1.0
        %v4007 = vadd.f32 %v2983, 1.0
        %v4008 = vadd.f32 %v2984, 1.0
        %v4009 = vadd.f32 %v2985, 1.0
        %v4010 = vadd.f32 %v2986, 1.0
        %v4011 = vadd.f32 %v2987, 1.0
        %v4012 = vadd.f32 %v2988, 1.0
        %v4013 = vadd.f32 %v2989, 1.0
        %v4014 = vadd.f32 %v2990, 1.0
        %v4015 = vadd.f32 %v2991, 1.0
        %v4016 = vadd.f32 %v2992, 1.0
        %v4017 = vadd.f32 %v2993, 1.0
        %v4018 = vadd.f32 %v2994, 1.0
        %v4019 = vadd.f32 %v2995, 1.0
        %v4020 = vadd.f32 %v2996, 1.0
        %v4021 = vadd.f32 %v2997, 1.0
        %v4022 = vadd.f32 %v2998, 1.0
        %v4023 = vadd.f32 %v2999, 1.0
        %v4024 = vadd.f32 %v3000, 1.0
        %v4025 = vadd.f32 %v3001, 1.0
        %v4026 = vadd.f32 %v3002, 1.0
        %v4027 = vadd.f32 %v3003, 1.0
        %v4028 = vadd.f32 %v3004, 1.0
        %v4029 = vadd.f32 %v3005, 1.0
        %v4030 = vadd.f32 %v3006, 1.0
        %v4031 = vadd.f32 %v3007, 1.0
        %v4032 = vadd.f32 %v3008, 1.0
        %v4033 = vadd.f32 %v3009, 1.0
        %v4034 = vadd.f32 %v3010, 1.0
        %v4035 = vadd.f32 %v3011, 1.0
        %v4036 = vadd.f32 %v3012, 1.0
        %v4037 = vadd.f32 %v3013, 1.0
        %v4038 = vadd.f32 %v3014, 1.0
        %v4039 = vadd.f32 %v3015, 1.0
        %v4040 = vadd.f32 %v3016, 1.0
        %v4041 = vadd.f32 %v3017, 1.0
        %v4042 = vadd.f32 %v3018, 1.0
        %v4043 = vadd.f32 %v3019, 1.0
        %v4044 = vadd.f32 %v3020, 1.0
        %v4045 = vadd.f32 %v3021, 1.0
        %v4046 = vadd.f32 %v3022, 1.0
        %v4047 = vadd.f32 %v3023, 1.0
        %v4048 = vadd.f32 %v3024, 1.0
        %v4049 = vadd.f32 %v3025, 1.0
        %v4050 = vadd.f32 %v3026, 1.0
        %v4051 = vadd.f32 %v3027, 1.0
        %v4052 = vadd.f32 %v3028, 1.0
        %v4053 = vadd.f32 %v3029, 1.0
        %v4054 = vadd.f32 %v3030, 1.0
        %v4055 = vadd.f32 %v3031, 1.0
        %v4056 = vadd.f32 %v3032, 1.0
        %v4057 = vadd.f32 %v3033, 1.0
        %v4058 = vadd.f32 %v3034, 1.0
        %v4059 = vadd.f32 %v3035, 1.0
        %v4060 = vadd.f32 %v3036, 1.0
        %v4061 = vadd.f32 %v3037, 1.0
        %v4062 = vadd.f32 %v3038, 1.0
        %v4063 = vadd.f32 %v3039, 1.0
        %v4064 = vadd.f32 %v3040, 1.0
        %v4065 = vadd.f32 %v3041, 1.0
        %v4066 = vadd.f32 %v3042, 1.0
        %v4067 = vadd.f32 %v3043, 1.0
        %v4068 = vadd.f32 %v3044, 1.0
        %v4069 = vadd.f32 %v3045, 1.0
        %v4070 = vadd.f32 %v3046, 1.0
        %v4071 = vadd.f32 %v3047, 1.0
        %v4072 = vadd.f32 %v3048, 1.0
        %v4073 = vadd.f32 %v3049, 1.0
        %v4074 = vadd.f32 %v3050, 1.0
        %v4075 = vadd.f32 %v3051, 1.0
        %v4076 = vadd.f32 %v3052, 1.0
        %v4077 = vadd.f32 %v3053, 1.0
        %v4078 = vadd.f32 %v3054, 1.0
        %v4079 = vadd.f32 %v3055, 1.0
        %v4080 = vadd.f32 %v3056, 1.0
        %v4081 = vadd.f32 %v3057, 1.0
        %v4082 = vadd.f32 %v3058, 1.0
        %v4083 = vadd.f32 %v3059, 1.0
        %v4084 = vadd.f32 %v3060, 1.0
        %v4085 = vadd.f32 %v3061, 1.0
        %v4086 = vadd.f32 %v3062, 1.0
        %v4087 = vadd.f32 %v3063, 1.0
        %v4088 = vadd.f32 %v3064, 1.0
        %v4089 = vadd.f32 %v3065, 1.0
        %v4090 = vadd.f32 %v3066, 1.0
        %v4091 = vadd.f32 %v3067, 1.0
        %v4092 = vadd.f32 %v3068, 1.0
        %v4093 = vadd.f32 %v3069, 1.0
        %v4094 = vadd.f32 %v3070, 1.0
        %v4095 = vadd.f32 %v3071, 1.0
        %v4096 = vadd.f32 %v3072, 1.0
        %v4097 = vadd.f32 %v3073, 1.0
        %v4098 = vadd.f32 %v3074, 1.0
        %v4099 = vadd.f32 %v3075, 1.0
        %v4100 = vadd.f32 %v3076, 1.0
        %v4101 = vadd.f32 %v3077, 1.0
        %v4102 = vadd.f32 %v3078, 1.0
        %v4103 = vadd.f32 %v3079, 1.0
        %v4104 = vadd.f32 %v3080, 1.0
        %v4105 = vadd.f32 %v3081, 1.0
        %v4106 = vadd.f32 %v3082, 1.0
        %v4107 = vadd.f32 %v3083, 1.0
        %v4108 = vadd.f32 %v3084, 1.0
        %v4109 = vadd.f32 %v3085, 1.0
        %v4110 = vadd.f32 %v3086, 1.0
        %v4111 = vadd.f32 %v3087, 1.0
        %v4112 = vadd.f32 %v3088, 1.0
        %v4113 = vadd.f32 %v3089, 1.0
        %v4114 = vadd.f32 %v3090, 1.0
        %v4115 = vadd.f32 %v3091, 1.0
        %v4116 = vadd.f32 %v3092, 1.0
        %v4117 = vadd.f32 %v3093, 1.0
        %v4118 = vadd.f32 %v3094, 1.0
        %v4119 = vadd.f32 %v3095, 1.0
        %v4120 = vadd.f32 %v3096, 1.0
        %v4121 = vadd.f32 %v3097, 1.0
        %v4122 = vadd.f32 %v3098, 1.0
        %v4123 = vadd.f32 %v3099, 1.0
        %v4124 = vadd.f32 %v3100, 1.0
        %v4125 = vadd.f32 %v3101, 1.0
        %v4126 = vadd.f32 %v3102, 1.0
        %v4127 = vadd.f32 %v3103, 1.0
        %v4128 = vadd.f32 %v3104, 1.0
        %v4129 = vadd.f32 %v3105, 1.0
        %v4130 = vadd.f32 %v3106, 1.0
        %v4131 = vadd.f32 %v3107, 1.0
        %v4132 = vadd.f32 %v3108, 1.0
        %v4133 = vadd.f32 %v3109, 1.0
        %v4134 = vadd.f32 %v3110, 1.0
        %v4135 = vadd.f32 %v3111, 1.0
        %v4136 = vadd.f32 %v3112, 1.0
        %v4137 = vadd.f32 %v3113, 1.0
        %v4138 = vadd.f32 %v3114, 1.0
        %v4139 = vadd.f32 %v3115, 1.0
        %v4140 = vadd.f32 %v3116, 1.0
        %v4141 = vadd.f32 %v3117, 1.0
        %v4142 = vadd.f32 %v3118, 1.0
        %v4143 = vadd.f32 %v3119, 1.0
        %v4144 = vadd.f32 %v3120, 1.0
        %v4145 = vadd.f32 %v3121, 1.0
        %v4146 = vadd.f32 %v3122, 1.0
        %v4147 = vadd.f32 %v3123, 1.0
        %v4148 = vadd.f32 %v3124, 1.0
        %v4149 = vadd.f32 %v3125, 1.0
        %v4150 = vadd.f32 %v3126, 1.0
        %v4151 = vadd.f32 %v3127, 1.0
        %v4152 = vadd.f32 %v3128, 1.0
        %v4153 = vadd.f32 %v3129, 1.0
        %v4154 = vadd.f32 %v3130, 1.0
        %v4155 = vadd.f32 %v3131, 1.0
        %v4156 = vadd.f32 %v3132, 1.0
        %v4157 = vadd.f32 %v3133, 1.0
        %v4158 = vadd.f32 %v3134, 1.0
        %v4159 = vadd.f32 %v3135, 1.0
        %v4160 = vadd.f32 %v3136, 1.0
        %v4161 = vadd.f32 %v3137, 1.0
        %v4162 = vadd.f32 %v3138, 1.0
        %v4163 = vadd.f32 %v3139, 1.0
        %v4164 = vadd.f32 %v3140, 1.0
        %v4165 = vadd.f32 %v3141, 1.0
        %v4166 = vadd.f32 %v3142, 1.0
        %v4167 = vadd.f32 %v3143, 1.0
        %v4168 = vadd.f32 %v3144, 1.0
        %v4169 = vadd.f32 %v3145, 1.0
        %v4170 = vadd.f32 %v3146, 1.0
        %v4171 = vadd.f32 %v3147, 1.0
        %v4172 = vadd.f32 %v3148, 1.0
        %v4173 = vadd.f32 %v3149, 1.0
        %v4174 = vadd.f32 %v3150, 1.0
        %v4175 = vadd.f32 %v3151, 1.0
        %v4176 = vadd.f32 %v3152, 1.0
        %v4177 = vadd.f32 %v3153, 1.0
        %v4178 = vadd.f32 %v3154, 1.0
        %v4179 = vadd.f32 %v3155, 1.0
        %v4180 = vadd.f32 %v3156, 1.0
        %v4181 = vadd.f32 %v3157, 1.0
        %v4182 = vadd.f32 %v3158, 1.0
        %v4183 = vadd.f32 %v3159, 1.0
        %v4184 = vadd.f32 %v3160, 1.0
        %v4185 = vadd.f32 %v3161, 1.0
        %v4186 = vadd.f32 %v3162, 1.0
        %v4187 = vadd.f32 %v3163, 1.0
        %v4188 = vadd.f32 %v3164, 1.0
        %v4189 = vadd.f32 %v3165, 1.0
        %v4190 = vadd.f32 %v3166, 1.0
        %v4191 = vadd.f32 %v3167, 1.0
        %v4192 = vadd.f32 %v3168, 1.0
        %v4193 = vadd.f32 %v3169, 1.0
        %v4194 = vadd.f32 %v3170, 1.0
        %v4195 = vadd.f32 %v3171, 1.0
        %v4196 = vadd.f32 %v3172, 1.0
        %v4197 = vadd.f32 %v3173, 1.0
        %v4198 = vadd.f32 %v3174, 1.0
        %v4199 = vadd.f32 %v3175, 1.0
        %v4200 = vadd.f32 %v3176, 1.0
        %v4201 = vadd.f32 %v3177, 1.0
        %v4202 = vadd.f32 %v3178, 1.0
        %v4203 = vadd.f32 %v3179, 1.0
        %v4204 = vadd.f32 %v3180, 1.0
        %v4205 = vadd.f32 %v3181, 1.0
        %v4206 = vadd.f32 %v3182, 1.0
        %v4207 = vadd.f32 %v3183, 1.0
        %v4208 = vadd.f32 %v3184, 1.0
        %v4209 = vadd.f32 %v3185, 1.0
        %v4210 = vadd.f32 %v3186, 1.0
        %v4211 = vadd.f32 %v3187, 1.0
        %v4212 = vadd.f32 %v3188, 1.0
        %v4213 = vadd.f32 %v3189, 1.0
        %v4214 = vadd.f32 %v3190, 1.0
        %v4215 = vadd.f32 %v3191, 1.0
        %v4216 = vadd.f32 %v3192, 1.0
        %v4217 = vadd.f32 %v3193, 1.0
        %v4218 = vadd.f32 %v3194, 1.0
        %v4219 = vadd.f32 %v3195, 1.0
        %v4220 = vadd.f32 %v3196, 1.0
        %v4221 = vadd.f32 %v3197, 1.0
        %v4222 = vadd.f32 %v3198, 1.0
        %v4223 = vadd.f32 %v3199, 1.0
        %v4224 = vadd.f32 %v3200, 1.0
        %v4225 = vadd.f32 %v3201, 1.0
        %v4226 = vadd.f32 %v3202, 1.0
        %v4227 = vadd.f32 %v3203, 1.0
        %v4228 = vadd.f32 %v3204, 1.0
        %v4229 = vadd.f32 %v3205, 1.0
        %v4230 = vadd.f32 %v3206, 1.0
        %v4231 = vadd.f32 %v3207, 1.0
        %v4232 = vadd.f32 %v3208, 1.0
        %v4233 = vadd.f32 %v3209, 1.0
        %4234 = vst [vmem:[%s135] sm:$0xff] %v3210
        %4235 = vst [vmem:[%s135 + $0x8] sm:$0xff] %v3211
        %4236 = vst [vmem:[%s135 + $0x10] sm:$0xff] %v3212
        %4237 = vst [vmem:[%s135 + $0x18] sm:$0xff] %v3213
        %4238 = vst [vmem:[%s135 + $0x20] sm:$0xff] %v3214
        %4239 = vst [vmem:[%s135 + $0x28] sm:$0xff] %v3215
        %4240 = vst [vmem:[%s135 + $0x30] sm:$0xff] %v3216
        %4241 = vst [vmem:[%s135 + $0x38] sm:$0xff] %v3217
        %4242 = vst [vmem:[%s135 + $0x40] sm:$0xff] %v3218
        %4243 = vst [vmem:[%s135 + $0x48] sm:$0xff] %v3219
        %4244 = vst [vmem:[%s135 + $0x50] sm:$0xff] %v3220
        %4245 = vst [vmem:[%s135 + $0x58] sm:$0xff] %v3221
        %4246 = vst [vmem:[%s135 + $0x60] sm:$0xff] %v3222
        %4247 = vst [vmem:[%s135 + $0x68] sm:$0xff] %v3223
        %4248 = vst [vmem:[%s135 + $0x70] sm:$0xff] %v3224
        %4249 = vst [vmem:[%s135 + $0x78] sm:$0xff] %v3225
        %4250 = vst [vmem:[%s135 + $0x80] sm:$0xff] %v3226
        %4251 = vst [vmem:[%s135 + $0x88] sm:$0xff] %v3227
        %4252 = vst [vmem:[%s135 + $0x90] sm:$0xff] %v3228
        %4253 = vst [vmem:[%s135 + $0x98] sm:$0xff] %v3229
        %4254 = vst [vmem:[%s135 + $0xa0] sm:$0xff] %v3230
        %4255 = vst [vmem:[%s135 + $0xa8] sm:$0xff] %v3231
        %4256 = vst [vmem:[%s135 + $0xb0] sm:$0xff] %v3232
        %4257 = vst [vmem:[%s135 + $0xb8] sm:$0xff] %v3233
        %4258 = vst [vmem:[%s135 + $0xc0] sm:$0xff] %v3234
        %4259 = vst [vmem:[%s135 + $0xc8] sm:$0xff] %v3235
        %4260 = vst [vmem:[%s135 + $0xd0] sm:$0xff] %v3236
        %4261 = vst [vmem:[%s135 + $0xd8] sm:$0xff] %v3237
        %4262 = vst [vmem:[%s135 + $0xe0] sm:$0xff] %v3238
        %4263 = vst [vmem:[%s135 + $0xe8] sm:$0xff] %v3239
        %4264 = vst [vmem:[%s135 + $0xf0] sm:$0xff] %v3240
        %4265 = vst [vmem:[%s135 + $0xf8] sm:$0xff] %v3241
        %4266 = vst [vmem:[%s135 + $0x100] sm:$0xff] %v3242
        %4267 = vst [vmem:[%s135 + $0x108] sm:$0xff] %v3243
        %4268 = vst [vmem:[%s135 + $0x110] sm:$0xff] %v3244
        %4269 = vst [vmem:[%s135 + $0x118] sm:$0xff] %v3245
        %4270 = vst [vmem:[%s135 + $0x120] sm:$0xff] %v3246
        %4271 = vst [vmem:[%s135 + $0x128] sm:$0xff] %v3247
        %4272 = vst [vmem:[%s135 + $0x130] sm:$0xff] %v3248
        %4273 = vst [vmem:[%s135 + $0x138] sm:$0xff] %v3249
        %4274 = vst [vmem:[%s135 + $0x140] sm:$0xff] %v3250
        %4275 = vst [vmem:[%s135 + $0x148] sm:$0xff] %v3251
        %4276 = vst [vmem:[%s135 + $0x150] sm:$0xff] %v3252
        %4277 = vst [vmem:[%s135 + $0x158] sm:$0xff] %v3253
        %4278 = vst [vmem:[%s135 + $0x160] sm:$0xff] %v3254
        %4279 = vst [vmem:[%s135 + $0x168] sm:$0xff] %v3255
        %4280 = vst [vmem:[%s135 + $0x170] sm:$0xff] %v3256
        %4281 = vst [vmem:[%s135 + $0x178] sm:$0xff] %v3257
        %4282 = vst [vmem:[%s135 + $0x180] sm:$0xff] %v3258
        %4283 = vst [vmem:[%s135 + $0x188] sm:$0xff] %v3259
        %4284 = vst [vmem:[%s135 + $0x190] sm:$0xff] %v3260
        %4285 = vst [vmem:[%s135 + $0x198] sm:$0xff] %v3261
        %4286 = vst [vmem:[%s135 + $0x1a0] sm:$0xff] %v3262
        %4287 = vst [vmem:[%s135 + $0x1a8] sm:$0xff] %v3263
        %4288 = vst [vmem:[%s135 + $0x1b0] sm:$0xff] %v3264
        %4289 = vst [vmem:[%s135 + $0x1b8] sm:$0xff] %v3265
        %4290 = vst [vmem:[%s135 + $0x1c0] sm:$0xff] %v3266
        %4291 = vst [vmem:[%s135 + $0x1c8] sm:$0xff] %v3267
        %4292 = vst [vmem:[%s135 + $0x1d0] sm:$0xff] %v3268
        %4293 = vst [vmem:[%s135 + $0x1d8] sm:$0xff] %v3269
        %4294 = vst [vmem:[%s135 + $0x1e0] sm:$0xff] %v3270
        %4295 = vst [vmem:[%s135 + $0x1e8] sm:$0xff] %v3271
        %4296 = vst [vmem:[%s135 + $0x1f0] sm:$0xff] %v3272
        %4297 = vst [vmem:[%s135 + $0x1f8] sm:$0xff] %v3273
        %4298 = vst [vmem:[%s135 + $0x200] sm:$0xff] %v3274
        %4299 = vst [vmem:[%s135 + $0x208] sm:$0xff] %v3275
        %4300 = vst [vmem:[%s135 + $0x210] sm:$0xff] %v3276
        %4301 = vst [vmem:[%s135 + $0x218] sm:$0xff] %v3277
        %4302 = vst [vmem:[%s135 + $0x220] sm:$0xff] %v3278
        %4303 = vst [vmem:[%s135 + $0x228] sm:$0xff] %v3279
        %4304 = vst [vmem:[%s135 + $0x230] sm:$0xff] %v3280
        %4305 = vst [vmem:[%s135 + $0x238] sm:$0xff] %v3281
        %4306 = vst [vmem:[%s135 + $0x240] sm:$0xff] %v3282
        %4307 = vst [vmem:[%s135 + $0x248] sm:$0xff] %v3283
        %4308 = vst [vmem:[%s135 + $0x250] sm:$0xff] %v3284
        %4309 = vst [vmem:[%s135 + $0x258] sm:$0xff] %v3285
        %4310 = vst [vmem:[%s135 + $0x260] sm:$0xff] %v3286
        %4311 = vst [vmem:[%s135 + $0x268] sm:$0xff] %v3287
        %4312 = vst [vmem:[%s135 + $0x270] sm:$0xff] %v3288
        %4313 = vst [vmem:[%s135 + $0x278] sm:$0xff] %v3289
        %4314 = vst [vmem:[%s135 + $0x280] sm:$0xff] %v3290
        %4315 = vst [vmem:[%s135 + $0x288] sm:$0xff] %v3291
        %4316 = vst [vmem:[%s135 + $0x290] sm:$0xff] %v3292
        %4317 = vst [vmem:[%s135 + $0x298] sm:$0xff] %v3293
        %4318 = vst [vmem:[%s135 + $0x2a0] sm:$0xff] %v3294
        %4319 = vst [vmem:[%s135 + $0x2a8] sm:$0xff] %v3295
        %4320 = vst [vmem:[%s135 + $0x2b0] sm:$0xff] %v3296
        %4321 = vst [vmem:[%s135 + $0x2b8] sm:$0xff] %v3297
        %4322 = vst [vmem:[%s135 + $0x2c0] sm:$0xff] %v3298
        %4323 = vst [vmem:[%s135 + $0x2c8] sm:$0xff] %v3299
        %4324 = vst [vmem:[%s135 + $0x2d0] sm:$0xff] %v3300
        %4325 = vst [vmem:[%s135 + $0x2d8] sm:$0xff] %v3301
        %4326 = vst [vmem:[%s135 + $0x2e0] sm:$0xff] %v3302
        %4327 = vst [vmem:[%s135 + $0x2e8] sm:$0xff] %v3303
        %4328 = vst [vmem:[%s135 + $0x2f0] sm:$0xff] %v3304
        %4329 = vst [vmem:[%s135 + $0x2f8] sm:$0xff] %v3305
        %4330 = vst [vmem:[%s135 + $0x300] sm:$0xff] %v3306
        %4331 = vst [vmem:[%s135 + $0x308] sm:$0xff] %v3307
        %4332 = vst [vmem:[%s135 + $0x310] sm:$0xff] %v3308
        %4333 = vst [vmem:[%s135 + $0x318] sm:$0xff] %v3309
        %4334 = vst [vmem:[%s135 + $0x320] sm:$0xff] %v3310
        %4335 = vst [vmem:[%s135 + $0x328] sm:$0xff] %v3311
        %4336 = vst [vmem:[%s135 + $0x330] sm:$0xff] %v3312
        %4337 = vst [vmem:[%s135 + $0x338] sm:$0xff] %v3313
        %4338 = vst [vmem:[%s135 + $0x340] sm:$0xff] %v3314
        %4339 = vst [vmem:[%s135 + $0x348] sm:$0xff] %v3315
        %4340 = vst [vmem:[%s135 + $0x350] sm:$0xff] %v3316
        %4341 = vst [vmem:[%s135 + $0x358] sm:$0xff] %v3317
        %4342 = vst [vmem:[%s135 + $0x360] sm:$0xff] %v3318
        %4343 = vst [vmem:[%s135 + $0x368] sm:$0xff] %v3319
        %4344 = vst [vmem:[%s135 + $0x370] sm:$0xff] %v3320
        %4345 = vst [vmem:[%s135 + $0x378] sm:$0xff] %v3321
        %4346 = vst [vmem:[%s135 + $0x380] sm:$0xff] %v3322
        %4347 = vst [vmem:[%s135 + $0x388] sm:$0xff] %v3323
        %4348 = vst [vmem:[%s135 + $0x390] sm:$0xff] %v3324
        %4349 = vst [vmem:[%s135 + $0x398] sm:$0xff] %v3325
        %4350 = vst [vmem:[%s135 + $0x3a0] sm:$0xff] %v3326
        %4351 = vst [vmem:[%s135 + $0x3a8] sm:$0xff] %v3327
        %4352 = vst [vmem:[%s135 + $0x3b0] sm:$0xff] %v3328
        %4353 = vst [vmem:[%s135 + $0x3b8] sm:$0xff] %v3329
        %4354 = vst [vmem:[%s135 + $0x3c0] sm:$0xff] %v3330
        %4355 = vst [vmem:[%s135 + $0x3c8] sm:$0xff] %v3331
        %4356 = vst [vmem:[%s135 + $0x3d0] sm:$0xff] %v3332
        %4357 = vst [vmem:[%s135 + $0x3d8] sm:$0xff] %v3333
        %4358 = vst [vmem:[%s135 + $0x3e0] sm:$0xff] %v3334
        %4359 = vst [vmem:[%s135 + $0x3e8] sm:$0xff] %v3335
        %4360 = vst [vmem:[%s135 + $0x3f0] sm:$0xff] %v3336
        %4361 = vst [vmem:[%s135 + $0x3f8] sm:$0xff] %v3337
        %4362 = vst [vmem:[%s135 + $0x400] sm:$0xff] %v3338
        %4363 = vst [vmem:[%s135 + $0x408] sm:$0xff] %v3339
        %4364 = vst [vmem:[%s135 + $0x410] sm:$0xff] %v3340
        %4365 = vst [vmem:[%s135 + $0x418] sm:$0xff] %v3341
        %4366 = vst [vmem:[%s135 + $0x420] sm:$0xff] %v3342
        %4367 = vst [vmem:[%s135 + $0x428] sm:$0xff] %v3343
        %4368 = vst [vmem:[%s135 + $0x430] sm:$0xff] %v3344
        %4369 = vst [vmem:[%s135 + $0x438] sm:$0xff] %v3345
        %4370 = vst [vmem:[%s135 + $0x440] sm:$0xff] %v3346
        %4371 = vst [vmem:[%s135 + $0x448] sm:$0xff] %v3347
        %4372 = vst [vmem:[%s135 + $0x450] sm:$0xff] %v3348
        %4373 = vst [vmem:[%s135 + $0x458] sm:$0xff] %v3349
        %4374 = vst [vmem:[%s135 + $0x460] sm:$0xff] %v3350
        %4375 = vst [vmem:[%s135 + $0x468] sm:$0xff] %v3351
        %4376 = vst [vmem:[%s135 + $0x470] sm:$0xff] %v3352
        %4377 = vst [vmem:[%s135 + $0x478] sm:$0xff] %v3353
        %4378 = vst [vmem:[%s135 + $0x480] sm:$0xff] %v3354
        %4379 = vst [vmem:[%s135 + $0x488] sm:$0xff] %v3355
        %4380 = vst [vmem:[%s135 + $0x490] sm:$0xff] %v3356
        %4381 = vst [vmem:[%s135 + $0x498] sm:$0xff] %v3357
        %4382 = vst [vmem:[%s135 + $0x4a0] sm:$0xff] %v3358
        %4383 = vst [vmem:[%s135 + $0x4a8] sm:$0xff] %v3359
        %4384 = vst [vmem:[%s135 + $0x4b0] sm:$0xff] %v3360
        %4385 = vst [vmem:[%s135 + $0x4b8] sm:$0xff] %v3361
        %4386 = vst [vmem:[%s135 + $0x4c0] sm:$0xff] %v3362
        %4387 = vst [vmem:[%s135 + $0x4c8] sm:$0xff] %v3363
        %4388 = vst [vmem:[%s135 + $0x4d0] sm:$0xff] %v3364
        %4389 = vst [vmem:[%s135 + $0x4d8] sm:$0xff] %v3365
        %4390 = vst [vmem:[%s135 + $0x4e0] sm:$0xff] %v3366
        %4391 = vst [vmem:[%s135 + $0x4e8] sm:$0xff] %v3367
        %4392 = vst [vmem:[%s135 + $0x4f0] sm:$0xff] %v3368
        %4393 = vst [vmem:[%s135 + $0x4f8] sm:$0xff] %v3369
        %4394 = vst [vmem:[%s135 + $0x500] sm:$0xff] %v3370
        %4395 = vst [vmem:[%s135 + $0x508] sm:$0xff] %v3371
        %4396 = vst [vmem:[%s135 + $0x510] sm:$0xff] %v3372
        %4397 = vst [vmem:[%s135 + $0x518] sm:$0xff] %v3373
        %4398 = vst [vmem:[%s135 + $0x520] sm:$0xff] %v3374
        %4399 = vst [vmem:[%s135 + $0x528] sm:$0xff] %v3375
        %4400 = vst [vmem:[%s135 + $0x530] sm:$0xff] %v3376
        %4401 = vst [vmem:[%s135 + $0x538] sm:$0xff] %v3377
        %4402 = vst [vmem:[%s135 + $0x540] sm:$0xff] %v3378
        %4403 = vst [vmem:[%s135 + $0x548] sm:$0xff] %v3379
        %4404 = vst [vmem:[%s135 + $0x550] sm:$0xff] %v3380
        %4405 = vst [vmem:[%s135 + $0x558] sm:$0xff] %v3381
        %4406 = vst [vmem:[%s135 + $0x560] sm:$0xff] %v3382
        %4407 = vst [vmem:[%s135 + $0x568] sm:$0xff] %v3383
        %4408 = vst [vmem:[%s135 + $0x570] sm:$0xff] %v3384
        %4409 = vst [vmem:[%s135 + $0x578] sm:$0xff] %v3385
        %4410 = vst [vmem:[%s135 + $0x580] sm:$0xff] %v3386
        %4411 = vst [vmem:[%s135 + $0x588] sm:$0xff] %v3387
        %4412 = vst [vmem:[%s135 + $0x590] sm:$0xff] %v3388
        %4413 = vst [vmem:[%s135 + $0x598] sm:$0xff] %v3389
        %4414 = vst [vmem:[%s135 + $0x5a0] sm:$0xff] %v3390
        %4415 = vst [vmem:[%s135 + $0x5a8] sm:$0xff] %v3391
        %4416 = vst [vmem:[%s135 + $0x5b0] sm:$0xff] %v3392
        %4417 = vst [vmem:[%s135 + $0x5b8] sm:$0xff] %v3393
        %4418 = vst [vmem:[%s135 + $0x5c0] sm:$0xff] %v3394
        %4419 = vst [vmem:[%s135 + $0x5c8] sm:$0xff] %v3395
        %4420 = vst [vmem:[%s135 + $0x5d0] sm:$0xff] %v3396
        %4421 = vst [vmem:[%s135 + $0x5d8] sm:$0xff] %v3397
        %4422 = vst [vmem:[%s135 + $0x5e0] sm:$0xff] %v3398
        %4423 = vst [vmem:[%s135 + $0x5e8] sm:$0xff] %v3399
        %4424 = vst [vmem:[%s135 + $0x5f0] sm:$0xff] %v3400
        %4425 = vst [vmem:[%s135 + $0x5f8] sm:$0xff] %v3401
        %4426 = vst [vmem:[%s135 + $0x600] sm:$0xff] %v3402
        %4427 = vst [vmem:[%s135 + $0x608] sm:$0xff] %v3403
        %4428 = vst [vmem:[%s135 + $0x610] sm:$0xff] %v3404
        %4429 = vst [vmem:[%s135 + $0x618] sm:$0xff] %v3405
        %4430 = vst [vmem:[%s135 + $0x620] sm:$0xff] %v3406
        %4431 = vst [vmem:[%s135 + $0x628] sm:$0xff] %v3407
        %4432 = vst [vmem:[%s135 + $0x630] sm:$0xff] %v3408
        %4433 = vst [vmem:[%s135 + $0x638] sm:$0xff] %v3409
        %4434 = vst [vmem:[%s135 + $0x640] sm:$0xff] %v3410
        %4435 = vst [vmem:[%s135 + $0x648] sm:$0xff] %v3411
        %4436 = vst [vmem:[%s135 + $0x650] sm:$0xff] %v3412
        %4437 = vst [vmem:[%s135 + $0x658] sm:$0xff] %v3413
        %4438 = vst [vmem:[%s135 + $0x660] sm:$0xff] %v3414
        %4439 = vst [vmem:[%s135 + $0x668] sm:$0xff] %v3415
        %4440 = vst [vmem:[%s135 + $0x670] sm:$0xff] %v3416
        %4441 = vst [vmem:[%s135 + $0x678] sm:$0xff] %v3417
        %4442 = vst [vmem:[%s135 + $0x680] sm:$0xff] %v3418
        %4443 = vst [vmem:[%s135 + $0x688] sm:$0xff] %v3419
        %4444 = vst [vmem:[%s135 + $0x690] sm:$0xff] %v3420
        %4445 = vst [vmem:[%s135 + $0x698] sm:$0xff] %v3421
        %4446 = vst [vmem:[%s135 + $0x6a0] sm:$0xff] %v3422
        %4447 = vst [vmem:[%s135 + $0x6a8] sm:$0xff] %v3423
        %4448 = vst [vmem:[%s135 + $0x6b0] sm:$0xff] %v3424
        %4449 = vst [vmem:[%s135 + $0x6b8] sm:$0xff] %v3425
        %4450 = vst [vmem:[%s135 + $0x6c0] sm:$0xff] %v3426
        %4451 = vst [vmem:[%s135 + $0x6c8] sm:$0xff] %v3427
        %4452 = vst [vmem:[%s135 + $0x6d0] sm:$0xff] %v3428
        %4453 = vst [vmem:[%s135 + $0x6d8] sm:$0xff] %v3429
        %4454 = vst [vmem:[%s135 + $0x6e0] sm:$0xff] %v3430
        %4455 = vst [vmem:[%s135 + $0x6e8] sm:$0xff] %v3431
        %4456 = vst [vmem:[%s135 + $0x6f0] sm:$0xff] %v3432
        %4457 = vst [vmem:[%s135 + $0x6f8] sm:$0xff] %v3433
        %4458 = vst [vmem:[%s135 + $0x700] sm:$0xff] %v3434
        %4459 = vst [vmem:[%s135 + $0x708] sm:$0xff] %v3435
        %4460 = vst [vmem:[%s135 + $0x710] sm:$0xff] %v3436
        %4461 = vst [vmem:[%s135 + $0x718] sm:$0xff] %v3437
        %4462 = vst [vmem:[%s135 + $0x720] sm:$0xff] %v3438
        %4463 = vst [vmem:[%s135 + $0x728] sm:$0xff] %v3439
        %4464 = vst [vmem:[%s135 + $0x730] sm:$0xff] %v3440
        %4465 = vst [vmem:[%s135 + $0x738] sm:$0xff] %v3441
        %4466 = vst [vmem:[%s135 + $0x740] sm:$0xff] %v3442
        %4467 = vst [vmem:[%s135 + $0x748] sm:$0xff] %v3443
        %4468 = vst [vmem:[%s135 + $0x750] sm:$0xff] %v3444
        %4469 = vst [vmem:[%s135 + $0x758] sm:$0xff] %v3445
        %4470 = vst [vmem:[%s135 + $0x760] sm:$0xff] %v3446
        %4471 = vst [vmem:[%s135 + $0x768] sm:$0xff] %v3447
        %4472 = vst [vmem:[%s135 + $0x770] sm:$0xff] %v3448
        %4473 = vst [vmem:[%s135 + $0x778] sm:$0xff] %v3449
        %4474 = vst [vmem:[%s135 + $0x780] sm:$0xff] %v3450
        %4475 = vst [vmem:[%s135 + $0x788] sm:$0xff] %v3451
        %4476 = vst [vmem:[%s135 + $0x790] sm:$0xff] %v3452
        %4477 = vst [vmem:[%s135 + $0x798] sm:$0xff] %v3453
        %4478 = vst [vmem:[%s135 + $0x7a0] sm:$0xff] %v3454
        %4479 = vst [vmem:[%s135 + $0x7a8] sm:$0xff] %v3455
        %4480 = vst [vmem:[%s135 + $0x7b0] sm:$0xff] %v3456
        %4481 = vst [vmem:[%s135 + $0x7b8] sm:$0xff] %v3457
        %4482 = vst [vmem:[%s135 + $0x7c0] sm:$0xff] %v3458
        %4483 = vst [vmem:[%s135 + $0x7c8] sm:$0xff] %v3459
        %4484 = vst [vmem:[%s135 + $0x7d0] sm:$0xff] %v3460
        %4485 = vst [vmem:[%s135 + $0x7d8] sm:$0xff] %v3461
        %4486 = vst [vmem:[%s135 + $0x7e0] sm:$0xff] %v3462
        %4487 = vst [vmem:[%s135 + $0x7e8] sm:$0xff] %v3463
        %4488 = vst [vmem:[%s135 + $0x7f0] sm:$0xff] %v3464
        %4489 = vst [vmem:[%s135 + $0x7f8] sm:$0xff] %v3465
        %4490 = vst [vmem:[%s135 + $0x800] sm:$0xff] %v3466
        %4491 = vst [vmem:[%s135 + $0x808] sm:$0xff] %v3467
        %4492 = vst [vmem:[%s135 + $0x810] sm:$0xff] %v3468
        %4493 = vst [vmem:[%s135 + $0x818] sm:$0xff] %v3469
        %4494 = vst [vmem:[%s135 + $0x820] sm:$0xff] %v3470
        %4495 = vst [vmem:[%s135 + $0x828] sm:$0xff] %v3471
        %4496 = vst [vmem:[%s135 + $0x830] sm:$0xff] %v3472
        %4497 = vst [vmem:[%s135 + $0x838] sm:$0xff] %v3473
        %4498 = vst [vmem:[%s135 + $0x840] sm:$0xff] %v3474
        %4499 = vst [vmem:[%s135 + $0x848] sm:$0xff] %v3475
        %4500 = vst [vmem:[%s135 + $0x850] sm:$0xff] %v3476
        %4501 = vst [vmem:[%s135 + $0x858] sm:$0xff] %v3477
        %4502 = vst [vmem:[%s135 + $0x860] sm:$0xff] %v3478
        %4503 = vst [vmem:[%s135 + $0x868] sm:$0xff] %v3479
        %4504 = vst [vmem:[%s135 + $0x870] sm:$0xff] %v3480
        %4505 = vst [vmem:[%s135 + $0x878] sm:$0xff] %v3481
        %4506 = vst [vmem:[%s135 + $0x880] sm:$0xff] %v3482
        %4507 = vst [vmem:[%s135 + $0x888] sm:$0xff] %v3483
        %4508 = vst [vmem:[%s135 + $0x890] sm:$0xff] %v3484
        %4509 = vst [vmem:[%s135 + $0x898] sm:$0xff] %v3485
        %4510 = vst [vmem:[%s135 + $0x8a0] sm:$0xff] %v3486
        %4511 = vst [vmem:[%s135 + $0x8a8] sm:$0xff] %v3487
        %4512 = vst [vmem:[%s135 + $0x8b0] sm:$0xff] %v3488
        %4513 = vst [vmem:[%s135 + $0x8b8] sm:$0xff] %v3489
        %4514 = vst [vmem:[%s135 + $0x8c0] sm:$0xff] %v3490
        %4515 = vst [vmem:[%s135 + $0x8c8] sm:$0xff] %v3491
        %4516 = vst [vmem:[%s135 + $0x8d0] sm:$0xff] %v3492
        %4517 = vst [vmem:[%s135 + $0x8d8] sm:$0xff] %v3493
        %4518 = vst [vmem:[%s135 + $0x8e0] sm:$0xff] %v3494
        %4519 = vst [vmem:[%s135 + $0x8e8] sm:$0xff] %v3495
        %4520 = vst [vmem:[%s135 + $0x8f0] sm:$0xff] %v3496
        %4521 = vst [vmem:[%s135 + $0x8f8] sm:$0xff] %v3497
        %4522 = vst [vmem:[%s135 + $0x900] sm:$0xff] %v3498
        %4523 = vst [vmem:[%s135 + $0x908] sm:$0xff] %v3499
        %4524 = vst [vmem:[%s135 + $0x910] sm:$0xff] %v3500
        %4525 = vst [vmem:[%s135 + $0x918] sm:$0xff] %v3501
        %4526 = vst [vmem:[%s135 + $0x920] sm:$0xff] %v3502
        %4527 = vst [vmem:[%s135 + $0x928] sm:$0xff] %v3503
        %4528 = vst [vmem:[%s135 + $0x930] sm:$0xff] %v3504
        %4529 = vst [vmem:[%s135 + $0x938] sm:$0xff] %v3505
        %4530 = vst [vmem:[%s135 + $0x940] sm:$0xff] %v3506
        %4531 = vst [vmem:[%s135 + $0x948] sm:$0xff] %v3507
        %4532 = vst [vmem:[%s135 + $0x950] sm:$0xff] %v3508
        %4533 = vst [vmem:[%s135 + $0x958] sm:$0xff] %v3509
        %4534 = vst [vmem:[%s135 + $0x960] sm:$0xff] %v3510
        %4535 = vst [vmem:[%s135 + $0x968] sm:$0xff] %v3511
        %4536 = vst [vmem:[%s135 + $0x970] sm:$0xff] %v3512
        %4537 = vst [vmem:[%s135 + $0x978] sm:$0xff] %v3513
        %4538 = vst [vmem:[%s135 + $0x980] sm:$0xff] %v3514
        %4539 = vst [vmem:[%s135 + $0x988] sm:$0xff] %v3515
        %4540 = vst [vmem:[%s135 + $0x990] sm:$0xff] %v3516
        %4541 = vst [vmem:[%s135 + $0x998] sm:$0xff] %v3517
        %4542 = vst [vmem:[%s135 + $0x9a0] sm:$0xff] %v3518
        %4543 = vst [vmem:[%s135 + $0x9a8] sm:$0xff] %v3519
        %4544 = vst [vmem:[%s135 + $0x9b0] sm:$0xff] %v3520
        %4545 = vst [vmem:[%s135 + $0x9b8] sm:$0xff] %v3521
        %4546 = vst [vmem:[%s135 + $0x9c0] sm:$0xff] %v3522
        %4547 = vst [vmem:[%s135 + $0x9c8] sm:$0xff] %v3523
        %4548 = vst [vmem:[%s135 + $0x9d0] sm:$0xff] %v3524
        %4549 = vst [vmem:[%s135 + $0x9d8] sm:$0xff] %v3525
        %4550 = vst [vmem:[%s135 + $0x9e0] sm:$0xff] %v3526
        %4551 = vst [vmem:[%s135 + $0x9e8] sm:$0xff] %v3527
        %4552 = vst [vmem:[%s135 + $0x9f0] sm:$0xff] %v3528
        %4553 = vst [vmem:[%s135 + $0x9f8] sm:$0xff] %v3529
        %4554 = vst [vmem:[%s135 + $0xa00] sm:$0xff] %v3530
        %4555 = vst [vmem:[%s135 + $0xa08] sm:$0xff] %v3531
        %4556 = vst [vmem:[%s135 + $0xa10] sm:$0xff] %v3532
        %4557 = vst [vmem:[%s135 + $0xa18] sm:$0xff] %v3533
        %4558 = vst [vmem:[%s135 + $0xa20] sm:$0xff] %v3534
        %4559 = vst [vmem:[%s135 + $0xa28] sm:$0xff] %v3535
        %4560 = vst [vmem:[%s135 + $0xa30] sm:$0xff] %v3536
        %4561 = vst [vmem:[%s135 + $0xa38] sm:$0xff] %v3537
        %4562 = vst [vmem:[%s135 + $0xa40] sm:$0xff] %v3538
        %4563 = vst [vmem:[%s135 + $0xa48] sm:$0xff] %v3539
        %4564 = vst [vmem:[%s135 + $0xa50] sm:$0xff] %v3540
        %4565 = vst [vmem:[%s135 + $0xa58] sm:$0xff] %v3541
        %4566 = vst [vmem:[%s135 + $0xa60] sm:$0xff] %v3542
        %4567 = vst [vmem:[%s135 + $0xa68] sm:$0xff] %v3543
        %4568 = vst [vmem:[%s135 + $0xa70] sm:$0xff] %v3544
        %4569 = vst [vmem:[%s135 + $0xa78] sm:$0xff] %v3545
        %4570 = vst [vmem:[%s135 + $0xa80] sm:$0xff] %v3546
        %4571 = vst [vmem:[%s135 + $0xa88] sm:$0xff] %v3547
        %4572 = vst [vmem:[%s135 + $0xa90] sm:$0xff] %v3548
        %4573 = vst [vmem:[%s135 + $0xa98] sm:$0xff] %v3549
        %4574 = vst [vmem:[%s135 + $0xaa0] sm:$0xff] %v3550
        %4575 = vst [vmem:[%s135 + $0xaa8] sm:$0xff] %v3551
        %4576 = vst [vmem:[%s135 + $0xab0] sm:$0xff] %v3552
        %4577 = vst [vmem:[%s135 + $0xab8] sm:$0xff] %v3553
        %4578 = vst [vmem:[%s135 + $0xac0] sm:$0xff] %v3554
        %4579 = vst [vmem:[%s135 + $0xac8] sm:$0xff] %v3555
        %4580 = vst [vmem:[%s135 + $0xad0] sm:$0xff] %v3556
        %4581 = vst [vmem:[%s135 + $0xad8] sm:$0xff] %v3557
        %4582 = vst [vmem:[%s135 + $0xae0] sm:$0xff] %v3558
        %4583 = vst [vmem:[%s135 + $0xae8] sm:$0xff] %v3559
        %4584 = vst [vmem:[%s135 + $0xaf0] sm:$0xff] %v3560
        %4585 = vst [vmem:[%s135 + $0xaf8] sm:$0xff] %v3561
        %4586 = vst [vmem:[%s135 + $0xb00] sm:$0xff] %v3562
        %4587 = vst [vmem:[%s135 + $0xb08] sm:$0xff] %v3563
        %4588 = vst [vmem:[%s135 + $0xb10] sm:$0xff] %v3564
        %4589 = vst [vmem:[%s135 + $0xb18] sm:$0xff] %v3565
        %4590 = vst [vmem:[%s135 + $0xb20] sm:$0xff] %v3566
        %4591 = vst [vmem:[%s135 + $0xb28] sm:$0xff] %v3567
        %4592 = vst [vmem:[%s135 + $0xb30] sm:$0xff] %v3568
        %4593 = vst [vmem:[%s135 + $0xb38] sm:$0xff] %v3569
        %4594 = vst [vmem:[%s135 + $0xb40] sm:$0xff] %v3570
        %4595 = vst [vmem:[%s135 + $0xb48] sm:$0xff] %v3571
        %4596 = vst [vmem:[%s135 + $0xb50] sm:$0xff] %v3572
        %4597 = vst [vmem:[%s135 + $0xb58] sm:$0xff] %v3573
        %4598 = vst [vmem:[%s135 + $0xb60] sm:$0xff] %v3574
        %4599 = vst [vmem:[%s135 + $0xb68] sm:$0xff] %v3575
        %4600 = vst [vmem:[%s135 + $0xb70] sm:$0xff] %v3576
        %4601 = vst [vmem:[%s135 + $0xb78] sm:$0xff] %v3577
        %4602 = vst [vmem:[%s135 + $0xb80] sm:$0xff] %v3578
        %4603 = vst [vmem:[%s135 + $0xb88] sm:$0xff] %v3579
        %4604 = vst [vmem:[%s135 + $0xb90] sm:$0xff] %v3580
        %4605 = vst [vmem:[%s135 + $0xb98] sm:$0xff] %v3581
        %4606 = vst [vmem:[%s135 + $0xba0] sm:$0xff] %v3582
        %4607 = vst [vmem:[%s135 + $0xba8] sm:$0xff] %v3583
        %4608 = vst [vmem:[%s135 + $0xbb0] sm:$0xff] %v3584
        %4609 = vst [vmem:[%s135 + $0xbb8] sm:$0xff] %v3585
        %4610 = vst [vmem:[%s135 + $0xbc0] sm:$0xff] %v3586
        %4611 = vst [vmem:[%s135 + $0xbc8] sm:$0xff] %v3587
        %4612 = vst [vmem:[%s135 + $0xbd0] sm:$0xff] %v3588
        %4613 = vst [vmem:[%s135 + $0xbd8] sm:$0xff] %v3589
        %4614 = vst [vmem:[%s135 + $0xbe0] sm:$0xff] %v3590
        %4615 = vst [vmem:[%s135 + $0xbe8] sm:$0xff] %v3591
        %4616 = vst [vmem:[%s135 + $0xbf0] sm:$0xff] %v3592
        %4617 = vst [vmem:[%s135 + $0xbf8] sm:$0xff] %v3593
        %4618 = vst [vmem:[%s135 + $0xc00] sm:$0xff] %v3594
        %4619 = vst [vmem:[%s135 + $0xc08] sm:$0xff] %v3595
        %4620 = vst [vmem:[%s135 + $0xc10] sm:$0xff] %v3596
        %4621 = vst [vmem:[%s135 + $0xc18] sm:$0xff] %v3597
        %4622 = vst [vmem:[%s135 + $0xc20] sm:$0xff] %v3598
        %4623 = vst [vmem:[%s135 + $0xc28] sm:$0xff] %v3599
        %4624 = vst [vmem:[%s135 + $0xc30] sm:$0xff] %v3600
        %4625 = vst [vmem:[%s135 + $0xc38] sm:$0xff] %v3601
        %4626 = vst [vmem:[%s135 + $0xc40] sm:$0xff] %v3602
        %4627 = vst [vmem:[%s135 + $0xc48] sm:$0xff] %v3603
        %4628 = vst [vmem:[%s135 + $0xc50] sm:$0xff] %v3604
        %4629 = vst [vmem:[%s135 + $0xc58] sm:$0xff] %v3605
        %4630 = vst [vmem:[%s135 + $0xc60] sm:$0xff] %v3606
        %4631 = vst [vmem:[%s135 + $0xc68] sm:$0xff] %v3607
        %4632 = vst [vmem:[%s135 + $0xc70] sm:$0xff] %v3608
        %4633 = vst [vmem:[%s135 + $0xc78] sm:$0xff] %v3609
        %4634 = vst [vmem:[%s135 + $0xc80] sm:$0xff] %v3610
        %4635 = vst [vmem:[%s135 + $0xc88] sm:$0xff] %v3611
        %4636 = vst [vmem:[%s135 + $0xc90] sm:$0xff] %v3612
        %4637 = vst [vmem:[%s135 + $0xc98] sm:$0xff] %v3613
        %4638 = vst [vmem:[%s135 + $0xca0] sm:$0xff] %v3614
        %4639 = vst [vmem:[%s135 + $0xca8] sm:$0xff] %v3615
        %4640 = vst [vmem:[%s135 + $0xcb0] sm:$0xff] %v3616
        %4641 = vst [vmem:[%s135 + $0xcb8] sm:$0xff] %v3617
        %4642 = vst [vmem:[%s135 + $0xcc0] sm:$0xff] %v3618
        %4643 = vst [vmem:[%s135 + $0xcc8] sm:$0xff] %v3619
        %4644 = vst [vmem:[%s135 + $0xcd0] sm:$0xff] %v3620
        %4645 = vst [vmem:[%s135 + $0xcd8] sm:$0xff] %v3621
        %4646 = vst [vmem:[%s135 + $0xce0] sm:$0xff] %v3622
        %4647 = vst [vmem:[%s135 + $0xce8] sm:$0xff] %v3623
        %4648 = vst [vmem:[%s135 + $0xcf0] sm:$0xff] %v3624
        %4649 = vst [vmem:[%s135 + $0xcf8] sm:$0xff] %v3625
        %4650 = vst [vmem:[%s135 + $0xd00] sm:$0xff] %v3626
        %4651 = vst [vmem:[%s135 + $0xd08] sm:$0xff] %v3627
        %4652 = vst [vmem:[%s135 + $0xd10] sm:$0xff] %v3628
        %4653 = vst [vmem:[%s135 + $0xd18] sm:$0xff] %v3629
        %4654 = vst [vmem:[%s135 + $0xd20] sm:$0xff] %v3630
        %4655 = vst [vmem:[%s135 + $0xd28] sm:$0xff] %v3631
        %4656 = vst [vmem:[%s135 + $0xd30] sm:$0xff] %v3632
        %4657 = vst [vmem:[%s135 + $0xd38] sm:$0xff] %v3633
        %4658 = vst [vmem:[%s135 + $0xd40] sm:$0xff] %v3634
        %4659 = vst [vmem:[%s135 + $0xd48] sm:$0xff] %v3635
        %4660 = vst [vmem:[%s135 + $0xd50] sm:$0xff] %v3636
        %4661 = vst [vmem:[%s135 + $0xd58] sm:$0xff] %v3637
        %4662 = vst [vmem:[%s135 + $0xd60] sm:$0xff] %v3638
        %4663 = vst [vmem:[%s135 + $0xd68] sm:$0xff] %v3639
        %4664 = vst [vmem:[%s135 + $0xd70] sm:$0xff] %v3640
        %4665 = vst [vmem:[%s135 + $0xd78] sm:$0xff] %v3641
        %4666 = vst [vmem:[%s135 + $0xd80] sm:$0xff] %v3642
        %4667 = vst [vmem:[%s135 + $0xd88] sm:$0xff] %v3643
        %4668 = vst [vmem:[%s135 + $0xd90] sm:$0xff] %v3644
        %4669 = vst [vmem:[%s135 + $0xd98] sm:$0xff] %v3645
        %4670 = vst [vmem:[%s135 + $0xda0] sm:$0xff] %v3646
        %4671 = vst [vmem:[%s135 + $0xda8] sm:$0xff] %v3647
        %4672 = vst [vmem:[%s135 + $0xdb0] sm:$0xff] %v3648
        %4673 = vst [vmem:[%s135 + $0xdb8] sm:$0xff] %v3649
        %4674 = vst [vmem:[%s135 + $0xdc0] sm:$0xff] %v3650
        %4675 = vst [vmem:[%s135 + $0xdc8] sm:$0xff] %v3651
        %4676 = vst [vmem:[%s135 + $0xdd0] sm:$0xff] %v3652
        %4677 = vst [vmem:[%s135 + $0xdd8] sm:$0xff] %v3653
        %4678 = vst [vmem:[%s135 + $0xde0] sm:$0xff] %v3654
        %4679 = vst [vmem:[%s135 + $0xde8] sm:$0xff] %v3655
        %4680 = vst [vmem:[%s135 + $0xdf0] sm:$0xff] %v3656
        %4681 = vst [vmem:[%s135 + $0xdf8] sm:$0xff] %v3657
        %4682 = vst [vmem:[%s135 + $0xe00] sm:$0xff] %v3658
        %4683 = vst [vmem:[%s135 + $0xe08] sm:$0xff] %v3659
        %4684 = vst [vmem:[%s135 + $0xe10] sm:$0xff] %v3660
        %4685 = vst [vmem:[%s135 + $0xe18] sm:$0xff] %v3661
        %4686 = vst [vmem:[%s135 + $0xe20] sm:$0xff] %v3662
        %4687 = vst [vmem:[%s135 + $0xe28] sm:$0xff] %v3663
        %4688 = vst [vmem:[%s135 + $0xe30] sm:$0xff] %v3664
        %4689 = vst [vmem:[%s135 + $0xe38] sm:$0xff] %v3665
        %4690 = vst [vmem:[%s135 + $0xe40] sm:$0xff] %v3666
        %4691 = vst [vmem:[%s135 + $0xe48] sm:$0xff] %v3667
        %4692 = vst [vmem:[%s135 + $0xe50] sm:$0xff] %v3668
        %4693 = vst [vmem:[%s135 + $0xe58] sm:$0xff] %v3669
        %4694 = vst [vmem:[%s135 + $0xe60] sm:$0xff] %v3670
        %4695 = vst [vmem:[%s135 + $0xe68] sm:$0xff] %v3671
        %4696 = vst [vmem:[%s135 + $0xe70] sm:$0xff] %v3672
        %4697 = vst [vmem:[%s135 + $0xe78] sm:$0xff] %v3673
        %4698 = vst [vmem:[%s135 + $0xe80] sm:$0xff] %v3674
        %4699 = vst [vmem:[%s135 + $0xe88] sm:$0xff] %v3675
        %4700 = vst [vmem:[%s135 + $0xe90] sm:$0xff] %v3676
        %4701 = vst [vmem:[%s135 + $0xe98] sm:$0xff] %v3677
        %4702 = vst [vmem:[%s135 + $0xea0] sm:$0xff] %v3678
        %4703 = vst [vmem:[%s135 + $0xea8] sm:$0xff] %v3679
        %4704 = vst [vmem:[%s135 + $0xeb0] sm:$0xff] %v3680
        %4705 = vst [vmem:[%s135 + $0xeb8] sm:$0xff] %v3681
        %4706 = vst [vmem:[%s135 + $0xec0] sm:$0xff] %v3682
        %4707 = vst [vmem:[%s135 + $0xec8] sm:$0xff] %v3683
        %4708 = vst [vmem:[%s135 + $0xed0] sm:$0xff] %v3684
        %4709 = vst [vmem:[%s135 + $0xed8] sm:$0xff] %v3685
        %4710 = vst [vmem:[%s135 + $0xee0] sm:$0xff] %v3686
        %4711 = vst [vmem:[%s135 + $0xee8] sm:$0xff] %v3687
        %4712 = vst [vmem:[%s135 + $0xef0] sm:$0xff] %v3688
        %4713 = vst [vmem:[%s135 + $0xef8] sm:$0xff] %v3689
        %4714 = vst [vmem:[%s135 + $0xf00] sm:$0xff] %v3690
        %4715 = vst [vmem:[%s135 + $0xf08] sm:$0xff] %v3691
        %4716 = vst [vmem:[%s135 + $0xf10] sm:$0xff] %v3692
        %4717 = vst [vmem:[%s135 + $0xf18] sm:$0xff] %v3693
        %4718 = vst [vmem:[%s135 + $0xf20] sm:$0xff] %v3694
        %4719 = vst [vmem:[%s135 + $0xf28] sm:$0xff] %v3695
        %4720 = vst [vmem:[%s135 + $0xf30] sm:$0xff] %v3696
        %4721 = vst [vmem:[%s135 + $0xf38] sm:$0xff] %v3697
        %4722 = vst [vmem:[%s135 + $0xf40] sm:$0xff] %v3698
        %4723 = vst [vmem:[%s135 + $0xf48] sm:$0xff] %v3699
        %4724 = vst [vmem:[%s135 + $0xf50] sm:$0xff] %v3700
        %4725 = vst [vmem:[%s135 + $0xf58] sm:$0xff] %v3701
        %4726 = vst [vmem:[%s135 + $0xf60] sm:$0xff] %v3702
        %4727 = vst [vmem:[%s135 + $0xf68] sm:$0xff] %v3703
        %4728 = vst [vmem:[%s135 + $0xf70] sm:$0xff] %v3704
        %4729 = vst [vmem:[%s135 + $0xf78] sm:$0xff] %v3705
        %4730 = vst [vmem:[%s135 + $0xf80] sm:$0xff] %v3706
        %4731 = vst [vmem:[%s135 + $0xf88] sm:$0xff] %v3707
        %4732 = vst [vmem:[%s135 + $0xf90] sm:$0xff] %v3708
        %4733 = vst [vmem:[%s135 + $0xf98] sm:$0xff] %v3709
        %4734 = vst [vmem:[%s135 + $0xfa0] sm:$0xff] %v3710
        %4735 = vst [vmem:[%s135 + $0xfa8] sm:$0xff] %v3711
        %4736 = vst [vmem:[%s135 + $0xfb0] sm:$0xff] %v3712
        %4737 = vst [vmem:[%s135 + $0xfb8] sm:$0xff] %v3713
        %4738 = vst [vmem:[%s135 + $0xfc0] sm:$0xff] %v3714
        %4739 = vst [vmem:[%s135 + $0xfc8] sm:$0xff] %v3715
        %4740 = vst [vmem:[%s135 + $0xfd0] sm:$0xff] %v3716
        %4741 = vst [vmem:[%s135 + $0xfd8] sm:$0xff] %v3717
        %4742 = vst [vmem:[%s135 + $0xfe0] sm:$0xff] %v3718
        %4743 = vst [vmem:[%s135 + $0xfe8] sm:$0xff] %v3719
        %4744 = vst [vmem:[%s135 + $0xff0] sm:$0xff] %v3720
        %4745 = vst [vmem:[%s135 + $0xff8] sm:$0xff] %v3721
        %4746 = vst [vmem:[%s135 + $0x1000] sm:$0xff] %v3722
        %4747 = vst [vmem:[%s135 + $0x1008] sm:$0xff] %v3723
        %4748 = vst [vmem:[%s135 + $0x1010] sm:$0xff] %v3724
        %4749 = vst [vmem:[%s135 + $0x1018] sm:$0xff] %v3725
        %4750 = vst [vmem:[%s135 + $0x1020] sm:$0xff] %v3726
        %4751 = vst [vmem:[%s135 + $0x1028] sm:$0xff] %v3727
        %4752 = vst [vmem:[%s135 + $0x1030] sm:$0xff] %v3728
        %4753 = vst [vmem:[%s135 + $0x1038] sm:$0xff] %v3729
        %4754 = vst [vmem:[%s135 + $0x1040] sm:$0xff] %v3730
        %4755 = vst [vmem:[%s135 + $0x1048] sm:$0xff] %v3731
        %4756 = vst [vmem:[%s135 + $0x1050] sm:$0xff] %v3732
        %4757 = vst [vmem:[%s135 + $0x1058] sm:$0xff] %v3733
        %4758 = vst [vmem:[%s135 + $0x1060] sm:$0xff] %v3734
        %4759 = vst [vmem:[%s135 + $0x1068] sm:$0xff] %v3735
        %4760 = vst [vmem:[%s135 + $0x1070] sm:$0xff] %v3736
        %4761 = vst [vmem:[%s135 + $0x1078] sm:$0xff] %v3737
        %4762 = vst [vmem:[%s135 + $0x1080] sm:$0xff] %v3738
        %4763 = vst [vmem:[%s135 + $0x1088] sm:$0xff] %v3739
        %4764 = vst [vmem:[%s135 + $0x1090] sm:$0xff] %v3740
        %4765 = vst [vmem:[%s135 + $0x1098] sm:$0xff] %v3741
        %4766 = vst [vmem:[%s135 + $0x10a0] sm:$0xff] %v3742
        %4767 = vst [vmem:[%s135 + $0x10a8] sm:$0xff] %v3743
        %4768 = vst [vmem:[%s135 + $0x10b0] sm:$0xff] %v3744
        %4769 = vst [vmem:[%s135 + $0x10b8] sm:$0xff] %v3745
        %4770 = vst [vmem:[%s135 + $0x10c0] sm:$0xff] %v3746
        %4771 = vst [vmem:[%s135 + $0x10c8] sm:$0xff] %v3747
        %4772 = vst [vmem:[%s135 + $0x10d0] sm:$0xff] %v3748
        %4773 = vst [vmem:[%s135 + $0x10d8] sm:$0xff] %v3749
        %4774 = vst [vmem:[%s135 + $0x10e0] sm:$0xff] %v3750
        %4775 = vst [vmem:[%s135 + $0x10e8] sm:$0xff] %v3751
        %4776 = vst [vmem:[%s135 + $0x10f0] sm:$0xff] %v3752
        %4777 = vst [vmem:[%s135 + $0x10f8] sm:$0xff] %v3753
        %4778 = vst [vmem:[%s135 + $0x1100] sm:$0xff] %v3754
        %4779 = vst [vmem:[%s135 + $0x1108] sm:$0xff] %v3755
        %4780 = vst [vmem:[%s135 + $0x1110] sm:$0xff] %v3756
        %4781 = vst [vmem:[%s135 + $0x1118] sm:$0xff] %v3757
        %4782 = vst [vmem:[%s135 + $0x1120] sm:$0xff] %v3758
        %4783 = vst [vmem:[%s135 + $0x1128] sm:$0xff] %v3759
        %4784 = vst [vmem:[%s135 + $0x1130] sm:$0xff] %v3760
        %4785 = vst [vmem:[%s135 + $0x1138] sm:$0xff] %v3761
        %4786 = vst [vmem:[%s135 + $0x1140] sm:$0xff] %v3762
        %4787 = vst [vmem:[%s135 + $0x1148] sm:$0xff] %v3763
        %4788 = vst [vmem:[%s135 + $0x1150] sm:$0xff] %v3764
        %4789 = vst [vmem:[%s135 + $0x1158] sm:$0xff] %v3765
        %4790 = vst [vmem:[%s135 + $0x1160] sm:$0xff] %v3766
        %4791 = vst [vmem:[%s135 + $0x1168] sm:$0xff] %v3767
        %4792 = vst [vmem:[%s135 + $0x1170] sm:$0xff] %v3768
        %4793 = vst [vmem:[%s135 + $0x1178] sm:$0xff] %v3769
        %4794 = vst [vmem:[%s135 + $0x1180] sm:$0xff] %v3770
        %4795 = vst [vmem:[%s135 + $0x1188] sm:$0xff] %v3771
        %4796 = vst [vmem:[%s135 + $0x1190] sm:$0xff] %v3772
        %4797 = vst [vmem:[%s135 + $0x1198] sm:$0xff] %v3773
        %4798 = vst [vmem:[%s135 + $0x11a0] sm:$0xff] %v3774
        %4799 = vst [vmem:[%s135 + $0x11a8] sm:$0xff] %v3775
        %4800 = vst [vmem:[%s135 + $0x11b0] sm:$0xff] %v3776
        %4801 = vst [vmem:[%s135 + $0x11b8] sm:$0xff] %v3777
        %4802 = vst [vmem:[%s135 + $0x11c0] sm:$0xff] %v3778
        %4803 = vst [vmem:[%s135 + $0x11c8] sm:$0xff] %v3779
        %4804 = vst [vmem:[%s135 + $0x11d0] sm:$0xff] %v3780
        %4805 = vst [vmem:[%s135 + $0x11d8] sm:$0xff] %v3781
        %4806 = vst [vmem:[%s135 + $0x11e0] sm:$0xff] %v3782
        %4807 = vst [vmem:[%s135 + $0x11e8] sm:$0xff] %v3783
        %4808 = vst [vmem:[%s135 + $0x11f0] sm:$0xff] %v3784
        %4809 = vst [vmem:[%s135 + $0x11f8] sm:$0xff] %v3785
        %4810 = vst [vmem:[%s135 + $0x1200] sm:$0xff] %v3786
        %4811 = vst [vmem:[%s135 + $0x1208] sm:$0xff] %v3787
        %4812 = vst [vmem:[%s135 + $0x1210] sm:$0xff] %v3788
        %4813 = vst [vmem:[%s135 + $0x1218] sm:$0xff] %v3789
        %4814 = vst [vmem:[%s135 + $0x1220] sm:$0xff] %v3790
        %4815 = vst [vmem:[%s135 + $0x1228] sm:$0xff] %v3791
        %4816 = vst [vmem:[%s135 + $0x1230] sm:$0xff] %v3792
        %4817 = vst [vmem:[%s135 + $0x1238] sm:$0xff] %v3793
        %4818 = vst [vmem:[%s135 + $0x1240] sm:$0xff] %v3794
        %4819 = vst [vmem:[%s135 + $0x1248] sm:$0xff] %v3795
        %4820 = vst [vmem:[%s135 + $0x1250] sm:$0xff] %v3796
        %4821 = vst [vmem:[%s135 + $0x1258] sm:$0xff] %v3797
        %4822 = vst [vmem:[%s135 + $0x1260] sm:$0xff] %v3798
        %4823 = vst [vmem:[%s135 + $0x1268] sm:$0xff] %v3799
        %4824 = vst [vmem:[%s135 + $0x1270] sm:$0xff] %v3800
        %4825 = vst [vmem:[%s135 + $0x1278] sm:$0xff] %v3801
        %4826 = vst [vmem:[%s135 + $0x1280] sm:$0xff] %v3802
        %4827 = vst [vmem:[%s135 + $0x1288] sm:$0xff] %v3803
        %4828 = vst [vmem:[%s135 + $0x1290] sm:$0xff] %v3804
        %4829 = vst [vmem:[%s135 + $0x1298] sm:$0xff] %v3805
        %4830 = vst [vmem:[%s135 + $0x12a0] sm:$0xff] %v3806
        %4831 = vst [vmem:[%s135 + $0x12a8] sm:$0xff] %v3807
        %4832 = vst [vmem:[%s135 + $0x12b0] sm:$0xff] %v3808
        %4833 = vst [vmem:[%s135 + $0x12b8] sm:$0xff] %v3809
        %4834 = vst [vmem:[%s135 + $0x12c0] sm:$0xff] %v3810
        %4835 = vst [vmem:[%s135 + $0x12c8] sm:$0xff] %v3811
        %4836 = vst [vmem:[%s135 + $0x12d0] sm:$0xff] %v3812
        %4837 = vst [vmem:[%s135 + $0x12d8] sm:$0xff] %v3813
        %4838 = vst [vmem:[%s135 + $0x12e0] sm:$0xff] %v3814
        %4839 = vst [vmem:[%s135 + $0x12e8] sm:$0xff] %v3815
        %4840 = vst [vmem:[%s135 + $0x12f0] sm:$0xff] %v3816
        %4841 = vst [vmem:[%s135 + $0x12f8] sm:$0xff] %v3817
        %4842 = vst [vmem:[%s135 + $0x1300] sm:$0xff] %v3818
        %4843 = vst [vmem:[%s135 + $0x1308] sm:$0xff] %v3819
        %4844 = vst [vmem:[%s135 + $0x1310] sm:$0xff] %v3820
        %4845 = vst [vmem:[%s135 + $0x1318] sm:$0xff] %v3821
        %4846 = vst [vmem:[%s135 + $0x1320] sm:$0xff] %v3822
        %4847 = vst [vmem:[%s135 + $0x1328] sm:$0xff] %v3823
        %4848 = vst [vmem:[%s135 + $0x1330] sm:$0xff] %v3824
        %4849 = vst [vmem:[%s135 + $0x1338] sm:$0xff] %v3825
        %4850 = vst [vmem:[%s135 + $0x1340] sm:$0xff] %v3826
        %4851 = vst [vmem:[%s135 + $0x1348] sm:$0xff] %v3827
        %4852 = vst [vmem:[%s135 + $0x1350] sm:$0xff] %v3828
        %4853 = vst [vmem:[%s135 + $0x1358] sm:$0xff] %v3829
        %4854 = vst [vmem:[%s135 + $0x1360] sm:$0xff] %v3830
        %4855 = vst [vmem:[%s135 + $0x1368] sm:$0xff] %v3831
        %4856 = vst [vmem:[%s135 + $0x1370] sm:$0xff] %v3832
        %4857 = vst [vmem:[%s135 + $0x1378] sm:$0xff] %v3833
        %4858 = vst [vmem:[%s135 + $0x1380] sm:$0xff] %v3834
        %4859 = vst [vmem:[%s135 + $0x1388] sm:$0xff] %v3835
        %4860 = vst [vmem:[%s135 + $0x1390] sm:$0xff] %v3836
        %4861 = vst [vmem:[%s135 + $0x1398] sm:$0xff] %v3837
        %4862 = vst [vmem:[%s135 + $0x13a0] sm:$0xff] %v3838
        %4863 = vst [vmem:[%s135 + $0x13a8] sm:$0xff] %v3839
        %4864 = vst [vmem:[%s135 + $0x13b0] sm:$0xff] %v3840
        %4865 = vst [vmem:[%s135 + $0x13b8] sm:$0xff] %v3841
        %4866 = vst [vmem:[%s135 + $0x13c0] sm:$0xff] %v3842
        %4867 = vst [vmem:[%s135 + $0x13c8] sm:$0xff] %v3843
        %4868 = vst [vmem:[%s135 + $0x13d0] sm:$0xff] %v3844
        %4869 = vst [vmem:[%s135 + $0x13d8] sm:$0xff] %v3845
        %4870 = vst [vmem:[%s135 + $0x13e0] sm:$0xff] %v3846
        %4871 = vst [vmem:[%s135 + $0x13e8] sm:$0xff] %v3847
        %4872 = vst [vmem:[%s135 + $0x13f0] sm:$0xff] %v3848
        %4873 = vst [vmem:[%s135 + $0x13f8] sm:$0xff] %v3849
        %4874 = vst [vmem:[%s135 + $0x1400] sm:$0xff] %v3850
        %4875 = vst [vmem:[%s135 + $0x1408] sm:$0xff] %v3851
        %4876 = vst [vmem:[%s135 + $0x1410] sm:$0xff] %v3852
        %4877 = vst [vmem:[%s135 + $0x1418] sm:$0xff] %v3853
        %4878 = vst [vmem:[%s135 + $0x1420] sm:$0xff] %v3854
        %4879 = vst [vmem:[%s135 + $0x1428] sm:$0xff] %v3855
        %4880 = vst [vmem:[%s135 + $0x1430] sm:$0xff] %v3856
        %4881 = vst [vmem:[%s135 + $0x1438] sm:$0xff] %v3857
        %4882 = vst [vmem:[%s135 + $0x1440] sm:$0xff] %v3858
        %4883 = vst [vmem:[%s135 + $0x1448] sm:$0xff] %v3859
        %4884 = vst [vmem:[%s135 + $0x1450] sm:$0xff] %v3860
        %4885 = vst [vmem:[%s135 + $0x1458] sm:$0xff] %v3861
        %4886 = vst [vmem:[%s135 + $0x1460] sm:$0xff] %v3862
        %4887 = vst [vmem:[%s135 + $0x1468] sm:$0xff] %v3863
        %4888 = vst [vmem:[%s135 + $0x1470] sm:$0xff] %v3864
        %4889 = vst [vmem:[%s135 + $0x1478] sm:$0xff] %v3865
        %4890 = vst [vmem:[%s135 + $0x1480] sm:$0xff] %v3866
        %4891 = vst [vmem:[%s135 + $0x1488] sm:$0xff] %v3867
        %4892 = vst [vmem:[%s135 + $0x1490] sm:$0xff] %v3868
        %4893 = vst [vmem:[%s135 + $0x1498] sm:$0xff] %v3869
        %4894 = vst [vmem:[%s135 + $0x14a0] sm:$0xff] %v3870
        %4895 = vst [vmem:[%s135 + $0x14a8] sm:$0xff] %v3871
        %4896 = vst [vmem:[%s135 + $0x14b0] sm:$0xff] %v3872
        %4897 = vst [vmem:[%s135 + $0x14b8] sm:$0xff] %v3873
        %4898 = vst [vmem:[%s135 + $0x14c0] sm:$0xff] %v3874
        %4899 = vst [vmem:[%s135 + $0x14c8] sm:$0xff] %v3875
        %4900 = vst [vmem:[%s135 + $0x14d0] sm:$0xff] %v3876
        %4901 = vst [vmem:[%s135 + $0x14d8] sm:$0xff] %v3877
        %4902 = vst [vmem:[%s135 + $0x14e0] sm:$0xff] %v3878
        %4903 = vst [vmem:[%s135 + $0x14e8] sm:$0xff] %v3879
        %4904 = vst [vmem:[%s135 + $0x14f0] sm:$0xff] %v3880
        %4905 = vst [vmem:[%s135 + $0x14f8] sm:$0xff] %v3881
        %4906 = vst [vmem:[%s135 + $0x1500] sm:$0xff] %v3882
        %4907 = vst [vmem:[%s135 + $0x1508] sm:$0xff] %v3883
        %4908 = vst [vmem:[%s135 + $0x1510] sm:$0xff] %v3884
        %4909 = vst [vmem:[%s135 + $0x1518] sm:$0xff] %v3885
        %4910 = vst [vmem:[%s135 + $0x1520] sm:$0xff] %v3886
        %4911 = vst [vmem:[%s135 + $0x1528] sm:$0xff] %v3887
        %4912 = vst [vmem:[%s135 + $0x1530] sm:$0xff] %v3888
        %4913 = vst [vmem:[%s135 + $0x1538] sm:$0xff] %v3889
        %4914 = vst [vmem:[%s135 + $0x1540] sm:$0xff] %v3890
        %4915 = vst [vmem:[%s135 + $0x1548] sm:$0xff] %v3891
        %4916 = vst [vmem:[%s135 + $0x1550] sm:$0xff] %v3892
        %4917 = vst [vmem:[%s135 + $0x1558] sm:$0xff] %v3893
        %4918 = vst [vmem:[%s135 + $0x1560] sm:$0xff] %v3894
        %4919 = vst [vmem:[%s135 + $0x1568] sm:$0xff] %v3895
        %4920 = vst [vmem:[%s135 + $0x1570] sm:$0xff] %v3896
        %4921 = vst [vmem:[%s135 + $0x1578] sm:$0xff] %v3897
        %4922 = vst [vmem:[%s135 + $0x1580] sm:$0xff] %v3898
        %4923 = vst [vmem:[%s135 + $0x1588] sm:$0xff] %v3899
        %4924 = vst [vmem:[%s135 + $0x1590] sm:$0xff] %v3900
        %4925 = vst [vmem:[%s135 + $0x1598] sm:$0xff] %v3901
        %4926 = vst [vmem:[%s135 + $0x15a0] sm:$0xff] %v3902
        %4927 = vst [vmem:[%s135 + $0x15a8] sm:$0xff] %v3903
        %4928 = vst [vmem:[%s135 + $0x15b0] sm:$0xff] %v3904
        %4929 = vst [vmem:[%s135 + $0x15b8] sm:$0xff] %v3905
        %4930 = vst [vmem:[%s135 + $0x15c0] sm:$0xff] %v3906
        %4931 = vst [vmem:[%s135 + $0x15c8] sm:$0xff] %v3907
        %4932 = vst [vmem:[%s135 + $0x15d0] sm:$0xff] %v3908
        %4933 = vst [vmem:[%s135 + $0x15d8] sm:$0xff] %v3909
        %4934 = vst [vmem:[%s135 + $0x15e0] sm:$0xff] %v3910
        %4935 = vst [vmem:[%s135 + $0x15e8] sm:$0xff] %v3911
        %4936 = vst [vmem:[%s135 + $0x15f0] sm:$0xff] %v3912
        %4937 = vst [vmem:[%s135 + $0x15f8] sm:$0xff] %v3913
        %4938 = vst [vmem:[%s135 + $0x1600] sm:$0xff] %v3914
        %4939 = vst [vmem:[%s135 + $0x1608] sm:$0xff] %v3915
        %4940 = vst [vmem:[%s135 + $0x1610] sm:$0xff] %v3916
        %4941 = vst [vmem:[%s135 + $0x1618] sm:$0xff] %v3917
        %4942 = vst [vmem:[%s135 + $0x1620] sm:$0xff] %v3918
        %4943 = vst [vmem:[%s135 + $0x1628] sm:$0xff] %v3919
        %4944 = vst [vmem:[%s135 + $0x1630] sm:$0xff] %v3920
        %4945 = vst [vmem:[%s135 + $0x1638] sm:$0xff] %v3921
        %4946 = vst [vmem:[%s135 + $0x1640] sm:$0xff] %v3922
        %4947 = vst [vmem:[%s135 + $0x1648] sm:$0xff] %v3923
        %4948 = vst [vmem:[%s135 + $0x1650] sm:$0xff] %v3924
        %4949 = vst [vmem:[%s135 + $0x1658] sm:$0xff] %v3925
        %4950 = vst [vmem:[%s135 + $0x1660] sm:$0xff] %v3926
        %4951 = vst [vmem:[%s135 + $0x1668] sm:$0xff] %v3927
        %4952 = vst [vmem:[%s135 + $0x1670] sm:$0xff] %v3928
        %4953 = vst [vmem:[%s135 + $0x1678] sm:$0xff] %v3929
        %4954 = vst [vmem:[%s135 + $0x1680] sm:$0xff] %v3930
        %4955 = vst [vmem:[%s135 + $0x1688] sm:$0xff] %v3931
        %4956 = vst [vmem:[%s135 + $0x1690] sm:$0xff] %v3932
        %4957 = vst [vmem:[%s135 + $0x1698] sm:$0xff] %v3933
        %4958 = vst [vmem:[%s135 + $0x16a0] sm:$0xff] %v3934
        %4959 = vst [vmem:[%s135 + $0x16a8] sm:$0xff] %v3935
        %4960 = vst [vmem:[%s135 + $0x16b0] sm:$0xff] %v3936
        %4961 = vst [vmem:[%s135 + $0x16b8] sm:$0xff] %v3937
        %4962 = vst [vmem:[%s135 + $0x16c0] sm:$0xff] %v3938
        %4963 = vst [vmem:[%s135 + $0x16c8] sm:$0xff] %v3939
        %4964 = vst [vmem:[%s135 + $0x16d0] sm:$0xff] %v3940
        %4965 = vst [vmem:[%s135 + $0x16d8] sm:$0xff] %v3941
        %4966 = vst [vmem:[%s135 + $0x16e0] sm:$0xff] %v3942
        %4967 = vst [vmem:[%s135 + $0x16e8] sm:$0xff] %v3943
        %4968 = vst [vmem:[%s135 + $0x16f0] sm:$0xff] %v3944
        %4969 = vst [vmem:[%s135 + $0x16f8] sm:$0xff] %v3945
        %4970 = vst [vmem:[%s135 + $0x1700] sm:$0xff] %v3946
        %4971 = vst [vmem:[%s135 + $0x1708] sm:$0xff] %v3947
        %4972 = vst [vmem:[%s135 + $0x1710] sm:$0xff] %v3948
        %4973 = vst [vmem:[%s135 + $0x1718] sm:$0xff] %v3949
        %4974 = vst [vmem:[%s135 + $0x1720] sm:$0xff] %v3950
        %4975 = vst [vmem:[%s135 + $0x1728] sm:$0xff] %v3951
        %4976 = vst [vmem:[%s135 + $0x1730] sm:$0xff] %v3952
        %4977 = vst [vmem:[%s135 + $0x1738] sm:$0xff] %v3953
        %4978 = vst [vmem:[%s135 + $0x1740] sm:$0xff] %v3954
        %4979 = vst [vmem:[%s135 + $0x1748] sm:$0xff] %v3955
        %4980 = vst [vmem:[%s135 + $0x1750] sm:$0xff] %v3956
        %4981 = vst [vmem:[%s135 + $0x1758] sm:$0xff] %v3957
        %4982 = vst [vmem:[%s135 + $0x1760] sm:$0xff] %v3958
        %4983 = vst [vmem:[%s135 + $0x1768] sm:$0xff] %v3959
        %4984 = vst [vmem:[%s135 + $0x1770] sm:$0xff] %v3960
        %4985 = vst [vmem:[%s135 + $0x1778] sm:$0xff] %v3961
        %4986 = vst [vmem:[%s135 + $0x1780] sm:$0xff] %v3962
        %4987 = vst [vmem:[%s135 + $0x1788] sm:$0xff] %v3963
        %4988 = vst [vmem:[%s135 + $0x1790] sm:$0xff] %v3964
        %4989 = vst [vmem:[%s135 + $0x1798] sm:$0xff] %v3965
        %4990 = vst [vmem:[%s135 + $0x17a0] sm:$0xff] %v3966
        %4991 = vst [vmem:[%s135 + $0x17a8] sm:$0xff] %v3967
        %4992 = vst [vmem:[%s135 + $0x17b0] sm:$0xff] %v3968
        %4993 = vst [vmem:[%s135 + $0x17b8] sm:$0xff] %v3969
        %4994 = vst [vmem:[%s135 + $0x17c0] sm:$0xff] %v3970
        %4995 = vst [vmem:[%s135 + $0x17c8] sm:$0xff] %v3971
        %4996 = vst [vmem:[%s135 + $0x17d0] sm:$0xff] %v3972
        %4997 = vst [vmem:[%s135 + $0x17d8] sm:$0xff] %v3973
        %4998 = vst [vmem:[%s135 + $0x17e0] sm:$0xff] %v3974
        %4999 = vst [vmem:[%s135 + $0x17e8] sm:$0xff] %v3975
        %5000 = vst [vmem:[%s135 + $0x17f0] sm:$0xff] %v3976
        %5001 = vst [vmem:[%s135 + $0x17f8] sm:$0xff] %v3977
        %5002 = vst [vmem:[%s135 + $0x1800] sm:$0xff] %v3978
        %5003 = vst [vmem:[%s135 + $0x1808] sm:$0xff] %v3979
        %5004 = vst [vmem:[%s135 + $0x1810] sm:$0xff] %v3980
        %5005 = vst [vmem:[%s135 + $0x1818] sm:$0xff] %v3981
        %5006 = vst [vmem:[%s135 + $0x1820] sm:$0xff] %v3982
        %5007 = vst [vmem:[%s135 + $0x1828] sm:$0xff] %v3983
        %5008 = vst [vmem:[%s135 + $0x1830] sm:$0xff] %v3984
        %5009 = vst [vmem:[%s135 + $0x1838] sm:$0xff] %v3985
        %5010 = vst [vmem:[%s135 + $0x1840] sm:$0xff] %v3986
        %5011 = vst [vmem:[%s135 + $0x1848] sm:$0xff] %v3987
        %5012 = vst [vmem:[%s135 + $0x1850] sm:$0xff] %v3988
        %5013 = vst [vmem:[%s135 + $0x1858] sm:$0xff] %v3989
        %5014 = vst [vmem:[%s135 + $0x1860] sm:$0xff] %v3990
        %5015 = vst [vmem:[%s135 + $0x1868] sm:$0xff] %v3991
        %5016 = vst [vmem:[%s135 + $0x1870] sm:$0xff] %v3992
        %5017 = vst [vmem:[%s135 + $0x1878] sm:$0xff] %v3993
        %5018 = vst [vmem:[%s135 + $0x1880] sm:$0xff] %v3994
        %5019 = vst [vmem:[%s135 + $0x1888] sm:$0xff] %v3995
        %5020 = vst [vmem:[%s135 + $0x1890] sm:$0xff] %v3996
        %5021 = vst [vmem:[%s135 + $0x1898] sm:$0xff] %v3997
        %5022 = vst [vmem:[%s135 + $0x18a0] sm:$0xff] %v3998
        %5023 = vst [vmem:[%s135 + $0x18a8] sm:$0xff] %v3999
        %5024 = vst [vmem:[%s135 + $0x18b0] sm:$0xff] %v4000
        %5025 = vst [vmem:[%s135 + $0x18b8] sm:$0xff] %v4001
        %5026 = vst [vmem:[%s135 + $0x18c0] sm:$0xff] %v4002
        %5027 = vst [vmem:[%s135 + $0x18c8] sm:$0xff] %v4003
        %5028 = vst [vmem:[%s135 + $0x18d0] sm:$0xff] %v4004
        %5029 = vst [vmem:[%s135 + $0x18d8] sm:$0xff] %v4005
        %5030 = vst [vmem:[%s135 + $0x18e0] sm:$0xff] %v4006
        %5031 = vst [vmem:[%s135 + $0x18e8] sm:$0xff] %v4007
        %5032 = vst [vmem:[%s135 + $0x18f0] sm:$0xff] %v4008
        %5033 = vst [vmem:[%s135 + $0x18f8] sm:$0xff] %v4009
        %5034 = vst [vmem:[%s135 + $0x1900] sm:$0xff] %v4010
        %5035 = vst [vmem:[%s135 + $0x1908] sm:$0xff] %v4011
        %5036 = vst [vmem:[%s135 + $0x1910] sm:$0xff] %v4012
        %5037 = vst [vmem:[%s135 + $0x1918] sm:$0xff] %v4013
        %5038 = vst [vmem:[%s135 + $0x1920] sm:$0xff] %v4014
        %5039 = vst [vmem:[%s135 + $0x1928] sm:$0xff] %v4015
        %5040 = vst [vmem:[%s135 + $0x1930] sm:$0xff] %v4016
        %5041 = vst [vmem:[%s135 + $0x1938] sm:$0xff] %v4017
        %5042 = vst [vmem:[%s135 + $0x1940] sm:$0xff] %v4018
        %5043 = vst [vmem:[%s135 + $0x1948] sm:$0xff] %v4019
        %5044 = vst [vmem:[%s135 + $0x1950] sm:$0xff] %v4020
        %5045 = vst [vmem:[%s135 + $0x1958] sm:$0xff] %v4021
        %5046 = vst [vmem:[%s135 + $0x1960] sm:$0xff] %v4022
        %5047 = vst [vmem:[%s135 + $0x1968] sm:$0xff] %v4023
        %5048 = vst [vmem:[%s135 + $0x1970] sm:$0xff] %v4024
        %5049 = vst [vmem:[%s135 + $0x1978] sm:$0xff] %v4025
        %5050 = vst [vmem:[%s135 + $0x1980] sm:$0xff] %v4026
        %5051 = vst [vmem:[%s135 + $0x1988] sm:$0xff] %v4027
        %5052 = vst [vmem:[%s135 + $0x1990] sm:$0xff] %v4028
        %5053 = vst [vmem:[%s135 + $0x1998] sm:$0xff] %v4029
        %5054 = vst [vmem:[%s135 + $0x19a0] sm:$0xff] %v4030
        %5055 = vst [vmem:[%s135 + $0x19a8] sm:$0xff] %v4031
        %5056 = vst [vmem:[%s135 + $0x19b0] sm:$0xff] %v4032
        %5057 = vst [vmem:[%s135 + $0x19b8] sm:$0xff] %v4033
        %5058 = vst [vmem:[%s135 + $0x19c0] sm:$0xff] %v4034
        %5059 = vst [vmem:[%s135 + $0x19c8] sm:$0xff] %v4035
        %5060 = vst [vmem:[%s135 + $0x19d0] sm:$0xff] %v4036
        %5061 = vst [vmem:[%s135 + $0x19d8] sm:$0xff] %v4037
        %5062 = vst [vmem:[%s135 + $0x19e0] sm:$0xff] %v4038
        %5063 = vst [vmem:[%s135 + $0x19e8] sm:$0xff] %v4039
        %5064 = vst [vmem:[%s135 + $0x19f0] sm:$0xff] %v4040
        %5065 = vst [vmem:[%s135 + $0x19f8] sm:$0xff] %v4041
        %5066 = vst [vmem:[%s135 + $0x1a00] sm:$0xff] %v4042
        %5067 = vst [vmem:[%s135 + $0x1a08] sm:$0xff] %v4043
        %5068 = vst [vmem:[%s135 + $0x1a10] sm:$0xff] %v4044
        %5069 = vst [vmem:[%s135 + $0x1a18] sm:$0xff] %v4045
        %5070 = vst [vmem:[%s135 + $0x1a20] sm:$0xff] %v4046
        %5071 = vst [vmem:[%s135 + $0x1a28] sm:$0xff] %v4047
        %5072 = vst [vmem:[%s135 + $0x1a30] sm:$0xff] %v4048
        %5073 = vst [vmem:[%s135 + $0x1a38] sm:$0xff] %v4049
        %5074 = vst [vmem:[%s135 + $0x1a40] sm:$0xff] %v4050
        %5075 = vst [vmem:[%s135 + $0x1a48] sm:$0xff] %v4051
        %5076 = vst [vmem:[%s135 + $0x1a50] sm:$0xff] %v4052
        %5077 = vst [vmem:[%s135 + $0x1a58] sm:$0xff] %v4053
        %5078 = vst [vmem:[%s135 + $0x1a60] sm:$0xff] %v4054
        %5079 = vst [vmem:[%s135 + $0x1a68] sm:$0xff] %v4055
        %5080 = vst [vmem:[%s135 + $0x1a70] sm:$0xff] %v4056
        %5081 = vst [vmem:[%s135 + $0x1a78] sm:$0xff] %v4057
        %5082 = vst [vmem:[%s135 + $0x1a80] sm:$0xff] %v4058
        %5083 = vst [vmem:[%s135 + $0x1a88] sm:$0xff] %v4059
        %5084 = vst [vmem:[%s135 + $0x1a90] sm:$0xff] %v4060
        %5085 = vst [vmem:[%s135 + $0x1a98] sm:$0xff] %v4061
        %5086 = vst [vmem:[%s135 + $0x1aa0] sm:$0xff] %v4062
        %5087 = vst [vmem:[%s135 + $0x1aa8] sm:$0xff] %v4063
        %5088 = vst [vmem:[%s135 + $0x1ab0] sm:$0xff] %v4064
        %5089 = vst [vmem:[%s135 + $0x1ab8] sm:$0xff] %v4065
        %5090 = vst [vmem:[%s135 + $0x1ac0] sm:$0xff] %v4066
        %5091 = vst [vmem:[%s135 + $0x1ac8] sm:$0xff] %v4067
        %5092 = vst [vmem:[%s135 + $0x1ad0] sm:$0xff] %v4068
        %5093 = vst [vmem:[%s135 + $0x1ad8] sm:$0xff] %v4069
        %5094 = vst [vmem:[%s135 + $0x1ae0] sm:$0xff] %v4070
        %5095 = vst [vmem:[%s135 + $0x1ae8] sm:$0xff] %v4071
        %5096 = vst [vmem:[%s135 + $0x1af0] sm:$0xff] %v4072
        %5097 = vst [vmem:[%s135 + $0x1af8] sm:$0xff] %v4073
        %5098 = vst [vmem:[%s135 + $0x1b00] sm:$0xff] %v4074
        %5099 = vst [vmem:[%s135 + $0x1b08] sm:$0xff] %v4075
        %5100 = vst [vmem:[%s135 + $0x1b10] sm:$0xff] %v4076
        %5101 = vst [vmem:[%s135 + $0x1b18] sm:$0xff] %v4077
        %5102 = vst [vmem:[%s135 + $0x1b20] sm:$0xff] %v4078
        %5103 = vst [vmem:[%s135 + $0x1b28] sm:$0xff] %v4079
        %5104 = vst [vmem:[%s135 + $0x1b30] sm:$0xff] %v4080
        %5105 = vst [vmem:[%s135 + $0x1b38] sm:$0xff] %v4081
        %5106 = vst [vmem:[%s135 + $0x1b40] sm:$0xff] %v4082
        %5107 = vst [vmem:[%s135 + $0x1b48] sm:$0xff] %v4083
        %5108 = vst [vmem:[%s135 + $0x1b50] sm:$0xff] %v4084
        %5109 = vst [vmem:[%s135 + $0x1b58] sm:$0xff] %v4085
        %5110 = vst [vmem:[%s135 + $0x1b60] sm:$0xff] %v4086
        %5111 = vst [vmem:[%s135 + $0x1b68] sm:$0xff] %v4087
        %5112 = vst [vmem:[%s135 + $0x1b70] sm:$0xff] %v4088
        %5113 = vst [vmem:[%s135 + $0x1b78] sm:$0xff] %v4089
        %5114 = vst [vmem:[%s135 + $0x1b80] sm:$0xff] %v4090
        %5115 = vst [vmem:[%s135 + $0x1b88] sm:$0xff] %v4091
        %5116 = vst [vmem:[%s135 + $0x1b90] sm:$0xff] %v4092
        %5117 = vst [vmem:[%s135 + $0x1b98] sm:$0xff] %v4093
        %5118 = vst [vmem:[%s135 + $0x1ba0] sm:$0xff] %v4094
        %5119 = vst [vmem:[%s135 + $0x1ba8] sm:$0xff] %v4095
        %5120 = vst [vmem:[%s135 + $0x1bb0] sm:$0xff] %v4096
        %5121 = vst [vmem:[%s135 + $0x1bb8] sm:$0xff] %v4097
        %5122 = vst [vmem:[%s135 + $0x1bc0] sm:$0xff] %v4098
        %5123 = vst [vmem:[%s135 + $0x1bc8] sm:$0xff] %v4099
        %5124 = vst [vmem:[%s135 + $0x1bd0] sm:$0xff] %v4100
        %5125 = vst [vmem:[%s135 + $0x1bd8] sm:$0xff] %v4101
        %5126 = vst [vmem:[%s135 + $0x1be0] sm:$0xff] %v4102
        %5127 = vst [vmem:[%s135 + $0x1be8] sm:$0xff] %v4103
        %5128 = vst [vmem:[%s135 + $0x1bf0] sm:$0xff] %v4104
        %5129 = vst [vmem:[%s135 + $0x1bf8] sm:$0xff] %v4105
        %5130 = vst [vmem:[%s135 + $0x1c00] sm:$0xff] %v4106
        %5131 = vst [vmem:[%s135 + $0x1c08] sm:$0xff] %v4107
        %5132 = vst [vmem:[%s135 + $0x1c10] sm:$0xff] %v4108
        %5133 = vst [vmem:[%s135 + $0x1c18] sm:$0xff] %v4109
        %5134 = vst [vmem:[%s135 + $0x1c20] sm:$0xff] %v4110
        %5135 = vst [vmem:[%s135 + $0x1c28] sm:$0xff] %v4111
        %5136 = vst [vmem:[%s135 + $0x1c30] sm:$0xff] %v4112
        %5137 = vst [vmem:[%s135 + $0x1c38] sm:$0xff] %v4113
        %5138 = vst [vmem:[%s135 + $0x1c40] sm:$0xff] %v4114
        %5139 = vst [vmem:[%s135 + $0x1c48] sm:$0xff] %v4115
        %5140 = vst [vmem:[%s135 + $0x1c50] sm:$0xff] %v4116
        %5141 = vst [vmem:[%s135 + $0x1c58] sm:$0xff] %v4117
        %5142 = vst [vmem:[%s135 + $0x1c60] sm:$0xff] %v4118
        %5143 = vst [vmem:[%s135 + $0x1c68] sm:$0xff] %v4119
        %5144 = vst [vmem:[%s135 + $0x1c70] sm:$0xff] %v4120
        %5145 = vst [vmem:[%s135 + $0x1c78] sm:$0xff] %v4121
        %5146 = vst [vmem:[%s135 + $0x1c80] sm:$0xff] %v4122
        %5147 = vst [vmem:[%s135 + $0x1c88] sm:$0xff] %v4123
        %5148 = vst [vmem:[%s135 + $0x1c90] sm:$0xff] %v4124
        %5149 = vst [vmem:[%s135 + $0x1c98] sm:$0xff] %v4125
        %5150 = vst [vmem:[%s135 + $0x1ca0] sm:$0xff] %v4126
        %5151 = vst [vmem:[%s135 + $0x1ca8] sm:$0xff] %v4127
        %5152 = vst [vmem:[%s135 + $0x1cb0] sm:$0xff] %v4128
        %5153 = vst [vmem:[%s135 + $0x1cb8] sm:$0xff] %v4129
        %5154 = vst [vmem:[%s135 + $0x1cc0] sm:$0xff] %v4130
        %5155 = vst [vmem:[%s135 + $0x1cc8] sm:$0xff] %v4131
        %5156 = vst [vmem:[%s135 + $0x1cd0] sm:$0xff] %v4132
        %5157 = vst [vmem:[%s135 + $0x1cd8] sm:$0xff] %v4133
        %5158 = vst [vmem:[%s135 + $0x1ce0] sm:$0xff] %v4134
        %5159 = vst [vmem:[%s135 + $0x1ce8] sm:$0xff] %v4135
        %5160 = vst [vmem:[%s135 + $0x1cf0] sm:$0xff] %v4136
        %5161 = vst [vmem:[%s135 + $0x1cf8] sm:$0xff] %v4137
        %5162 = vst [vmem:[%s135 + $0x1d00] sm:$0xff] %v4138
        %5163 = vst [vmem:[%s135 + $0x1d08] sm:$0xff] %v4139
        %5164 = vst [vmem:[%s135 + $0x1d10] sm:$0xff] %v4140
        %5165 = vst [vmem:[%s135 + $0x1d18] sm:$0xff] %v4141
        %5166 = vst [vmem:[%s135 + $0x1d20] sm:$0xff] %v4142
        %5167 = vst [vmem:[%s135 + $0x1d28] sm:$0xff] %v4143
        %5168 = vst [vmem:[%s135 + $0x1d30] sm:$0xff] %v4144
        %5169 = vst [vmem:[%s135 + $0x1d38] sm:$0xff] %v4145
        %5170 = vst [vmem:[%s135 + $0x1d40] sm:$0xff] %v4146
        %5171 = vst [vmem:[%s135 + $0x1d48] sm:$0xff] %v4147
        %5172 = vst [vmem:[%s135 + $0x1d50] sm:$0xff] %v4148
        %5173 = vst [vmem:[%s135 + $0x1d58] sm:$0xff] %v4149
        %5174 = vst [vmem:[%s135 + $0x1d60] sm:$0xff] %v4150
        %5175 = vst [vmem:[%s135 + $0x1d68] sm:$0xff] %v4151
        %5176 = vst [vmem:[%s135 + $0x1d70] sm:$0xff] %v4152
        %5177 = vst [vmem:[%s135 + $0x1d78] sm:$0xff] %v4153
        %5178 = vst [vmem:[%s135 + $0x1d80] sm:$0xff] %v4154
        %5179 = vst [vmem:[%s135 + $0x1d88] sm:$0xff] %v4155
        %5180 = vst [vmem:[%s135 + $0x1d90] sm:$0xff] %v4156
        %5181 = vst [vmem:[%s135 + $0x1d98] sm:$0xff] %v4157
        %5182 = vst [vmem:[%s135 + $0x1da0] sm:$0xff] %v4158
        %5183 = vst [vmem:[%s135 + $0x1da8] sm:$0xff] %v4159
        %5184 = vst [vmem:[%s135 + $0x1db0] sm:$0xff] %v4160
        %5185 = vst [vmem:[%s135 + $0x1db8] sm:$0xff] %v4161
        %5186 = vst [vmem:[%s135 + $0x1dc0] sm:$0xff] %v4162
        %5187 = vst [vmem:[%s135 + $0x1dc8] sm:$0xff] %v4163
        %5188 = vst [vmem:[%s135 + $0x1dd0] sm:$0xff] %v4164
        %5189 = vst [vmem:[%s135 + $0x1dd8] sm:$0xff] %v4165
        %5190 = vst [vmem:[%s135 + $0x1de0] sm:$0xff] %v4166
        %5191 = vst [vmem:[%s135 + $0x1de8] sm:$0xff] %v4167
        %5192 = vst [vmem:[%s135 + $0x1df0] sm:$0xff] %v4168
        %5193 = vst [vmem:[%s135 + $0x1df8] sm:$0xff] %v4169
        %5194 = vst [vmem:[%s135 + $0x1e00] sm:$0xff] %v4170
        %5195 = vst [vmem:[%s135 + $0x1e08] sm:$0xff] %v4171
        %5196 = vst [vmem:[%s135 + $0x1e10] sm:$0xff] %v4172
        %5197 = vst [vmem:[%s135 + $0x1e18] sm:$0xff] %v4173
        %5198 = vst [vmem:[%s135 + $0x1e20] sm:$0xff] %v4174
        %5199 = vst [vmem:[%s135 + $0x1e28] sm:$0xff] %v4175
        %5200 = vst [vmem:[%s135 + $0x1e30] sm:$0xff] %v4176
        %5201 = vst [vmem:[%s135 + $0x1e38] sm:$0xff] %v4177
        %5202 = vst [vmem:[%s135 + $0x1e40] sm:$0xff] %v4178
        %5203 = vst [vmem:[%s135 + $0x1e48] sm:$0xff] %v4179
        %5204 = vst [vmem:[%s135 + $0x1e50] sm:$0xff] %v4180
        %5205 = vst [vmem:[%s135 + $0x1e58] sm:$0xff] %v4181
        %5206 = vst [vmem:[%s135 + $0x1e60] sm:$0xff] %v4182
        %5207 = vst [vmem:[%s135 + $0x1e68] sm:$0xff] %v4183
        %5208 = vst [vmem:[%s135 + $0x1e70] sm:$0xff] %v4184
        %5209 = vst [vmem:[%s135 + $0x1e78] sm:$0xff] %v4185
        %5210 = vst [vmem:[%s135 + $0x1e80] sm:$0xff] %v4186
        %5211 = vst [vmem:[%s135 + $0x1e88] sm:$0xff] %v4187
        %5212 = vst [vmem:[%s135 + $0x1e90] sm:$0xff] %v4188
        %5213 = vst [vmem:[%s135 + $0x1e98] sm:$0xff] %v4189
        %5214 = vst [vmem:[%s135 + $0x1ea0] sm:$0xff] %v4190
        %5215 = vst [vmem:[%s135 + $0x1ea8] sm:$0xff] %v4191
        %5216 = vst [vmem:[%s135 + $0x1eb0] sm:$0xff] %v4192
        %5217 = vst [vmem:[%s135 + $0x1eb8] sm:$0xff] %v4193
        %5218 = vst [vmem:[%s135 + $0x1ec0] sm:$0xff] %v4194
        %5219 = vst [vmem:[%s135 + $0x1ec8] sm:$0xff] %v4195
        %5220 = vst [vmem:[%s135 + $0x1ed0] sm:$0xff] %v4196
        %5221 = vst [vmem:[%s135 + $0x1ed8] sm:$0xff] %v4197
        %5222 = vst [vmem:[%s135 + $0x1ee0] sm:$0xff] %v4198
        %5223 = vst [vmem:[%s135 + $0x1ee8] sm:$0xff] %v4199
        %5224 = vst [vmem:[%s135 + $0x1ef0] sm:$0xff] %v4200
        %5225 = vst [vmem:[%s135 + $0x1ef8] sm:$0xff] %v4201
        %5226 = vst [vmem:[%s135 + $0x1f00] sm:$0xff] %v4202
        %5227 = vst [vmem:[%s135 + $0x1f08] sm:$0xff] %v4203
        %5228 = vst [vmem:[%s135 + $0x1f10] sm:$0xff] %v4204
        %5229 = vst [vmem:[%s135 + $0x1f18] sm:$0xff] %v4205
        %5230 = vst [vmem:[%s135 + $0x1f20] sm:$0xff] %v4206
        %5231 = vst [vmem:[%s135 + $0x1f28] sm:$0xff] %v4207
        %5232 = vst [vmem:[%s135 + $0x1f30] sm:$0xff] %v4208
        %5233 = vst [vmem:[%s135 + $0x1f38] sm:$0xff] %v4209
        %5234 = vst [vmem:[%s135 + $0x1f40] sm:$0xff] %v4210
        %5235 = vst [vmem:[%s135 + $0x1f48] sm:$0xff] %v4211
        %5236 = vst [vmem:[%s135 + $0x1f50] sm:$0xff] %v4212
        %5237 = vst [vmem:[%s135 + $0x1f58] sm:$0xff] %v4213
        %5238 = vst [vmem:[%s135 + $0x1f60] sm:$0xff] %v4214
        %5239 = vst [vmem:[%s135 + $0x1f68] sm:$0xff] %v4215
        %5240 = vst [vmem:[%s135 + $0x1f70] sm:$0xff] %v4216
        %5241 = vst [vmem:[%s135 + $0x1f78] sm:$0xff] %v4217
        %5242 = vst [vmem:[%s135 + $0x1f80] sm:$0xff] %v4218
        %5243 = vst [vmem:[%s135 + $0x1f88] sm:$0xff] %v4219
        %5244 = vst [vmem:[%s135 + $0x1f90] sm:$0xff] %v4220
        %5245 = vst [vmem:[%s135 + $0x1f98] sm:$0xff] %v4221
        %5246 = vst [vmem:[%s135 + $0x1fa0] sm:$0xff] %v4222
        %5247 = vst [vmem:[%s135 + $0x1fa8] sm:$0xff] %v4223
        %5248 = vst [vmem:[%s135 + $0x1fb0] sm:$0xff] %v4224
        %5249 = vst [vmem:[%s135 + $0x1fb8] sm:$0xff] %v4225
        %5250 = vst [vmem:[%s135 + $0x1fc0] sm:$0xff] %v4226
        %5251 = vst [vmem:[%s135 + $0x1fc8] sm:$0xff] %v4227
        %5252 = vst [vmem:[%s135 + $0x1fd0] sm:$0xff] %v4228
        %5253 = vst [vmem:[%s135 + $0x1fd8] sm:$0xff] %v4229
        %5254 = vst [vmem:[%s135 + $0x1fe0] sm:$0xff] %v4230
        %5255 = vst [vmem:[%s135 + $0x1fe8] sm:$0xff] %v4231
        %5256 = vst [vmem:[%s135 + $0x1ff0] sm:$0xff] %v4232
        %5257 = vst [vmem:[%s135 + $0x1ff8] sm:$0xff] %v4233
        %s5258 = sand.u32 %s52, 1
        %s5259 = scalar_lea.sflag [#allocation4], %s5258
        %s5260 = sand.u32 %s52, 1
        %s5261 = smul.addr %s5260, 8192
        %s5262 = scalar_lea.vmem [#allocation5], %s5261
        // Predicated region
        $region29: #{tpu_custom_call.1} parent=23 // pred_check
          %p5263 = pneg %p62
        $region30: #{tpu_custom_call.1} parent=23 // pred_check_branch
          %5265 = sbr.rel (%p5263) target = $region32
        $region31: #{tpu_custom_call.1} parent=23 // pred_region
          %s5266 = smul.u32 128, %s18
          %s5268 = ssub.s32 131072, 131072
          %5269 = vsyncadd %s5259, %s5268
          %s5270 = smul.addr %s5266, 8
          %s5271 = smul.addr %s5270, 128
          %s5272 = scalar_lea.hbm %s1, %s5271
          %s5273 = sshll.u32 %s5262, 4
          %s5274 = int_to_ptr.vmem [resolvable:$true] %s5273
          %5279 = dma.vmem_to_hbm [thread:$0]  %s5274, 131072, %s5272, %s5259, 1024, 1024, 64
        $region32: #{tpu_custom_call.1} parent=23 // pred_fallthru
          _
      $region24: #{tpu_custom_call.1} parent=5 // pred_fallthru
        _
      %p5280 = scmp.le.s32.totalorder 2, %s13
      // Predicated region
      $region33: #{tpu_custom_call.1} parent=5 // pred_check
        %p5281 = pneg %p5280
      $region34: #{tpu_custom_call.1} parent=5 // pred_check_branch
        %5283 = sbr.rel (%p5281) target = $region36
      $region35: #{tpu_custom_call.1} parent=5 // pred_region
        %s5284 = ssub.s32 %s13, 2
        // Predicated region
        $region37: #{tpu_custom_call.1} parent=35 // pred_check
          %p5285 = pneg %p68
        $region38: #{tpu_custom_call.1} parent=35 // pred_check_branch
          %5287 = sbr.rel (%p5285) target = $region40
        $region39: #{tpu_custom_call.1} parent=35 // pred_region
          %s5288 = sand.u32 %s53, 1
          %s5289 = scalar_lea.sflag [#allocation4], %s5288
          %s5290 = sand.u32 %s53, 1
          %s5291 = smul.addr %s5290, 8192
          %s5292 = scalar_lea.vmem [#allocation5], %s5291
          %5293 = dma.done %s5289, 131072
        $region40: #{tpu_custom_call.1} parent=35 // pred_fallthru
          _
      $region36: #{tpu_custom_call.1} parent=5 // pred_fallthru
        _
    $region6: #{tpu_custom_call.1} parent=1 // loop_footer
      %s17 = sadd.s32 1, %s13
    $region7: #{tpu_custom_call.1} parent=1 // loop_footer_branch
      %12 = sbr.rel target = $region3
    $region8: #{tpu_custom_call.1} parent=1 // loop_exit
      _
    %5294 = vsyncpa [#allocation3], 1
    %s5295 = scalar_lea.sflag [#allocation3], 1
    %5296 = vsyncpa %s5295, 1
    %5297 = vsyncpa [#allocation4], 1
    %s5298 = scalar_lea.sflag [#allocation4], 1
    %5299 = vsyncpa %s5298, 1

</llo_original>
